<compile_context>
chip_gen: v7x
topology: tpu7x:2x2x1
jax: 0.10.0
libtpu: 0.0.40
codegen_flags: <defaults>
</compile_context>

<pallas_src>
import jax
import jax.numpy as jnp
from jax.experimental import pallas as pl
from jax.experimental.pallas import tpu as pltpu

MAX_TB = 1024  # max batch tile (lanes per grid step); multiple of 256.
               # On v6e/v7x this can be raised to 2048 with a larger vmem limit.


def _round_up(n: int, m: int) -> int:
    return ((n + m - 1) // m) * m


def _pick_tile(batch: int, max_tb: int = MAX_TB) -> int:
    """Batch tile (lane dim).  Full-extent for tiny batches (always a legal block);
    otherwise a multiple of 256 chosen so the grid has >= 2 steps (feeds both
    v7x TensorCores through the 'parallel' grid axis)."""
    if batch <= 256:
        return batch
    return min(max_tb, _round_up(pl.cdiv(batch, 2), 256))


def mlp_kernel(xt_ref, w1_ref, b1_ref, w2_ref, b2_ref, w3_ref, b3_ref, o_ref):
    # Feature-major: activations are (features, batch_tile); batch lives on lanes.
    xt = xt_ref[...].astype(jnp.bfloat16)                       # (22, TB), VPU cast
    # Layer 1: (512,22)bf16 @ (22,TB)bf16 -> f32 acc, + column bias, ReLU.
    h = jnp.dot(w1_ref[...], xt, preferred_element_type=jnp.float32)
    h = jnp.maximum(h + b1_ref[...], 0.0)                       # (512, TB) f32
    # Layer 2: (512,512)bf16 @ (512,TB)bf16 -> f32 acc, + column bias, ReLU.
    h = jnp.dot(w2_ref[...], h.astype(jnp.bfloat16),
                preferred_element_type=jnp.float32)
    h = jnp.maximum(h + b2_ref[...], 0.0)                       # (512, TB) f32
    # Layer 3 (out_features == 1): keep it off the MXU.  VPU multiply + sublane
    # (XLU) reduction yields the lane-dense (1, TB) output row directly.
    out = jnp.sum(h * w3_ref[...], axis=0, keepdims=True) + b3_ref[...]
    o_ref[...] = out.astype(o_ref.dtype)                        # dense (1, TB) store


def prepare_params(w1, b1, w2, b2, w3, b3):
    """One-time parameter prep (call OUTSIDE the per-call hot path).

    Takes PyTorch-layout params (w_i: (out, in), b_i: (out,)) and returns the
    kernel layout: bf16 matmul weights, f32 column biases, f32 w3 column."""
    return (
        w1.astype(jnp.bfloat16),                   # (512, 22)
        b1.reshape(-1, 1).astype(jnp.float32),     # (512, 1)
        w2.astype(jnp.bfloat16),                   # (512, 512)
        b2.reshape(-1, 1).astype(jnp.float32),     # (512, 1)
        w3.reshape(-1, 1).astype(jnp.float32),     # (512, 1), stays f32 (VPU layer)
        b3.reshape(1, 1).astype(jnp.float32),      # (1, 1)
    )


def mlp_forward(x, params, *, max_tb=MAX_TB):
    """x: (B, 22) f32; params from prepare_params().  Returns (B, 1) f32."""
    batch, feat = x.shape
    w1, b1, w2, b2, w3, b3 = params
    tb = _pick_tile(batch, max_tb)
    grid = (pl.cdiv(batch, tb),)            # ragged last block handled by Pallas

    xt = x.T                                # (22, B): batch on lanes, f32 (cast in-kernel)

    def resident(arr):                      # fetched once, stays VMEM-resident
        return pl.BlockSpec(arr.shape, lambda i: (0, 0))

    out = pl.pallas_call(
        mlp_kernel,
        out_shape=jax.ShapeDtypeStruct((1, batch), jnp.float32),
        grid_spec=pltpu.PrefetchScalarGridSpec(
            num_scalar_prefetch=0,
            grid=grid,
            in_specs=[
                pl.BlockSpec((feat, tb), lambda i: (0, i)),     # x tile: streamed
                resident(w1), resident(b1),
                resident(w2), resident(b2),
                resident(w3), resident(b3),
            ],
            out_specs=pl.BlockSpec((1, tb), lambda i: (0, i)),  # lane-dense output
        ),
        compiler_params=pltpu.CompilerParams(
            dimension_semantics=("parallel",),       # split batch across TCs on v7x
            vmem_limit_bytes=32 * 1024 * 1024,       # headroom over v5e's 16 MiB default
        ),
    )(xt, w1, b1, w2, b2, w3, b3)
    return out.reshape(batch, 1)


def init_params(key):
    # Deterministic PyTorch-style init, PyTorch layout: W (out, in), b (out,),
    # both ~ U(-1/sqrt(fan_in), 1/sqrt(fan_in)).
    dims = [(22, 512), (512, 512), (512, 1)]
    params = []
    for fan_in, fan_out in dims:
        kw, kb, key = jax.random.split(key, 3)
        bound = 1.0 / jnp.sqrt(jnp.float32(fan_in))
        w = jax.random.uniform(kw, (fan_out, fan_in), jnp.float32, -bound, bound)
        b = jax.random.uniform(kb, (fan_out,), jnp.float32, -bound, bound)
        params += [w, b]
    return params


def reference(x, w1, b1, w2, b2, w3, b3):
    # Mirrors the kernel's numerics (bf16 matmul inputs, f32 accumulation, f32
    # biases, f32 final reduction) so tolerances stay tight.  Params in torch layout.
    h = jnp.dot(x.astype(jnp.bfloat16), w1.T.astype(jnp.bfloat16),
                preferred_element_type=jnp.float32)
    h = jnp.maximum(h + b1[None, :], 0.0)
    h = jnp.dot(h.astype(jnp.bfloat16), w2.T.astype(jnp.bfloat16),
                preferred_element_type=jnp.float32)
    h = jnp.maximum(h + b2[None, :], 0.0)
    return jnp.sum(h * w3[0][None, :], axis=-1, keepdims=True) + b3[None, :]


if __name__ == "__main__":
    key = jax.random.PRNGKey(0)
    kx, kp = jax.random.split(key)
    B = 384  # not a multiple of the 256-row tile -> exercises the ragged last block
    x = jax.random.normal(kx, (B, 22), jnp.float32)
    raw = init_params(kp)                 # torch-layout f32 params
    params = prepare_params(*raw)         # one-time bf16/layout prep (outside hot path)

    out = jax.block_until_ready(mlp_forward(x, params))
    ref = reference(x, *raw)

    assert out.shape == (B, 1), out.shape
    # 2e-3: bf16 matmul inputs + differing f32 accumulation order between the
    # transposed kernel and the batch-major reference.
    assert jnp.allclose(out, ref, atol=2e-3, rtol=2e-3), "mismatch vs reference"
    print("KERNEL_OK")
</pallas_src>

<mosaic_0001>
module attributes {stable_mosaic.version = 11 : i64} {
  func.func @mlp_kernel(%arg0: i32, %arg1: memref<22x256xf32, #tpu.memory_space<vmem>>, %arg2: memref<512x22xbf16, #tpu.memory_space<vmem>>, %arg3: memref<512x1xf32, #tpu.memory_space<vmem>>, %arg4: memref<512x512xbf16, #tpu.memory_space<vmem>>, %arg5: memref<512x1xf32, #tpu.memory_space<vmem>>, %arg6: memref<512x1xf32, #tpu.memory_space<vmem>>, %arg7: memref<1x1xf32, #tpu.memory_space<vmem>>, %arg8: memref<1x256xf32, #tpu.memory_space<vmem>>) attributes {dimension_semantics = [#tpu.dimension_semantics<parallel>], iteration_bounds = array<i64: 2>, scalar_prefetch = 0 : i64, scratch_operands = 0 : i64, tpu.core_type = #tpu.core_type<tc>, window_params = [{transform_indices = @transform_0, window_bounds = array<i64: 22, 256>}, {pipeline_mode = #tpu.pipeline_mode<synchronous>, transform_indices = @transform_1, window_bounds = array<i64: 512, 22>}, {pipeline_mode = #tpu.pipeline_mode<synchronous>, transform_indices = @transform_2, window_bounds = array<i64: 512, 1>}, {pipeline_mode = #tpu.pipeline_mode<synchronous>, transform_indices = @transform_3, window_bounds = array<i64: 512, 512>}, {pipeline_mode = #tpu.pipeline_mode<synchronous>, transform_indices = @transform_4, window_bounds = array<i64: 512, 1>}, {pipeline_mode = #tpu.pipeline_mode<synchronous>, transform_indices = @transform_5, window_bounds = array<i64: 512, 1>}, {pipeline_mode = #tpu.pipeline_mode<synchronous>, transform_indices = @transform_6, window_bounds = array<i64: 1, 1>}, {transform_indices = @transform_7, window_bounds = array<i64: 1, 256>}]} {
    %c0 = arith.constant 0 : index
    %c0_0 = arith.constant 0 : index
    %0 = vector.load %arg1[%c0, %c0_0] : memref<22x256xf32, #tpu.memory_space<vmem>>, vector<22x256xf32>
    %1 = arith.truncf %0 : vector<22x256xf32> to vector<22x256xbf16>
    %c0_1 = arith.constant 0 : index
    %c0_2 = arith.constant 0 : index
    %2 = vector.load %arg2[%c0_1, %c0_2] : memref<512x22xbf16, #tpu.memory_space<vmem>>, vector<512x22xbf16>
    %cst = arith.constant dense<0.000000e+00> : vector<512x256xf32>
    %3 = tpu.matmul %2, %1, %cst {dimension_numbers = #tpu.dot_dimension_numbers<[1], [0], [0], [1], [0, 0, 1, 1], [], []>} : vector<512x22xbf16>, vector<22x256xbf16>, vector<512x256xf32> -> vector<512x256xf32>
    %c0_3 = arith.constant 0 : index
    %c0_4 = arith.constant 0 : index
    %4 = vector.load %arg3[%c0_3, %c0_4] : memref<512x1xf32, #tpu.memory_space<vmem>>, vector<512x1xf32>
    %5 = vector.broadcast %4 : vector<512x1xf32> to vector<512x256xf32>
    %6 = arith.addf %3, %5 : vector<512x256xf32>
    %cst_5 = arith.constant 0.000000e+00 : f32
    %7 = vector.broadcast %cst_5 : f32 to vector<512x256xf32>
    %8 = arith.maximumf %6, %7 : vector<512x256xf32>
    %c0_6 = arith.constant 0 : index
    %c0_7 = arith.constant 0 : index
    %9 = vector.load %arg4[%c0_6, %c0_7] : memref<512x512xbf16, #tpu.memory_space<vmem>>, vector<512x512xbf16>
    %10 = arith.truncf %8 : vector<512x256xf32> to vector<512x256xbf16>
    %cst_8 = arith.constant dense<0.000000e+00> : vector<512x256xf32>
    %11 = tpu.matmul %9, %10, %cst_8 {dimension_numbers = #tpu.dot_dimension_numbers<[1], [0], [0], [1], [0, 0, 1, 1], [], []>} : vector<512x512xbf16>, vector<512x256xbf16>, vector<512x256xf32> -> vector<512x256xf32>
    %c0_9 = arith.constant 0 : index
    %c0_10 = arith.constant 0 : index
    %12 = vector.load %arg5[%c0_9, %c0_10] : memref<512x1xf32, #tpu.memory_space<vmem>>, vector<512x1xf32>
    %13 = vector.broadcast %12 : vector<512x1xf32> to vector<512x256xf32>
    %14 = arith.addf %11, %13 : vector<512x256xf32>
    %cst_11 = arith.constant 0.000000e+00 : f32
    %15 = vector.broadcast %cst_11 : f32 to vector<512x256xf32>
    %16 = arith.maximumf %14, %15 : vector<512x256xf32>
    %c0_12 = arith.constant 0 : index
    %c0_13 = arith.constant 0 : index
    %17 = vector.load %arg6[%c0_12, %c0_13] : memref<512x1xf32, #tpu.memory_space<vmem>>, vector<512x1xf32>
    %18 = vector.broadcast %17 : vector<512x1xf32> to vector<512x256xf32>
    %19 = arith.mulf %16, %18 : vector<512x256xf32>
    %cst_14 = arith.constant dense<0.000000e+00> : vector<256xf32>
    %20 = vector.multi_reduction <add>, %19, %cst_14 [0] : vector<512x256xf32> to vector<256xf32>
    %21 = vector.shape_cast %20 : vector<256xf32> to vector<1x256xf32>
    %c0_15 = arith.constant 0 : index
    %c0_16 = arith.constant 0 : index
    %22 = vector.load %arg7[%c0_15, %c0_16] : memref<1x1xf32, #tpu.memory_space<vmem>>, vector<1x1xf32>
    %23 = vector.broadcast %22 : vector<1x1xf32> to vector<1x256xf32>
    %24 = arith.addf %21, %23 : vector<1x256xf32>
    %c0_17 = arith.constant 0 : index
    %c0_18 = arith.constant 0 : index
    %25 = vector.load %arg8[%c0_17, %c0_18] : memref<1x256xf32, #tpu.memory_space<vmem>>, vector<1x256xf32>
    tpu.vector_store %arg8[%c0_17, %c0_18], %24 {strides = array<i32>} : memref<1x256xf32, #tpu.memory_space<vmem>>, vector<1x256xf32>,
    return
  }
  func.func @transform_0(%arg0: i32) -> (i32, i32) {
    %c0_i32 = arith.constant 0 : i32
    %c0_i32_0 = arith.constant 0 : i32
    return %c0_i32, %arg0 : i32, i32
  }
  func.func @transform_1(%arg0: i32) -> (i32, i32) {
    %c0_i32 = arith.constant 0 : i32
    %c0_i32_0 = arith.constant 0 : i32
    %c0_i32_1 = arith.constant 0 : i32
    return %c0_i32, %c0_i32_0 : i32, i32
  }
  func.func @transform_2(%arg0: i32) -> (i32, i32) {
    %c0_i32 = arith.constant 0 : i32
    %c0_i32_0 = arith.constant 0 : i32
    %c0_i32_1 = arith.constant 0 : i32
    return %c0_i32, %c0_i32_0 : i32, i32
  }
  func.func @transform_3(%arg0: i32) -> (i32, i32) {
    %c0_i32 = arith.constant 0 : i32
    %c0_i32_0 = arith.constant 0 : i32
    %c0_i32_1 = arith.constant 0 : i32
    return %c0_i32, %c0_i32_0 : i32, i32
  }
  func.func @transform_4(%arg0: i32) -> (i32, i32) {
    %c0_i32 = arith.constant 0 : i32
    %c0_i32_0 = arith.constant 0 : i32
    %c0_i32_1 = arith.constant 0 : i32
    return %c0_i32, %c0_i32_0 : i32, i32
  }
  func.func @transform_5(%arg0: i32) -> (i32, i32) {
    %c0_i32 = arith.constant 0 : i32
    %c0_i32_0 = arith.constant 0 : i32
    %c0_i32_1 = arith.constant 0 : i32
    return %c0_i32, %c0_i32_0 : i32, i32
  }
  func.func @transform_6(%arg0: i32) -> (i32, i32) {
    %c0_i32 = arith.constant 0 : i32
    %c0_i32_0 = arith.constant 0 : i32
    %c0_i32_1 = arith.constant 0 : i32
    return %c0_i32, %c0_i32_0 : i32, i32
  }
  func.func @transform_7(%arg0: i32) -> (i32, i32) {
    %c0_i32 = arith.constant 0 : i32
    %c0_i32_0 = arith.constant 0 : i32
    return %c0_i32, %arg0 : i32, i32
  }
}

</mosaic_0001>

<llo_original>
// kernel: tpu_custom_call.1
$region0: #{tpu_custom_call.1}
  #allocation0 [shape = 'u32[]', space=smem, size = 0x4, offset = 0x4, fixed_abs, tag = 'smem constant byte address 0x4 - core index']
  #allocation1 [shape = 'u32[144,128]{1,0:T(1,128)}', space=vmem, size = 0x12000, scoped, tag = 'internal scratch']
  #allocation2 [shape = 'f32[1,1]{1,0:T(1,128)S(1)}', space=vmem, size = 0x200, scoped, tag = 'scoped memory for tpu_custom_call.1']
  %s0 = inlined_call_operand.vmem [shape: f32[22,384], index: 0, kind: input, shape index: {}]
  %s1 = inlined_call_operand.vmem [shape: bf16[512,22], index: 1, kind: input, shape index: {}]
  %s2 = inlined_call_operand.vmem [shape: f32[512,1], index: 2, kind: input, shape index: {}]
  %s3 = inlined_call_operand.vmem [shape: bf16[512,512], index: 3, kind: input, shape index: {}]
  %s4 = inlined_call_operand.vmem [shape: f32[512,1], index: 4, kind: input, shape index: {}]
  %s5 = inlined_call_operand.vmem [shape: f32[512,1], index: 5, kind: input, shape index: {}]
  %s6 = inlined_call_operand.<no memory space> [shape: f32[1,1], index: 6, kind: input, shape index: {}]
  %s7 = inlined_call_operand.hbm [shape: f32[1,384], index: 7, kind: output, shape index: {}]
  %s8 = sld [smem:[#allocation0]]
  $region127: #{tpu_custom_call.1} parent=0
    _
  %s10 = ssub.s32 1, %s8
  %s11 = scalar_select 0, %s10, %s8
  %v12 = vstv %s6
  %13 = vst [vmem:[#allocation2] sm:$0x1] %v12
  $region1: #{tpu_custom_call.1} parent=0
    #allocation3 [shape = 'u8[49152]{0}', space=vmem, size = 0xc000, scoped, tag = 'input window, operand 0']
    #allocation4 [shape = 'u8[2048]{0}', space=vmem, size = 0x800, scoped, tag = 'output window, operand 0']
    #allocation5 [shape = 's32[2]{0}', space=sflag, size = 0x8, scoped, tag = 'scoped memory for tpu_custom_call.1']
    %14 = vsyncpa [#allocation5], 0
    %s15 = scalar_lea.sflag [#allocation5], 1
    %16 = vsyncpa %s15, 0
    loop: start=0, step=1, limit=4
    $region2: #{tpu_custom_call.1} parent=1 // loop_pre_header
      _
    $region3: #{tpu_custom_call.1} parent=1 // loop_header
      %s18 = sphi 0, %s22
      %p19 = scmp.ge.s32.totalorder %s18, 4
      %s28 = sphi 0, %s30
      %s31 = sphi 0, %s28
      %s32 = sphi 0, %s31
      %s48 = sphi 0, %s32
      %s52 = sphi 0, %s52
      %s54 = sphi 0, %s52
      %s55 = sphi 0, %s54
      %s69 = sphi 0, %s55
      %s73 = sphi 0, %s73
      %s75 = sphi 0, %s73
      %s76 = sphi 0, %s75
      %s90 = sphi 0, %s76
      %s94 = sphi 0, %s94
      %s96 = sphi 0, %s94
      %s97 = sphi 0, %s96
      %s111 = sphi 0, %s97
      %s115 = sphi 0, %s115
      %s117 = sphi 0, %s115
      %s118 = sphi 0, %s117
      %s132 = sphi 0, %s118
      %s136 = sphi 0, %s136
      %s138 = sphi 0, %s136
      %s139 = sphi 0, %s138
      %s153 = sphi 0, %s139
      %s157 = sphi 0, %s157
      %s159 = sphi 0, %s157
      %s160 = sphi 0, %s159
      %s174 = sphi 0, %s160
      %s180 = sphi 0, %s182
      %s183 = sphi 0, %s180
      %s184 = sphi 0, %s183
      %s200 = sphi 0, %s184
    $region4: #{tpu_custom_call.1} parent=1 // loop_header_branch
      %21 = sbr.rel (%p19) target = $region8
    $region5: #{tpu_custom_call.1} parent=1 // loop_body
      %s23 = ssub.s32 %s18, 1
      %s24 = ssub.s32 %s18, 2
      %s25 = sadd.s32 %s18, 1
      %s26 = ssub.s32 %s18, %s25
      %p27 = scmp.eq.s32.totalorder %s26, 0
      %s29 = sadd.s32 %s28, 1
      %s30 = scalar_select %p27, %s28, %s29
      %p33 = pneg %p27
      %p34 = scmp.eq.s32.totalorder %s18, 1
      %p35 = por %p33, %p34
      %p36 = scmp.ne.s32.totalorder %s28, %s31
      %p37 = scmp.eq.s32.totalorder %s18, 0
      %p38 = por %p36, %p37
      %p39 = scmp.ne.s32.totalorder %s28, %s31
      %p40 = scmp.eq.s32.totalorder %s23, 1
      %p41 = por %p39, %p40
      %p42 = scmp.ne.s32.totalorder %s31, %s32
      %p43 = scmp.eq.s32.totalorder %s23, 0
      %p44 = por %p42, %p43
      %p45 = scmp.ne.s32.totalorder %s31, %s32
      %p46 = scmp.eq.s32.totalorder %s24, 1
      %p47 = por %p45, %p46
      %p49 = scmp.ne.s32.totalorder %s32, %s48
      %p50 = scmp.eq.s32.totalorder %s24, 0
      %p51 = por %p49, %p50
      %s53 = sadd.s32 %s52, 1
      %p56 = scmp.eq.s32.totalorder %s18, 1
      %p57 = scmp.ne.s32.totalorder %s52, %s54
      %p58 = scmp.eq.s32.totalorder %s18, 0
      %p59 = por %p57, %p58
      %p60 = scmp.ne.s32.totalorder %s52, %s54
      %p61 = scmp.eq.s32.totalorder %s23, 1
      %p62 = por %p60, %p61
      %p63 = scmp.ne.s32.totalorder %s54, %s55
      %p64 = scmp.eq.s32.totalorder %s23, 0
      %p65 = por %p63, %p64
      %p66 = scmp.ne.s32.totalorder %s54, %s55
      %p67 = scmp.eq.s32.totalorder %s24, 1
      %p68 = por %p66, %p67
      %p70 = scmp.ne.s32.totalorder %s55, %s69
      %p71 = scmp.eq.s32.totalorder %s24, 0
      %p72 = por %p70, %p71
      %s74 = sadd.s32 %s73, 1
      %p77 = scmp.eq.s32.totalorder %s18, 1
      %p78 = scmp.ne.s32.totalorder %s73, %s75
      %p79 = scmp.eq.s32.totalorder %s18, 0
      %p80 = por %p78, %p79
      %p81 = scmp.ne.s32.totalorder %s73, %s75
      %p82 = scmp.eq.s32.totalorder %s23, 1
      %p83 = por %p81, %p82
      %p84 = scmp.ne.s32.totalorder %s75, %s76
      %p85 = scmp.eq.s32.totalorder %s23, 0
      %p86 = por %p84, %p85
      %p87 = scmp.ne.s32.totalorder %s75, %s76
      %p88 = scmp.eq.s32.totalorder %s24, 1
      %p89 = por %p87, %p88
      %p91 = scmp.ne.s32.totalorder %s76, %s90
      %p92 = scmp.eq.s32.totalorder %s24, 0
      %p93 = por %p91, %p92
      %s95 = sadd.s32 %s94, 1
      %p98 = scmp.eq.s32.totalorder %s18, 1
      %p99 = scmp.ne.s32.totalorder %s94, %s96
      %p100 = scmp.eq.s32.totalorder %s18, 0
      %p101 = por %p99, %p100
      %p102 = scmp.ne.s32.totalorder %s94, %s96
      %p103 = scmp.eq.s32.totalorder %s23, 1
      %p104 = por %p102, %p103
      %p105 = scmp.ne.s32.totalorder %s96, %s97
      %p106 = scmp.eq.s32.totalorder %s23, 0
      %p107 = por %p105, %p106
      %p108 = scmp.ne.s32.totalorder %s96, %s97
      %p109 = scmp.eq.s32.totalorder %s24, 1
      %p110 = por %p108, %p109
      %p112 = scmp.ne.s32.totalorder %s97, %s111
      %p113 = scmp.eq.s32.totalorder %s24, 0
      %p114 = por %p112, %p113
      %s116 = sadd.s32 %s115, 1
      %p119 = scmp.eq.s32.totalorder %s18, 1
      %p120 = scmp.ne.s32.totalorder %s115, %s117
      %p121 = scmp.eq.s32.totalorder %s18, 0
      %p122 = por %p120, %p121
      %p123 = scmp.ne.s32.totalorder %s115, %s117
      %p124 = scmp.eq.s32.totalorder %s23, 1
      %p125 = por %p123, %p124
      %p126 = scmp.ne.s32.totalorder %s117, %s118
      %p127 = scmp.eq.s32.totalorder %s23, 0
      %p128 = por %p126, %p127
      %p129 = scmp.ne.s32.totalorder %s117, %s118
      %p130 = scmp.eq.s32.totalorder %s24, 1
      %p131 = por %p129, %p130
      %p133 = scmp.ne.s32.totalorder %s118, %s132
      %p134 = scmp.eq.s32.totalorder %s24, 0
      %p135 = por %p133, %p134
      %s137 = sadd.s32 %s136, 1
      %p140 = scmp.eq.s32.totalorder %s18, 1
      %p141 = scmp.ne.s32.totalorder %s136, %s138
      %p142 = scmp.eq.s32.totalorder %s18, 0
      %p143 = por %p141, %p142
      %p144 = scmp.ne.s32.totalorder %s136, %s138
      %p145 = scmp.eq.s32.totalorder %s23, 1
      %p146 = por %p144, %p145
      %p147 = scmp.ne.s32.totalorder %s138, %s139
      %p148 = scmp.eq.s32.totalorder %s23, 0
      %p149 = por %p147, %p148
      %p150 = scmp.ne.s32.totalorder %s138, %s139
      %p151 = scmp.eq.s32.totalorder %s24, 1
      %p152 = por %p150, %p151
      %p154 = scmp.ne.s32.totalorder %s139, %s153
      %p155 = scmp.eq.s32.totalorder %s24, 0
      %p156 = por %p154, %p155
      %s158 = sadd.s32 %s157, 1
      %p161 = scmp.eq.s32.totalorder %s18, 1
      %p162 = scmp.ne.s32.totalorder %s157, %s159
      %p163 = scmp.eq.s32.totalorder %s18, 0
      %p164 = por %p162, %p163
      %p165 = scmp.ne.s32.totalorder %s157, %s159
      %p166 = scmp.eq.s32.totalorder %s23, 1
      %p167 = por %p165, %p166
      %p168 = scmp.ne.s32.totalorder %s159, %s160
      %p169 = scmp.eq.s32.totalorder %s23, 0
      %p170 = por %p168, %p169
      %p171 = scmp.ne.s32.totalorder %s159, %s160
      %p172 = scmp.eq.s32.totalorder %s24, 1
      %p173 = por %p171, %p172
      %p175 = scmp.ne.s32.totalorder %s160, %s174
      %p176 = scmp.eq.s32.totalorder %s24, 0
      %p177 = por %p175, %p176
      %s178 = ssub.s32 %s18, %s25
      %p179 = scmp.eq.s32.totalorder %s178, 0
      %s181 = sadd.s32 %s180, 1
      %s182 = scalar_select %p179, %s180, %s181
      %p185 = pneg %p179
      %p186 = scmp.eq.s32.totalorder %s18, 1
      %p187 = por %p185, %p186
      %p188 = scmp.ne.s32.totalorder %s180, %s183
      %p189 = scmp.eq.s32.totalorder %s18, 0
      %p190 = por %p188, %p189
      %p191 = scmp.ne.s32.totalorder %s180, %s183
      %p192 = scmp.eq.s32.totalorder %s23, 1
      %p193 = por %p191, %p192
      %p194 = scmp.ne.s32.totalorder %s183, %s184
      %p195 = scmp.eq.s32.totalorder %s23, 0
      %p196 = por %p194, %p195
      %p197 = scmp.ne.s32.totalorder %s183, %s184
      %p198 = scmp.eq.s32.totalorder %s24, 1
      %p199 = por %p197, %p198
      %p201 = scmp.ne.s32.totalorder %s184, %s200
      %p202 = scmp.eq.s32.totalorder %s24, 0
      %p203 = por %p201, %p202
      %p204 = scmp.le.s32.totalorder 1, %s18
      %p205 = scmp.lt.s32.totalorder %s18, 3
      %p206 = pnand %p204, %p205
      %p207 = pneg %p206
      // Predicated region
      $region9: #{tpu_custom_call.1} parent=5 // pred_check
        _
      $region10: #{tpu_custom_call.1} parent=5 // pred_check_branch
        %209 = sbr.rel (%p206) target = $region12
      $region11: #{tpu_custom_call.1} parent=5 // pred_region
        %s210 = ssub.s32 %s18, 1
        // Predicated region
        $region13: #{tpu_custom_call.1} parent=11 // pred_check
          %p211 = pneg %p65
        $region14: #{tpu_custom_call.1} parent=11 // pred_check_branch
          %213 = sbr.rel (%p211) target = $region16
        $region15: #{tpu_custom_call.1} parent=11 // pred_region
          _
        $region16: #{tpu_custom_call.1} parent=11 // pred_fallthru
          _
        // Predicated region
        $region17: #{tpu_custom_call.1} parent=11 // pred_check
          %p214 = pneg %p86
        $region18: #{tpu_custom_call.1} parent=11 // pred_check_branch
          %216 = sbr.rel (%p214) target = $region20
        $region19: #{tpu_custom_call.1} parent=11 // pred_region
          _
        $region20: #{tpu_custom_call.1} parent=11 // pred_fallthru
          _
        // Predicated region
        $region21: #{tpu_custom_call.1} parent=11 // pred_check
          %p217 = pneg %p107
        $region22: #{tpu_custom_call.1} parent=11 // pred_check_branch
          %219 = sbr.rel (%p217) target = $region24
        $region23: #{tpu_custom_call.1} parent=11 // pred_region
          _
        $region24: #{tpu_custom_call.1} parent=11 // pred_fallthru
          _
        // Predicated region
        $region25: #{tpu_custom_call.1} parent=11 // pred_check
          %p220 = pneg %p128
        $region26: #{tpu_custom_call.1} parent=11 // pred_check_branch
          %222 = sbr.rel (%p220) target = $region28
        $region27: #{tpu_custom_call.1} parent=11 // pred_region
          _
        $region28: #{tpu_custom_call.1} parent=11 // pred_fallthru
          _
        // Predicated region
        $region29: #{tpu_custom_call.1} parent=11 // pred_check
          %p223 = pneg %p149
        $region30: #{tpu_custom_call.1} parent=11 // pred_check_branch
          %225 = sbr.rel (%p223) target = $region32
        $region31: #{tpu_custom_call.1} parent=11 // pred_region
          _
        $region32: #{tpu_custom_call.1} parent=11 // pred_fallthru
          _
        // Predicated region
        $region33: #{tpu_custom_call.1} parent=11 // pred_check
          %p226 = pneg %p170
        $region34: #{tpu_custom_call.1} parent=11 // pred_check_branch
          %228 = sbr.rel (%p226) target = $region36
        $region35: #{tpu_custom_call.1} parent=11 // pred_region
          _
        $region36: #{tpu_custom_call.1} parent=11 // pred_fallthru
          _
      $region12: #{tpu_custom_call.1} parent=5 // pred_fallthru
        _
      %p229 = scmp.lt.s32.totalorder %s18, 2
      // Predicated region
      $region37: #{tpu_custom_call.1} parent=5 // pred_check
        %p230 = pneg %p229
      $region38: #{tpu_custom_call.1} parent=5 // pred_check_branch
        %232 = sbr.rel (%p230) target = $region40
      $region39: #{tpu_custom_call.1} parent=5 // pred_region
        // Predicated region
        $region41: #{tpu_custom_call.1} parent=39 // pred_check
          %p233 = pneg %p38
        $region42: #{tpu_custom_call.1} parent=39 // pred_check_branch
          %235 = sbr.rel (%p233) target = $region44
        $region43: #{tpu_custom_call.1} parent=39 // pred_region
          %s236 = sand.u32 %s28, 1
          %s237 = sand.u32 %s28, 1
          %s238 = smul.addr %s237, 48
          %s239 = scalar_lea.vmem [#allocation3], %s238
          %s240 = smul.u32 2, %s18
          %s241 = ssub.s32 3, %s240
          %p242 = scmp.lt.s32.totalorder %s241, 2
          %s243 = scalar_select %p242, %s241, 2
          %s244 = smul.u32 384, %s243
          %p245 = scmp.ne.s32.totalorder 0, %s244
          %s246 = smul.addr %s240, 8
          %s247 = scalar_lea.vmem %s0, %s246
          %s248 = smul.u32 %s243, 8
          // Predicated region
          $region45: #{tpu_custom_call.1} parent=43 // pred_check
            %p249 = pneg %p245
          $region46: #{tpu_custom_call.1} parent=43 // pred_check_branch
            %251 = sbr.rel (%p249) target = $region48
          $region47: #{tpu_custom_call.1} parent=43 // pred_region
            %p252 = scmp.lt.u32.totalorder %s248, 8
            %p253 = pneg %p252
            // Predicated region
            $region49: #{tpu_custom_call.1} parent=47 // pred_check
              _
            $region50: #{tpu_custom_call.1} parent=47 // pred_check_branch
              %255 = sbr.rel (%p252) target = $region52
            $region51: #{tpu_custom_call.1} parent=47 // pred_region
              %s274 = sand.u32 %s248, 7
              %p275 = scmp.eq.s32.totalorder %s274, 0
              // Predicated region
              $region64: #{tpu_custom_call.1} parent=51 // pred_check
                %p276 = pneg %p275
              $region65: #{tpu_custom_call.1} parent=51 // pred_check_branch
                %278 = sbr.rel (%p276) target = $region67
              $region66: #{tpu_custom_call.1} parent=51 // pred_region
                %s279 = sshrl.u32 %s248, 3
                %s280 = sdiv.u32.pop %s279, 24
                %s281 = srem.u32.pop %s279, 24
                // While loop
                $region68: #{tpu_custom_call.1} parent=66 // loop_pre_header
                  _
                $region69: #{tpu_custom_call.1} parent=66 // loop_header
                  %s285 = sphi 0, %s287
                  %p286 = scmp.ge.s32.totalorder %s285, %s280
                  %s290 = sphi 0, %s439
                  %s291 = sphi %s247, %s442
                  %s292 = sphi %s239, %s443
                $region70: #{tpu_custom_call.1} parent=66 // loop_header_branch
                  %289 = sbr.rel (%p286) target = $region74
                $region71: #{tpu_custom_call.1} parent=66 // loop_body
                  %v293 = vld [vmem:[%s291] sm:$0xff]
                  %294 = vst [vmem:[%s292] sm:$0xff] %v293
                  %v295 = vld [vmem:[%s291 + $0x8] sm:$0xff]
                  %296 = vst [vmem:[%s292 + $0x8] sm:$0xff] %v295
                  %v297 = vld [vmem:[%s291 + $0x10] sm:$0xff]
                  %298 = vst [vmem:[%s292 + $0x10] sm:$0xff] %v297
                  %v299 = vld [vmem:[%s291 + $0x18] sm:$0xff]
                  %300 = vst [vmem:[%s292 + $0x18] sm:$0xff] %v299
                  %v301 = vld [vmem:[%s291 + $0x20] sm:$0xff]
                  %302 = vst [vmem:[%s292 + $0x20] sm:$0xff] %v301
                  %v303 = vld [vmem:[%s291 + $0x28] sm:$0xff]
                  %304 = vst [vmem:[%s292 + $0x28] sm:$0xff] %v303
                  %v305 = vld [vmem:[%s291 + $0x30] sm:$0xff]
                  %306 = vst [vmem:[%s292 + $0x30] sm:$0xff] %v305
                  %v307 = vld [vmem:[%s291 + $0x38] sm:$0xff]
                  %308 = vst [vmem:[%s292 + $0x38] sm:$0xff] %v307
                  %v309 = vld [vmem:[%s291 + $0x40] sm:$0xff]
                  %310 = vst [vmem:[%s292 + $0x40] sm:$0xff] %v309
                  %v311 = vld [vmem:[%s291 + $0x48] sm:$0xff]
                  %312 = vst [vmem:[%s292 + $0x48] sm:$0xff] %v311
                  %v313 = vld [vmem:[%s291 + $0x50] sm:$0xff]
                  %314 = vst [vmem:[%s292 + $0x50] sm:$0xff] %v313
                  %v315 = vld [vmem:[%s291 + $0x58] sm:$0xff]
                  %316 = vst [vmem:[%s292 + $0x58] sm:$0xff] %v315
                  %v317 = vld [vmem:[%s291 + $0x60] sm:$0xff]
                  %318 = vst [vmem:[%s292 + $0x60] sm:$0xff] %v317
                  %v319 = vld [vmem:[%s291 + $0x68] sm:$0xff]
                  %320 = vst [vmem:[%s292 + $0x68] sm:$0xff] %v319
                  %v321 = vld [vmem:[%s291 + $0x70] sm:$0xff]
                  %322 = vst [vmem:[%s292 + $0x70] sm:$0xff] %v321
                  %v323 = vld [vmem:[%s291 + $0x78] sm:$0xff]
                  %324 = vst [vmem:[%s292 + $0x78] sm:$0xff] %v323
                  %v325 = vld [vmem:[%s291 + $0x80] sm:$0xff]
                  %326 = vst [vmem:[%s292 + $0x80] sm:$0xff] %v325
                  %v327 = vld [vmem:[%s291 + $0x88] sm:$0xff]
                  %328 = vst [vmem:[%s292 + $0x88] sm:$0xff] %v327
                  %v329 = vld [vmem:[%s291 + $0x90] sm:$0xff]
                  %330 = vst [vmem:[%s292 + $0x90] sm:$0xff] %v329
                  %v331 = vld [vmem:[%s291 + $0x98] sm:$0xff]
                  %332 = vst [vmem:[%s292 + $0x98] sm:$0xff] %v331
                  %v333 = vld [vmem:[%s291 + $0xa0] sm:$0xff]
                  %334 = vst [vmem:[%s292 + $0xa0] sm:$0xff] %v333
                  %v335 = vld [vmem:[%s291 + $0xa8] sm:$0xff]
                  %336 = vst [vmem:[%s292 + $0xa8] sm:$0xff] %v335
                  %v337 = vld [vmem:[%s291 + $0xb0] sm:$0xff]
                  %338 = vst [vmem:[%s292 + $0xb0] sm:$0xff] %v337
                  %v339 = vld [vmem:[%s291 + $0xb8] sm:$0xff]
                  %340 = vst [vmem:[%s292 + $0xb8] sm:$0xff] %v339
                  %v341 = vld [vmem:[%s291 + $0x18] sm:$0xff]
                  %342 = vst [vmem:[%s292 + $0x10] sm:$0xff] %v341
                  %v343 = vld [vmem:[%s291 + $0x20] sm:$0xff]
                  %344 = vst [vmem:[%s292 + $0x18] sm:$0xff] %v343
                  %v345 = vld [vmem:[%s291 + $0x28] sm:$0xff]
                  %346 = vst [vmem:[%s292 + $0x20] sm:$0xff] %v345
                  %v347 = vld [vmem:[%s291 + $0x30] sm:$0xff]
                  %348 = vst [vmem:[%s292 + $0x28] sm:$0xff] %v347
                  %v349 = vld [vmem:[%s291 + $0x38] sm:$0xff]
                  %350 = vst [vmem:[%s292 + $0x30] sm:$0xff] %v349
                  %v351 = vld [vmem:[%s291 + $0x40] sm:$0xff]
                  %352 = vst [vmem:[%s292 + $0x38] sm:$0xff] %v351
                  %v353 = vld [vmem:[%s291 + $0x48] sm:$0xff]
                  %354 = vst [vmem:[%s292 + $0x40] sm:$0xff] %v353
                  %v355 = vld [vmem:[%s291 + $0x50] sm:$0xff]
                  %356 = vst [vmem:[%s292 + $0x48] sm:$0xff] %v355
                  %v357 = vld [vmem:[%s291 + $0x58] sm:$0xff]
                  %358 = vst [vmem:[%s292 + $0x50] sm:$0xff] %v357
                  %v359 = vld [vmem:[%s291 + $0x60] sm:$0xff]
                  %360 = vst [vmem:[%s292 + $0x58] sm:$0xff] %v359
                  %v361 = vld [vmem:[%s291 + $0x68] sm:$0xff]
                  %362 = vst [vmem:[%s292 + $0x60] sm:$0xff] %v361
                  %v363 = vld [vmem:[%s291 + $0x70] sm:$0xff]
                  %364 = vst [vmem:[%s292 + $0x68] sm:$0xff] %v363
                  %v365 = vld [vmem:[%s291 + $0x78] sm:$0xff]
                  %366 = vst [vmem:[%s292 + $0x70] sm:$0xff] %v365
                  %v367 = vld [vmem:[%s291 + $0x80] sm:$0xff]
                  %368 = vst [vmem:[%s292 + $0x78] sm:$0xff] %v367
                  %v369 = vld [vmem:[%s291 + $0x88] sm:$0xff]
                  %370 = vst [vmem:[%s292 + $0x80] sm:$0xff] %v369
                  %v371 = vld [vmem:[%s291 + $0x90] sm:$0xff]
                  %372 = vst [vmem:[%s292 + $0x88] sm:$0xff] %v371
                  %v373 = vld [vmem:[%s291 + $0x98] sm:$0xff]
                  %374 = vst [vmem:[%s292 + $0x90] sm:$0xff] %v373
                  %v375 = vld [vmem:[%s291 + $0xa0] sm:$0xff]
                  %376 = vst [vmem:[%s292 + $0x98] sm:$0xff] %v375
                  %v377 = vld [vmem:[%s291 + $0xa8] sm:$0xff]
                  %378 = vst [vmem:[%s292 + $0xa0] sm:$0xff] %v377
                  %v379 = vld [vmem:[%s291 + $0xb0] sm:$0xff]
                  %380 = vst [vmem:[%s292 + $0xa8] sm:$0xff] %v379
                  %v381 = vld [vmem:[%s291 + $0xb8] sm:$0xff]
                  %382 = vst [vmem:[%s292 + $0xb0] sm:$0xff] %v381
                  %v383 = vld [vmem:[%s291 + $0xc0] sm:$0xff]
                  %384 = vst [vmem:[%s292 + $0xb8] sm:$0xff] %v383
                  %v385 = vld [vmem:[%s291 + $0xc8] sm:$0xff]
                  %386 = vst [vmem:[%s292 + $0xc0] sm:$0xff] %v385
                  %v387 = vld [vmem:[%s291 + $0xd0] sm:$0xff]
                  %388 = vst [vmem:[%s292 + $0xc8] sm:$0xff] %v387
                  %v389 = vld [vmem:[%s291 + $0x30] sm:$0xff]
                  %390 = vst [vmem:[%s292 + $0x20] sm:$0xff] %v389
                  %v391 = vld [vmem:[%s291 + $0x38] sm:$0xff]
                  %392 = vst [vmem:[%s292 + $0x28] sm:$0xff] %v391
                  %v393 = vld [vmem:[%s291 + $0x40] sm:$0xff]
                  %394 = vst [vmem:[%s292 + $0x30] sm:$0xff] %v393
                  %v395 = vld [vmem:[%s291 + $0x48] sm:$0xff]
                  %396 = vst [vmem:[%s292 + $0x38] sm:$0xff] %v395
                  %v397 = vld [vmem:[%s291 + $0x50] sm:$0xff]
                  %398 = vst [vmem:[%s292 + $0x40] sm:$0xff] %v397
                  %v399 = vld [vmem:[%s291 + $0x58] sm:$0xff]
                  %400 = vst [vmem:[%s292 + $0x48] sm:$0xff] %v399
                  %v401 = vld [vmem:[%s291 + $0x60] sm:$0xff]
                  %402 = vst [vmem:[%s292 + $0x50] sm:$0xff] %v401
                  %v403 = vld [vmem:[%s291 + $0x68] sm:$0xff]
                  %404 = vst [vmem:[%s292 + $0x58] sm:$0xff] %v403
                  %v405 = vld [vmem:[%s291 + $0x70] sm:$0xff]
                  %406 = vst [vmem:[%s292 + $0x60] sm:$0xff] %v405
                  %v407 = vld [vmem:[%s291 + $0x78] sm:$0xff]
                  %408 = vst [vmem:[%s292 + $0x68] sm:$0xff] %v407
                  %v409 = vld [vmem:[%s291 + $0x80] sm:$0xff]
                  %410 = vst [vmem:[%s292 + $0x70] sm:$0xff] %v409
                  %v411 = vld [vmem:[%s291 + $0x88] sm:$0xff]
                  %412 = vst [vmem:[%s292 + $0x78] sm:$0xff] %v411
                  %v413 = vld [vmem:[%s291 + $0x90] sm:$0xff]
                  %414 = vst [vmem:[%s292 + $0x80] sm:$0xff] %v413
                  %v415 = vld [vmem:[%s291 + $0x98] sm:$0xff]
                  %416 = vst [vmem:[%s292 + $0x88] sm:$0xff] %v415
                  %v417 = vld [vmem:[%s291 + $0xa0] sm:$0xff]
                  %418 = vst [vmem:[%s292 + $0x90] sm:$0xff] %v417
                  %v419 = vld [vmem:[%s291 + $0xa8] sm:$0xff]
                  %420 = vst [vmem:[%s292 + $0x98] sm:$0xff] %v419
                  %v421 = vld [vmem:[%s291 + $0xb0] sm:$0xff]
                  %422 = vst [vmem:[%s292 + $0xa0] sm:$0xff] %v421
                  %v423 = vld [vmem:[%s291 + $0xb8] sm:$0xff]
                  %424 = vst [vmem:[%s292 + $0xa8] sm:$0xff] %v423
                  %v425 = vld [vmem:[%s291 + $0xc0] sm:$0xff]
                  %426 = vst [vmem:[%s292 + $0xb0] sm:$0xff] %v425
                  %v427 = vld [vmem:[%s291 + $0xc8] sm:$0xff]
                  %428 = vst [vmem:[%s292 + $0xb8] sm:$0xff] %v427
                  %v429 = vld [vmem:[%s291 + $0xd0] sm:$0xff]
                  %430 = vst [vmem:[%s292 + $0xc0] sm:$0xff] %v429
                  %v431 = vld [vmem:[%s291 + $0xd8] sm:$0xff]
                  %432 = vst [vmem:[%s292 + $0xc8] sm:$0xff] %v431
                  %v433 = vld [vmem:[%s291 + $0xe0] sm:$0xff]
                  %434 = vst [vmem:[%s292 + $0xd0] sm:$0xff] %v433
                  %v435 = vld [vmem:[%s291 + $0xe8] sm:$0xff]
                  %436 = vst [vmem:[%s292 + $0xd8] sm:$0xff] %v435
                  %s437 = sadd.s32 1, %s290
                  %p438 = scmp.ge.s32.totalorder %s437, %s280
                  %s439 = scalar_select %p438, 0, %s437
                  %s440 = smul.u32 %s439, 192
                  %s441 = smul.u32 %s439, 192
                  %s442 = scalar_lea.vmem %s247, %s440
                  %s443 = scalar_lea.vmem %s239, %s441 [#allocation3]
                $region72: #{tpu_custom_call.1} parent=66 // loop_footer
                  %s287 = sadd.s32 %s285, 1
                $region73: #{tpu_custom_call.1} parent=66 // loop_footer_branch
                  %284 = sbr.rel target = $region69
                $region74: #{tpu_custom_call.1} parent=66 // loop_exit
                  _
                %s444 = sdiv.u32.pop %s279, 24
                %s445 = srem.u32.pop %s279, 24
                %s446 = smul.u32 %s444, 24
                %s447 = smul.u32 128, %s446
                %s448 = sshra.s32 %s447, 4
                %s449 = scalar_lea.vmem %s247, %s448
                %s450 = smul.u32 128, %s446
                %s451 = sshra.s32 %s450, 4
                %s452 = scalar_lea.vmem %s239, %s451 [#allocation3]
                // While loop
                $region75: #{tpu_custom_call.1} parent=66 // loop_pre_header
                  _
                $region76: #{tpu_custom_call.1} parent=66 // loop_header
                  %s456 = sphi 0, %s458
                  %p457 = scmp.ge.s32.totalorder %s456, %s445
                  %s461 = sphi 0, %s472
                  %s462 = sphi %s449, %s475
                  %s463 = sphi %s452, %s476
                $region77: #{tpu_custom_call.1} parent=66 // loop_header_branch
                  %460 = sbr.rel (%p457) target = $region81
                $region78: #{tpu_custom_call.1} parent=66 // loop_body
                  %v464 = vld [vmem:[%s462] sm:$0xff]
                  %465 = vst [vmem:[%s463] sm:$0xff] %v464
                  %v466 = vld [vmem:[%s462 + $0x18] sm:$0xff]
                  %467 = vst [vmem:[%s463 + $0x10] sm:$0xff] %v466
                  %v468 = vld [vmem:[%s462 + $0x30] sm:$0xff]
                  %469 = vst [vmem:[%s463 + $0x20] sm:$0xff] %v468
                  %s470 = sadd.s32 1, %s461
                  %p471 = scmp.ge.s32.totalorder %s470, %s445
                  %s472 = scalar_select %p471, 0, %s470
                  %s473 = smul.u32 %s472, 8
                  %s474 = smul.u32 %s472, 8
                  %s475 = scalar_lea.vmem %s449, %s473
                  %s476 = scalar_lea.vmem %s452, %s474 [#allocation3]
                $region79: #{tpu_custom_call.1} parent=66 // loop_footer
                  %s458 = sadd.s32 %s456, 1
                $region80: #{tpu_custom_call.1} parent=66 // loop_footer_branch
                  %455 = sbr.rel target = $region76
                $region81: #{tpu_custom_call.1} parent=66 // loop_exit
                  _
              $region67: #{tpu_custom_call.1} parent=51 // pred_fallthru
                _
              %p477 = pneg %p275
              // Predicated region
              $region82: #{tpu_custom_call.1} parent=51 // pred_check
                _
              $region83: #{tpu_custom_call.1} parent=51 // pred_check_branch
                %479 = sbr.rel (%p275) target = $region85
              $region84: #{tpu_custom_call.1} parent=51 // pred_region
                %s480 = sand.u32 %s248, 7
                %s481 = ssub.s32 %s248, %s480
                %s482 = scalar_lea.vmem %s247, %s481
                %s483 = ssub.s32 %s248, %s480
                %s484 = scalar_lea.vmem %s239, %s483 [#allocation3]
                %s485 = sshrl.u32 %s248, 3
                %s486 = sdiv.u32.pop %s485, 24
                %s487 = srem.u32.pop %s485, 24
                // While loop
                $region86: #{tpu_custom_call.1} parent=84 // loop_pre_header
                  _
                $region87: #{tpu_custom_call.1} parent=84 // loop_header
                  %s491 = sphi 0, %s493
                  %p492 = scmp.ge.s32.totalorder %s491, %s486
                  %s496 = sphi 0, %s645
                  %s497 = sphi %s247, %s648
                  %s498 = sphi %s239, %s649
                $region88: #{tpu_custom_call.1} parent=84 // loop_header_branch
                  %495 = sbr.rel (%p492) target = $region92
                $region89: #{tpu_custom_call.1} parent=84 // loop_body
                  %v499 = vld [vmem:[%s497] sm:$0xff]
                  %500 = vst [vmem:[%s498] sm:$0xff] %v499
                  %v501 = vld [vmem:[%s497 + $0x8] sm:$0xff]
                  %502 = vst [vmem:[%s498 + $0x8] sm:$0xff] %v501
                  %v503 = vld [vmem:[%s497 + $0x10] sm:$0xff]
                  %504 = vst [vmem:[%s498 + $0x10] sm:$0xff] %v503
                  %v505 = vld [vmem:[%s497 + $0x18] sm:$0xff]
                  %506 = vst [vmem:[%s498 + $0x18] sm:$0xff] %v505
                  %v507 = vld [vmem:[%s497 + $0x20] sm:$0xff]
                  %508 = vst [vmem:[%s498 + $0x20] sm:$0xff] %v507
                  %v509 = vld [vmem:[%s497 + $0x28] sm:$0xff]
                  %510 = vst [vmem:[%s498 + $0x28] sm:$0xff] %v509
                  %v511 = vld [vmem:[%s497 + $0x30] sm:$0xff]
                  %512 = vst [vmem:[%s498 + $0x30] sm:$0xff] %v511
                  %v513 = vld [vmem:[%s497 + $0x38] sm:$0xff]
                  %514 = vst [vmem:[%s498 + $0x38] sm:$0xff] %v513
                  %v515 = vld [vmem:[%s497 + $0x40] sm:$0xff]
                  %516 = vst [vmem:[%s498 + $0x40] sm:$0xff] %v515
                  %v517 = vld [vmem:[%s497 + $0x48] sm:$0xff]
                  %518 = vst [vmem:[%s498 + $0x48] sm:$0xff] %v517
                  %v519 = vld [vmem:[%s497 + $0x50] sm:$0xff]
                  %520 = vst [vmem:[%s498 + $0x50] sm:$0xff] %v519
                  %v521 = vld [vmem:[%s497 + $0x58] sm:$0xff]
                  %522 = vst [vmem:[%s498 + $0x58] sm:$0xff] %v521
                  %v523 = vld [vmem:[%s497 + $0x60] sm:$0xff]
                  %524 = vst [vmem:[%s498 + $0x60] sm:$0xff] %v523
                  %v525 = vld [vmem:[%s497 + $0x68] sm:$0xff]
                  %526 = vst [vmem:[%s498 + $0x68] sm:$0xff] %v525
                  %v527 = vld [vmem:[%s497 + $0x70] sm:$0xff]
                  %528 = vst [vmem:[%s498 + $0x70] sm:$0xff] %v527
                  %v529 = vld [vmem:[%s497 + $0x78] sm:$0xff]
                  %530 = vst [vmem:[%s498 + $0x78] sm:$0xff] %v529
                  %v531 = vld [vmem:[%s497 + $0x80] sm:$0xff]
                  %532 = vst [vmem:[%s498 + $0x80] sm:$0xff] %v531
                  %v533 = vld [vmem:[%s497 + $0x88] sm:$0xff]
                  %534 = vst [vmem:[%s498 + $0x88] sm:$0xff] %v533
                  %v535 = vld [vmem:[%s497 + $0x90] sm:$0xff]
                  %536 = vst [vmem:[%s498 + $0x90] sm:$0xff] %v535
                  %v537 = vld [vmem:[%s497 + $0x98] sm:$0xff]
                  %538 = vst [vmem:[%s498 + $0x98] sm:$0xff] %v537
                  %v539 = vld [vmem:[%s497 + $0xa0] sm:$0xff]
                  %540 = vst [vmem:[%s498 + $0xa0] sm:$0xff] %v539
                  %v541 = vld [vmem:[%s497 + $0xa8] sm:$0xff]
                  %542 = vst [vmem:[%s498 + $0xa8] sm:$0xff] %v541
                  %v543 = vld [vmem:[%s497 + $0xb0] sm:$0xff]
                  %544 = vst [vmem:[%s498 + $0xb0] sm:$0xff] %v543
                  %v545 = vld [vmem:[%s497 + $0xb8] sm:$0xff]
                  %546 = vst [vmem:[%s498 + $0xb8] sm:$0xff] %v545
                  %v547 = vld [vmem:[%s497 + $0x18] sm:$0xff]
                  %548 = vst [vmem:[%s498 + $0x10] sm:$0xff] %v547
                  %v549 = vld [vmem:[%s497 + $0x20] sm:$0xff]
                  %550 = vst [vmem:[%s498 + $0x18] sm:$0xff] %v549
                  %v551 = vld [vmem:[%s497 + $0x28] sm:$0xff]
                  %552 = vst [vmem:[%s498 + $0x20] sm:$0xff] %v551
                  %v553 = vld [vmem:[%s497 + $0x30] sm:$0xff]
                  %554 = vst [vmem:[%s498 + $0x28] sm:$0xff] %v553
                  %v555 = vld [vmem:[%s497 + $0x38] sm:$0xff]
                  %556 = vst [vmem:[%s498 + $0x30] sm:$0xff] %v555
                  %v557 = vld [vmem:[%s497 + $0x40] sm:$0xff]
                  %558 = vst [vmem:[%s498 + $0x38] sm:$0xff] %v557
                  %v559 = vld [vmem:[%s497 + $0x48] sm:$0xff]
                  %560 = vst [vmem:[%s498 + $0x40] sm:$0xff] %v559
                  %v561 = vld [vmem:[%s497 + $0x50] sm:$0xff]
                  %562 = vst [vmem:[%s498 + $0x48] sm:$0xff] %v561
                  %v563 = vld [vmem:[%s497 + $0x58] sm:$0xff]
                  %564 = vst [vmem:[%s498 + $0x50] sm:$0xff] %v563
                  %v565 = vld [vmem:[%s497 + $0x60] sm:$0xff]
                  %566 = vst [vmem:[%s498 + $0x58] sm:$0xff] %v565
                  %v567 = vld [vmem:[%s497 + $0x68] sm:$0xff]
                  %568 = vst [vmem:[%s498 + $0x60] sm:$0xff] %v567
                  %v569 = vld [vmem:[%s497 + $0x70] sm:$0xff]
                  %570 = vst [vmem:[%s498 + $0x68] sm:$0xff] %v569
                  %v571 = vld [vmem:[%s497 + $0x78] sm:$0xff]
                  %572 = vst [vmem:[%s498 + $0x70] sm:$0xff] %v571
                  %v573 = vld [vmem:[%s497 + $0x80] sm:$0xff]
                  %574 = vst [vmem:[%s498 + $0x78] sm:$0xff] %v573
                  %v575 = vld [vmem:[%s497 + $0x88] sm:$0xff]
                  %576 = vst [vmem:[%s498 + $0x80] sm:$0xff] %v575
                  %v577 = vld [vmem:[%s497 + $0x90] sm:$0xff]
                  %578 = vst [vmem:[%s498 + $0x88] sm:$0xff] %v577
                  %v579 = vld [vmem:[%s497 + $0x98] sm:$0xff]
                  %580 = vst [vmem:[%s498 + $0x90] sm:$0xff] %v579
                  %v581 = vld [vmem:[%s497 + $0xa0] sm:$0xff]
                  %582 = vst [vmem:[%s498 + $0x98] sm:$0xff] %v581
                  %v583 = vld [vmem:[%s497 + $0xa8] sm:$0xff]
                  %584 = vst [vmem:[%s498 + $0xa0] sm:$0xff] %v583
                  %v585 = vld [vmem:[%s497 + $0xb0] sm:$0xff]
                  %586 = vst [vmem:[%s498 + $0xa8] sm:$0xff] %v585
                  %v587 = vld [vmem:[%s497 + $0xb8] sm:$0xff]
                  %588 = vst [vmem:[%s498 + $0xb0] sm:$0xff] %v587
                  %v589 = vld [vmem:[%s497 + $0xc0] sm:$0xff]
                  %590 = vst [vmem:[%s498 + $0xb8] sm:$0xff] %v589
                  %v591 = vld [vmem:[%s497 + $0xc8] sm:$0xff]
                  %592 = vst [vmem:[%s498 + $0xc0] sm:$0xff] %v591
                  %v593 = vld [vmem:[%s497 + $0xd0] sm:$0xff]
                  %594 = vst [vmem:[%s498 + $0xc8] sm:$0xff] %v593
                  %v595 = vld [vmem:[%s497 + $0x30] sm:$0xff]
                  %596 = vst [vmem:[%s498 + $0x20] sm:$0xff] %v595
                  %v597 = vld [vmem:[%s497 + $0x38] sm:$0xff]
                  %598 = vst [vmem:[%s498 + $0x28] sm:$0xff] %v597
                  %v599 = vld [vmem:[%s497 + $0x40] sm:$0xff]
                  %600 = vst [vmem:[%s498 + $0x30] sm:$0xff] %v599
                  %v601 = vld [vmem:[%s497 + $0x48] sm:$0xff]
                  %602 = vst [vmem:[%s498 + $0x38] sm:$0xff] %v601
                  %v603 = vld [vmem:[%s497 + $0x50] sm:$0xff]
                  %604 = vst [vmem:[%s498 + $0x40] sm:$0xff] %v603
                  %v605 = vld [vmem:[%s497 + $0x58] sm:$0xff]
                  %606 = vst [vmem:[%s498 + $0x48] sm:$0xff] %v605
                  %v607 = vld [vmem:[%s497 + $0x60] sm:$0xff]
                  %608 = vst [vmem:[%s498 + $0x50] sm:$0xff] %v607
                  %v609 = vld [vmem:[%s497 + $0x68] sm:$0xff]
                  %610 = vst [vmem:[%s498 + $0x58] sm:$0xff] %v609
                  %v611 = vld [vmem:[%s497 + $0x70] sm:$0xff]
                  %612 = vst [vmem:[%s498 + $0x60] sm:$0xff] %v611
                  %v613 = vld [vmem:[%s497 + $0x78] sm:$0xff]
                  %614 = vst [vmem:[%s498 + $0x68] sm:$0xff] %v613
                  %v615 = vld [vmem:[%s497 + $0x80] sm:$0xff]
                  %616 = vst [vmem:[%s498 + $0x70] sm:$0xff] %v615
                  %v617 = vld [vmem:[%s497 + $0x88] sm:$0xff]
                  %618 = vst [vmem:[%s498 + $0x78] sm:$0xff] %v617
                  %v619 = vld [vmem:[%s497 + $0x90] sm:$0xff]
                  %620 = vst [vmem:[%s498 + $0x80] sm:$0xff] %v619
                  %v621 = vld [vmem:[%s497 + $0x98] sm:$0xff]
                  %622 = vst [vmem:[%s498 + $0x88] sm:$0xff] %v621
                  %v623 = vld [vmem:[%s497 + $0xa0] sm:$0xff]
                  %624 = vst [vmem:[%s498 + $0x90] sm:$0xff] %v623
                  %v625 = vld [vmem:[%s497 + $0xa8] sm:$0xff]
                  %626 = vst [vmem:[%s498 + $0x98] sm:$0xff] %v625
                  %v627 = vld [vmem:[%s497 + $0xb0] sm:$0xff]
                  %628 = vst [vmem:[%s498 + $0xa0] sm:$0xff] %v627
                  %v629 = vld [vmem:[%s497 + $0xb8] sm:$0xff]
                  %630 = vst [vmem:[%s498 + $0xa8] sm:$0xff] %v629
                  %v631 = vld [vmem:[%s497 + $0xc0] sm:$0xff]
                  %632 = vst [vmem:[%s498 + $0xb0] sm:$0xff] %v631
                  %v633 = vld [vmem:[%s497 + $0xc8] sm:$0xff]
                  %634 = vst [vmem:[%s498 + $0xb8] sm:$0xff] %v633
                  %v635 = vld [vmem:[%s497 + $0xd0] sm:$0xff]
                  %636 = vst [vmem:[%s498 + $0xc0] sm:$0xff] %v635
                  %v637 = vld [vmem:[%s497 + $0xd8] sm:$0xff]
                  %638 = vst [vmem:[%s498 + $0xc8] sm:$0xff] %v637
                  %v639 = vld [vmem:[%s497 + $0xe0] sm:$0xff]
                  %640 = vst [vmem:[%s498 + $0xd0] sm:$0xff] %v639
                  %v641 = vld [vmem:[%s497 + $0xe8] sm:$0xff]
                  %642 = vst [vmem:[%s498 + $0xd8] sm:$0xff] %v641
                  %s643 = sadd.s32 1, %s496
                  %p644 = scmp.ge.s32.totalorder %s643, %s486
                  %s645 = scalar_select %p644, 0, %s643
                  %s646 = smul.u32 %s645, 192
                  %s647 = smul.u32 %s645, 192
                  %s648 = scalar_lea.vmem %s247, %s646
                  %s649 = scalar_lea.vmem %s239, %s647 [#allocation3]
                $region90: #{tpu_custom_call.1} parent=84 // loop_footer
                  %s493 = sadd.s32 %s491, 1
                $region91: #{tpu_custom_call.1} parent=84 // loop_footer_branch
                  %490 = sbr.rel target = $region87
                $region92: #{tpu_custom_call.1} parent=84 // loop_exit
                  _
                %s650 = sdiv.u32.pop %s485, 24
                %s651 = srem.u32.pop %s485, 24
                %s652 = smul.u32 %s650, 24
                %s653 = smul.u32 128, %s652
                %s654 = sshra.s32 %s653, 4
                %s655 = scalar_lea.vmem %s247, %s654
                %s656 = smul.u32 128, %s652
                %s657 = sshra.s32 %s656, 4
                %s658 = scalar_lea.vmem %s239, %s657 [#allocation3]
                // While loop
                $region93: #{tpu_custom_call.1} parent=84 // loop_pre_header
                  _
                $region94: #{tpu_custom_call.1} parent=84 // loop_header
                  %s662 = sphi 0, %s664
                  %p663 = scmp.ge.s32.totalorder %s662, %s651
                  %s667 = sphi 0, %s678
                  %s668 = sphi %s655, %s681
                  %s669 = sphi %s658, %s682
                $region95: #{tpu_custom_call.1} parent=84 // loop_header_branch
                  %666 = sbr.rel (%p663) target = $region99
                $region96: #{tpu_custom_call.1} parent=84 // loop_body
                  %v670 = vld [vmem:[%s668] sm:$0xff]
                  %671 = vst [vmem:[%s669] sm:$0xff] %v670
                  %v672 = vld [vmem:[%s668 + $0x18] sm:$0xff]
                  %673 = vst [vmem:[%s669 + $0x10] sm:$0xff] %v672
                  %v674 = vld [vmem:[%s668 + $0x30] sm:$0xff]
                  %675 = vst [vmem:[%s669 + $0x20] sm:$0xff] %v674
                  %s676 = sadd.s32 1, %s667
                  %p677 = scmp.ge.s32.totalorder %s676, %s651
                  %s678 = scalar_select %p677, 0, %s676
                  %s679 = smul.u32 %s678, 8
                  %s680 = smul.u32 %s678, 8
                  %s681 = scalar_lea.vmem %s655, %s679
                  %s682 = scalar_lea.vmem %s658, %s680 [#allocation3]
                $region97: #{tpu_custom_call.1} parent=84 // loop_footer
                  %s664 = sadd.s32 %s662, 1
                $region98: #{tpu_custom_call.1} parent=84 // loop_footer_branch
                  %661 = sbr.rel target = $region94
                $region99: #{tpu_custom_call.1} parent=84 // loop_exit
                  _
                %s683 = sshllo.u32 0, %s480
                loop: start=0, step=1, limit=1
                $region100: #{tpu_custom_call.1} parent=84 // loop_pre_header
                  _
                $region101: #{tpu_custom_call.1} parent=84 // loop_header
                  %s685 = sphi 0, %s689
                  %p686 = scmp.ge.s32.totalorder %s685, 1
                  %s690 = sphi %s482, %s482
                  %s691 = sphi %s484, %s484
                $region102: #{tpu_custom_call.1} parent=84 // loop_header_branch
                  %688 = sbr.rel (%p686) target = $region106
                $region103: #{tpu_custom_call.1} parent=84 // loop_body
                  %v692 = vld [vmem:[%s690] sm:%s683]
                  %693 = vst [vmem:[%s691] sm:%s683] %v692
                  %v694 = vld [vmem:[%s690 + $0x18] sm:%s683]
                  %695 = vst [vmem:[%s691 + $0x10] sm:%s683] %v694
                  %v696 = vld [vmem:[%s690 + $0x30] sm:%s683]
                  %697 = vst [vmem:[%s691 + $0x20] sm:%s683] %v696
                $region104: #{tpu_custom_call.1} parent=84 // loop_footer
                  %s689 = sadd.s32 1, %s685
                $region105: #{tpu_custom_call.1} parent=84 // loop_footer_branch
                  %684 = sbr.rel target = $region101
                $region106: #{tpu_custom_call.1} parent=84 // loop_exit
                  _
              $region85: #{tpu_custom_call.1} parent=51 // pred_fallthru
                _
            $region52: #{tpu_custom_call.1} parent=47 // pred_fallthru
              _
            // Predicated region
            $region53: #{tpu_custom_call.1} parent=47 // pred_check
              %p256 = pneg %p252
            $region54: #{tpu_custom_call.1} parent=47 // pred_check_branch
              %258 = sbr.rel (%p256) target = $region56
            $region55: #{tpu_custom_call.1} parent=47 // pred_region
              %s259 = sshllo.u32 0, %s248
              loop: start=0, step=1, limit=1
              $region57: #{tpu_custom_call.1} parent=55 // loop_pre_header
                _
              $region58: #{tpu_custom_call.1} parent=55 // loop_header
                %s261 = sphi 0, %s265
                %p262 = scmp.ge.s32.totalorder %s261, 1
                %s266 = sphi %s247, %s247
                %s267 = sphi %s239, %s239
              $region59: #{tpu_custom_call.1} parent=55 // loop_header_branch
                %264 = sbr.rel (%p262) target = $region63
              $region60: #{tpu_custom_call.1} parent=55 // loop_body
                %v268 = vld [vmem:[%s266] sm:%s259]
                %269 = vst [vmem:[%s267] sm:%s259] %v268
                %v270 = vld [vmem:[%s266 + $0x18] sm:%s259]
                %271 = vst [vmem:[%s267 + $0x10] sm:%s259] %v270
                %v272 = vld [vmem:[%s266 + $0x30] sm:%s259]
                %273 = vst [vmem:[%s267 + $0x20] sm:%s259] %v272
              $region61: #{tpu_custom_call.1} parent=55 // loop_footer
                %s265 = sadd.s32 1, %s261
              $region62: #{tpu_custom_call.1} parent=55 // loop_footer_branch
                %260 = sbr.rel target = $region58
              $region63: #{tpu_custom_call.1} parent=55 // loop_exit
                _
            $region56: #{tpu_custom_call.1} parent=47 // pred_fallthru
              _
          $region48: #{tpu_custom_call.1} parent=43 // pred_fallthru
            _
          %698 = vnop
        $region44: #{tpu_custom_call.1} parent=39 // pred_fallthru
          _
      $region40: #{tpu_custom_call.1} parent=5 // pred_fallthru
        _
      %p699 = scmp.le.s32.totalorder 1, %s18
      %p700 = scmp.lt.s32.totalorder %s18, 3
      %p701 = pnand %p699, %p700
      %p702 = pneg %p701
      // Predicated region
      $region107: #{tpu_custom_call.1} parent=5 // pred_check
        _
      $region108: #{tpu_custom_call.1} parent=5 // pred_check_branch
        %704 = sbr.rel (%p701) target = $region110
      $region109: #{tpu_custom_call.1} parent=5 // pred_region
        %s705 = ssub.s32 %s18, 1
        %s706 = sand.u32 %s31, 1
        %s707 = sand.u32 %s31, 1
        %s708 = smul.addr %s707, 48
        %s709 = scalar_lea.vmem [#allocation3], %s708
        // Predicated region
        $region111: #{tpu_custom_call.1} parent=109 // pred_check
          %p710 = pneg %p44
        $region112: #{tpu_custom_call.1} parent=109 // pred_check_branch
          %712 = sbr.rel (%p710) target = $region114
        $region113: #{tpu_custom_call.1} parent=109 // pred_region
          _
        $region114: #{tpu_custom_call.1} parent=109 // pred_fallthru
          _
        %s713 = sand.u32 %s31, 1
        %s714 = sand.u32 %s31, 1
        %s715 = smul.addr %s714, 48
        %s716 = scalar_lea.vmem [#allocation3], %s715
        %p717 = pneg %p44
        %p718 = pneg %p41
        %p719 = pneg %p65
        %p720 = pneg %p62
        %p721 = pneg %p86
        %p722 = pneg %p83
        %p723 = pneg %p107
        %p724 = pneg %p104
        %p725 = pneg %p128
        %p726 = pneg %p125
        %p727 = pneg %p149
        %p728 = pneg %p146
        %p729 = pneg %p170
        %p730 = pneg %p167
        %p731 = pneg %p196
        %p732 = pneg %p193
        %s733 = sand.u32 %s183, 1
        %s734 = scalar_lea.sflag [#allocation5], %s733
        %s735 = sand.u32 %s183, 1
        %s736 = smul.addr %s735, 2
        %s737 = scalar_lea.vmem [#allocation4], %s736
        %s738 = smul.u32 2, %s23
        %s739 = ssub.s32 3, %s738
        %p740 = scmp.lt.s32.totalorder %s739, 2
        %s741 = scalar_select %p740, %s739, 2
        %s742 = smul.u32 384, %s741
        %s743 = smul.u32 2, %s23
        %s744 = ssub.s32 3, %s743
        %p745 = scmp.lt.s32.totalorder %s744, 2
        %s746 = scalar_select %p745, %s744, 2
        %s747 = smul.u32 16, %s746
        %v749 = vld [vmem:[%s709] sm:$0xff]
        %v750 = vld [vmem:[%s709 + $0x8] sm:$0xff]
        %v751 = vld [vmem:[%s709 + $0x10] sm:$0xff]
        %v752 = vld [vmem:[%s709 + $0x18] sm:$0xff]
        %v753 = vld [vmem:[%s709 + $0x20] sm:$0x3f]
        %v754 = vld [vmem:[%s709 + $0x28] sm:$0x3f]
        %v755 = vpack.c.bf16 %v751, %v749
        %v756 = vpack.c.bf16 %v752, %v750
        %v757 = vpack.c.bf16 %v753, %v753
        %v758 = vpack.c.bf16 %v754, %v754
        %v759 = vld [vmem:[%s1] sm:$0xf]
        %v760 = vld [vmem:[%s1 + $0x4] sm:$0xf]
        %v761 = vld [vmem:[%s1 + $0x8] sm:$0xf]
        %v762 = vld [vmem:[%s1 + $0xc] sm:$0xf]
        %v763 = vld [vmem:[%s1 + $0x10] sm:$0xf]
        %v764 = vld [vmem:[%s1 + $0x14] sm:$0xf]
        %v765 = vld [vmem:[%s1 + $0x18] sm:$0xf]
        %v766 = vld [vmem:[%s1 + $0x1c] sm:$0xf]
        %v767 = vld [vmem:[%s1 + $0x20] sm:$0xf]
        %v768 = vld [vmem:[%s1 + $0x24] sm:$0xf]
        %v769 = vld [vmem:[%s1 + $0x28] sm:$0xf]
        %v770 = vld [vmem:[%s1 + $0x2c] sm:$0xf]
        %v771 = vld [vmem:[%s1 + $0x30] sm:$0xf]
        %v772 = vld [vmem:[%s1 + $0x34] sm:$0xf]
        %v773 = vld [vmem:[%s1 + $0x38] sm:$0xf]
        %v774 = vld [vmem:[%s1 + $0x3c] sm:$0xf]
        %v775 = vld [vmem:[%s1 + $0x40] sm:$0xf]
        %v776 = vld [vmem:[%s1 + $0x44] sm:$0xf]
        %v777 = vld [vmem:[%s1 + $0x48] sm:$0xf]
        %v778 = vld [vmem:[%s1 + $0x4c] sm:$0xf]
        %v779 = vld [vmem:[%s1 + $0x50] sm:$0xf]
        %v780 = vld [vmem:[%s1 + $0x54] sm:$0xf]
        %v781 = vld [vmem:[%s1 + $0x58] sm:$0xf]
        %v782 = vld [vmem:[%s1 + $0x5c] sm:$0xf]
        %v783 = vld [vmem:[%s1 + $0x60] sm:$0xf]
        %v784 = vld [vmem:[%s1 + $0x64] sm:$0xf]
        %v785 = vld [vmem:[%s1 + $0x68] sm:$0xf]
        %v786 = vld [vmem:[%s1 + $0x6c] sm:$0xf]
        %v787 = vld [vmem:[%s1 + $0x70] sm:$0xf]
        %v788 = vld [vmem:[%s1 + $0x74] sm:$0xf]
        %v789 = vld [vmem:[%s1 + $0x78] sm:$0xf]
        %v790 = vld [vmem:[%s1 + $0x7c] sm:$0xf]
        %v791 = vld [vmem:[%s1 + $0x80] sm:$0xf]
        %v792 = vld [vmem:[%s1 + $0x84] sm:$0xf]
        %v793 = vld [vmem:[%s1 + $0x88] sm:$0xf]
        %v794 = vld [vmem:[%s1 + $0x8c] sm:$0xf]
        %v795 = vld [vmem:[%s1 + $0x90] sm:$0xf]
        %v796 = vld [vmem:[%s1 + $0x94] sm:$0xf]
        %v797 = vld [vmem:[%s1 + $0x98] sm:$0xf]
        %v798 = vld [vmem:[%s1 + $0x9c] sm:$0xf]
        %v799 = vld [vmem:[%s1 + $0xa0] sm:$0xf]
        %v800 = vld [vmem:[%s1 + $0xa4] sm:$0xf]
        %v801 = vld [vmem:[%s1 + $0xa8] sm:$0xf]
        %v802 = vld [vmem:[%s1 + $0xac] sm:$0xf]
        %v803 = vld [vmem:[%s1 + $0xb0] sm:$0xf]
        %v804 = vld [vmem:[%s1 + $0xb4] sm:$0xf]
        %v805 = vld [vmem:[%s1 + $0xb8] sm:$0xf]
        %v806 = vld [vmem:[%s1 + $0xbc] sm:$0xf]
        %v807 = vld [vmem:[%s1 + $0xc0] sm:$0xf]
        %v808 = vld [vmem:[%s1 + $0xc4] sm:$0xf]
        %v809 = vld [vmem:[%s1 + $0xc8] sm:$0xf]
        %v810 = vld [vmem:[%s1 + $0xcc] sm:$0xf]
        %v811 = vld [vmem:[%s1 + $0xd0] sm:$0xf]
        %v812 = vld [vmem:[%s1 + $0xd4] sm:$0xf]
        %v813 = vld [vmem:[%s1 + $0xd8] sm:$0xf]
        %v814 = vld [vmem:[%s1 + $0xdc] sm:$0xf]
        %v815 = vld [vmem:[%s1 + $0xe0] sm:$0xf]
        %v816 = vld [vmem:[%s1 + $0xe4] sm:$0xf]
        %v817 = vld [vmem:[%s1 + $0xe8] sm:$0xf]
        %v818 = vld [vmem:[%s1 + $0xec] sm:$0xf]
        %v819 = vld [vmem:[%s1 + $0xf0] sm:$0xf]
        %v820 = vld [vmem:[%s1 + $0xf4] sm:$0xf]
        %v821 = vld [vmem:[%s1 + $0xf8] sm:$0xf]
        %v822 = vld [vmem:[%s1 + $0xfc] sm:$0xf]
        %v823 = vld [vmem:[%s2] sm:$0xff]
        %v824 = vld [vmem:[%s2 + $0x8] sm:$0xff]
        %v825 = vld [vmem:[%s2 + $0x10] sm:$0xff]
        %v826 = vld [vmem:[%s2 + $0x18] sm:$0xff]
        %v827 = vld [vmem:[%s2 + $0x20] sm:$0xff]
        %v828 = vld [vmem:[%s2 + $0x28] sm:$0xff]
        %v829 = vld [vmem:[%s2 + $0x30] sm:$0xff]
        %v830 = vld [vmem:[%s2 + $0x38] sm:$0xff]
        %v831 = vld [vmem:[%s2 + $0x40] sm:$0xff]
        %v832 = vld [vmem:[%s2 + $0x48] sm:$0xff]
        %v833 = vld [vmem:[%s2 + $0x50] sm:$0xff]
        %v834 = vld [vmem:[%s2 + $0x58] sm:$0xff]
        %v835 = vld [vmem:[%s2 + $0x60] sm:$0xff]
        %v836 = vld [vmem:[%s2 + $0x68] sm:$0xff]
        %v837 = vld [vmem:[%s2 + $0x70] sm:$0xff]
        %v838 = vld [vmem:[%s2 + $0x78] sm:$0xff]
        %v839 = vld [vmem:[%s2 + $0x80] sm:$0xff]
        %v840 = vld [vmem:[%s2 + $0x88] sm:$0xff]
        %v841 = vld [vmem:[%s2 + $0x90] sm:$0xff]
        %v842 = vld [vmem:[%s2 + $0x98] sm:$0xff]
        %v843 = vld [vmem:[%s2 + $0xa0] sm:$0xff]
        %v844 = vld [vmem:[%s2 + $0xa8] sm:$0xff]
        %v845 = vld [vmem:[%s2 + $0xb0] sm:$0xff]
        %v846 = vld [vmem:[%s2 + $0xb8] sm:$0xff]
        %v847 = vld [vmem:[%s2 + $0xc0] sm:$0xff]
        %v848 = vld [vmem:[%s2 + $0xc8] sm:$0xff]
        %v849 = vld [vmem:[%s2 + $0xd0] sm:$0xff]
        %v850 = vld [vmem:[%s2 + $0xd8] sm:$0xff]
        %v851 = vld [vmem:[%s2 + $0xe0] sm:$0xff]
        %v852 = vld [vmem:[%s2 + $0xe8] sm:$0xff]
        %v853 = vld [vmem:[%s2 + $0xf0] sm:$0xff]
        %v854 = vld [vmem:[%s2 + $0xf8] sm:$0xff]
        %v855 = vld [vmem:[%s2 + $0x100] sm:$0xff]
        %v856 = vld [vmem:[%s2 + $0x108] sm:$0xff]
        %v857 = vld [vmem:[%s2 + $0x110] sm:$0xff]
        %v858 = vld [vmem:[%s2 + $0x118] sm:$0xff]
        %v859 = vld [vmem:[%s2 + $0x120] sm:$0xff]
        %v860 = vld [vmem:[%s2 + $0x128] sm:$0xff]
        %v861 = vld [vmem:[%s2 + $0x130] sm:$0xff]
        %v862 = vld [vmem:[%s2 + $0x138] sm:$0xff]
        %v863 = vld [vmem:[%s2 + $0x140] sm:$0xff]
        %v864 = vld [vmem:[%s2 + $0x148] sm:$0xff]
        %v865 = vld [vmem:[%s2 + $0x150] sm:$0xff]
        %v866 = vld [vmem:[%s2 + $0x158] sm:$0xff]
        %v867 = vld [vmem:[%s2 + $0x160] sm:$0xff]
        %v868 = vld [vmem:[%s2 + $0x168] sm:$0xff]
        %v869 = vld [vmem:[%s2 + $0x170] sm:$0xff]
        %v870 = vld [vmem:[%s2 + $0x178] sm:$0xff]
        %v871 = vld [vmem:[%s2 + $0x180] sm:$0xff]
        %v872 = vld [vmem:[%s2 + $0x188] sm:$0xff]
        %v873 = vld [vmem:[%s2 + $0x190] sm:$0xff]
        %v874 = vld [vmem:[%s2 + $0x198] sm:$0xff]
        %v875 = vld [vmem:[%s2 + $0x1a0] sm:$0xff]
        %v876 = vld [vmem:[%s2 + $0x1a8] sm:$0xff]
        %v877 = vld [vmem:[%s2 + $0x1b0] sm:$0xff]
        %v878 = vld [vmem:[%s2 + $0x1b8] sm:$0xff]
        %v879 = vld [vmem:[%s2 + $0x1c0] sm:$0xff]
        %v880 = vld [vmem:[%s2 + $0x1c8] sm:$0xff]
        %v881 = vld [vmem:[%s2 + $0x1d0] sm:$0xff]
        %v882 = vld [vmem:[%s2 + $0x1d8] sm:$0xff]
        %v883 = vld [vmem:[%s2 + $0x1e0] sm:$0xff]
        %v884 = vld [vmem:[%s2 + $0x1e8] sm:$0xff]
        %v885 = vld [vmem:[%s2 + $0x1f0] sm:$0xff]
        %v886 = vld [vmem:[%s2 + $0x1f8] sm:$0xff]
        %888 = vset.pattern.permute.xlu0 0
        %889 = vperm.xlu0 %888, %v823
        %v890 = vpop.permute.xlu0 %889
        %893 = vset.pattern.permute.xlu0 0
        %894 = vperm.xlu0 %893, %v824
        %v895 = vpop.permute.xlu0 %894
        %898 = vset.pattern.permute.xlu0 0
        %899 = vperm.xlu0 %898, %v825
        %v900 = vpop.permute.xlu0 %899
        %903 = vset.pattern.permute.xlu0 0
        %904 = vperm.xlu0 %903, %v826
        %v905 = vpop.permute.xlu0 %904
        %908 = vset.pattern.permute.xlu0 0
        %909 = vperm.xlu0 %908, %v827
        %v910 = vpop.permute.xlu0 %909
        %913 = vset.pattern.permute.xlu0 0
        %914 = vperm.xlu0 %913, %v828
        %v915 = vpop.permute.xlu0 %914
        %918 = vset.pattern.permute.xlu0 0
        %919 = vperm.xlu0 %918, %v829
        %v920 = vpop.permute.xlu0 %919
        %923 = vset.pattern.permute.xlu0 0
        %924 = vperm.xlu0 %923, %v830
        %v925 = vpop.permute.xlu0 %924
        %928 = vset.pattern.permute.xlu0 0
        %929 = vperm.xlu0 %928, %v831
        %v930 = vpop.permute.xlu0 %929
        %933 = vset.pattern.permute.xlu0 0
        %934 = vperm.xlu0 %933, %v832
        %v935 = vpop.permute.xlu0 %934
        %938 = vset.pattern.permute.xlu0 0
        %939 = vperm.xlu0 %938, %v833
        %v940 = vpop.permute.xlu0 %939
        %943 = vset.pattern.permute.xlu0 0
        %944 = vperm.xlu0 %943, %v834
        %v945 = vpop.permute.xlu0 %944
        %948 = vset.pattern.permute.xlu0 0
        %949 = vperm.xlu0 %948, %v835
        %v950 = vpop.permute.xlu0 %949
        %953 = vset.pattern.permute.xlu0 0
        %954 = vperm.xlu0 %953, %v836
        %v955 = vpop.permute.xlu0 %954
        %958 = vset.pattern.permute.xlu0 0
        %959 = vperm.xlu0 %958, %v837
        %v960 = vpop.permute.xlu0 %959
        %963 = vset.pattern.permute.xlu0 0
        %964 = vperm.xlu0 %963, %v838
        %v965 = vpop.permute.xlu0 %964
        %968 = vset.pattern.permute.xlu0 0
        %969 = vperm.xlu0 %968, %v839
        %v970 = vpop.permute.xlu0 %969
        %973 = vset.pattern.permute.xlu0 0
        %974 = vperm.xlu0 %973, %v840
        %v975 = vpop.permute.xlu0 %974
        %978 = vset.pattern.permute.xlu0 0
        %979 = vperm.xlu0 %978, %v841
        %v980 = vpop.permute.xlu0 %979
        %983 = vset.pattern.permute.xlu0 0
        %984 = vperm.xlu0 %983, %v842
        %v985 = vpop.permute.xlu0 %984
        %988 = vset.pattern.permute.xlu0 0
        %989 = vperm.xlu0 %988, %v843
        %v990 = vpop.permute.xlu0 %989
        %993 = vset.pattern.permute.xlu0 0
        %994 = vperm.xlu0 %993, %v844
        %v995 = vpop.permute.xlu0 %994
        %998 = vset.pattern.permute.xlu0 0
        %999 = vperm.xlu0 %998, %v845
        %v1000 = vpop.permute.xlu0 %999
        %1003 = vset.pattern.permute.xlu0 0
        %1004 = vperm.xlu0 %1003, %v846
        %v1005 = vpop.permute.xlu0 %1004
        %1008 = vset.pattern.permute.xlu0 0
        %1009 = vperm.xlu0 %1008, %v847
        %v1010 = vpop.permute.xlu0 %1009
        %1013 = vset.pattern.permute.xlu0 0
        %1014 = vperm.xlu0 %1013, %v848
        %v1015 = vpop.permute.xlu0 %1014
        %1018 = vset.pattern.permute.xlu0 0
        %1019 = vperm.xlu0 %1018, %v849
        %v1020 = vpop.permute.xlu0 %1019
        %1023 = vset.pattern.permute.xlu0 0
        %1024 = vperm.xlu0 %1023, %v850
        %v1025 = vpop.permute.xlu0 %1024
        %1028 = vset.pattern.permute.xlu0 0
        %1029 = vperm.xlu0 %1028, %v851
        %v1030 = vpop.permute.xlu0 %1029
        %1033 = vset.pattern.permute.xlu0 0
        %1034 = vperm.xlu0 %1033, %v852
        %v1035 = vpop.permute.xlu0 %1034
        %1038 = vset.pattern.permute.xlu0 0
        %1039 = vperm.xlu0 %1038, %v853
        %v1040 = vpop.permute.xlu0 %1039
        %1043 = vset.pattern.permute.xlu0 0
        %1044 = vperm.xlu0 %1043, %v854
        %v1045 = vpop.permute.xlu0 %1044
        %1048 = vset.pattern.permute.xlu0 0
        %1049 = vperm.xlu0 %1048, %v855
        %v1050 = vpop.permute.xlu0 %1049
        %1053 = vset.pattern.permute.xlu0 0
        %1054 = vperm.xlu0 %1053, %v856
        %v1055 = vpop.permute.xlu0 %1054
        %1058 = vset.pattern.permute.xlu0 0
        %1059 = vperm.xlu0 %1058, %v857
        %v1060 = vpop.permute.xlu0 %1059
        %1063 = vset.pattern.permute.xlu0 0
        %1064 = vperm.xlu0 %1063, %v858
        %v1065 = vpop.permute.xlu0 %1064
        %1068 = vset.pattern.permute.xlu0 0
        %1069 = vperm.xlu0 %1068, %v859
        %v1070 = vpop.permute.xlu0 %1069
        %1073 = vset.pattern.permute.xlu0 0
        %1074 = vperm.xlu0 %1073, %v860
        %v1075 = vpop.permute.xlu0 %1074
        %1078 = vset.pattern.permute.xlu0 0
        %1079 = vperm.xlu0 %1078, %v861
        %v1080 = vpop.permute.xlu0 %1079
        %1083 = vset.pattern.permute.xlu0 0
        %1084 = vperm.xlu0 %1083, %v862
        %v1085 = vpop.permute.xlu0 %1084
        %1088 = vset.pattern.permute.xlu0 0
        %1089 = vperm.xlu0 %1088, %v863
        %v1090 = vpop.permute.xlu0 %1089
        %1093 = vset.pattern.permute.xlu0 0
        %1094 = vperm.xlu0 %1093, %v864
        %v1095 = vpop.permute.xlu0 %1094
        %1098 = vset.pattern.permute.xlu0 0
        %1099 = vperm.xlu0 %1098, %v865
        %v1100 = vpop.permute.xlu0 %1099
        %1103 = vset.pattern.permute.xlu0 0
        %1104 = vperm.xlu0 %1103, %v866
        %v1105 = vpop.permute.xlu0 %1104
        %1108 = vset.pattern.permute.xlu0 0
        %1109 = vperm.xlu0 %1108, %v867
        %v1110 = vpop.permute.xlu0 %1109
        %1113 = vset.pattern.permute.xlu0 0
        %1114 = vperm.xlu0 %1113, %v868
        %v1115 = vpop.permute.xlu0 %1114
        %1118 = vset.pattern.permute.xlu0 0
        %1119 = vperm.xlu0 %1118, %v869
        %v1120 = vpop.permute.xlu0 %1119
        %1123 = vset.pattern.permute.xlu0 0
        %1124 = vperm.xlu0 %1123, %v870
        %v1125 = vpop.permute.xlu0 %1124
        %1128 = vset.pattern.permute.xlu0 0
        %1129 = vperm.xlu0 %1128, %v871
        %v1130 = vpop.permute.xlu0 %1129
        %1133 = vset.pattern.permute.xlu0 0
        %1134 = vperm.xlu0 %1133, %v872
        %v1135 = vpop.permute.xlu0 %1134
        %1138 = vset.pattern.permute.xlu0 0
        %1139 = vperm.xlu0 %1138, %v873
        %v1140 = vpop.permute.xlu0 %1139
        %1143 = vset.pattern.permute.xlu0 0
        %1144 = vperm.xlu0 %1143, %v874
        %v1145 = vpop.permute.xlu0 %1144
        %1148 = vset.pattern.permute.xlu0 0
        %1149 = vperm.xlu0 %1148, %v875
        %v1150 = vpop.permute.xlu0 %1149
        %1153 = vset.pattern.permute.xlu0 0
        %1154 = vperm.xlu0 %1153, %v876
        %v1155 = vpop.permute.xlu0 %1154
        %1158 = vset.pattern.permute.xlu0 0
        %1159 = vperm.xlu0 %1158, %v877
        %v1160 = vpop.permute.xlu0 %1159
        %1163 = vset.pattern.permute.xlu0 0
        %1164 = vperm.xlu0 %1163, %v878
        %v1165 = vpop.permute.xlu0 %1164
        %1168 = vset.pattern.permute.xlu0 0
        %1169 = vperm.xlu0 %1168, %v879
        %v1170 = vpop.permute.xlu0 %1169
        %1173 = vset.pattern.permute.xlu0 0
        %1174 = vperm.xlu0 %1173, %v880
        %v1175 = vpop.permute.xlu0 %1174
        %1178 = vset.pattern.permute.xlu0 0
        %1179 = vperm.xlu0 %1178, %v881
        %v1180 = vpop.permute.xlu0 %1179
        %1183 = vset.pattern.permute.xlu0 0
        %1184 = vperm.xlu0 %1183, %v882
        %v1185 = vpop.permute.xlu0 %1184
        %1188 = vset.pattern.permute.xlu0 0
        %1189 = vperm.xlu0 %1188, %v883
        %v1190 = vpop.permute.xlu0 %1189
        %1193 = vset.pattern.permute.xlu0 0
        %1194 = vperm.xlu0 %1193, %v884
        %v1195 = vpop.permute.xlu0 %1194
        %1198 = vset.pattern.permute.xlu0 0
        %1199 = vperm.xlu0 %1198, %v885
        %v1200 = vpop.permute.xlu0 %1199
        %1203 = vset.pattern.permute.xlu0 0
        %1204 = vperm.xlu0 %1203, %v886
        %v1205 = vpop.permute.xlu0 %1204
        %v1271 = vunpack.c.l.b16 %v759
        %v1272 = vunpack.c.l.b16 %v760
        %v1273 = vunpack.c.l.b16 %v761
        %v1274 = vunpack.c.l.b16 %v762
        %v1275 = vunpack.c.l.b16 %v763
        %v1276 = vunpack.c.l.b16 %v764
        %v1277 = vunpack.c.l.b16 %v765
        %v1278 = vunpack.c.l.b16 %v766
        %v1279 = vunpack.c.l.b16 %v767
        %v1280 = vunpack.c.l.b16 %v768
        %v1281 = vunpack.c.l.b16 %v769
        %v1282 = vunpack.c.l.b16 %v770
        %v1283 = vunpack.c.l.b16 %v771
        %v1284 = vunpack.c.l.b16 %v772
        %v1285 = vunpack.c.l.b16 %v773
        %v1286 = vunpack.c.l.b16 %v774
        %v1287 = vunpack.c.l.b16 %v775
        %v1288 = vunpack.c.l.b16 %v776
        %v1289 = vunpack.c.l.b16 %v777
        %v1290 = vunpack.c.l.b16 %v778
        %v1291 = vunpack.c.l.b16 %v779
        %v1292 = vunpack.c.l.b16 %v780
        %v1293 = vunpack.c.l.b16 %v781
        %v1294 = vunpack.c.l.b16 %v782
        %v1295 = vunpack.c.l.b16 %v783
        %v1296 = vunpack.c.l.b16 %v784
        %v1297 = vunpack.c.l.b16 %v785
        %v1298 = vunpack.c.l.b16 %v786
        %v1299 = vunpack.c.l.b16 %v787
        %v1300 = vunpack.c.l.b16 %v788
        %v1301 = vunpack.c.l.b16 %v789
        %v1302 = vunpack.c.l.b16 %v790
        %v1303 = vunpack.c.l.b16 %v791
        %v1304 = vunpack.c.l.b16 %v792
        %v1305 = vunpack.c.l.b16 %v793
        %v1306 = vunpack.c.l.b16 %v794
        %v1307 = vunpack.c.l.b16 %v795
        %v1308 = vunpack.c.l.b16 %v796
        %v1309 = vunpack.c.l.b16 %v797
        %v1310 = vunpack.c.l.b16 %v798
        %v1311 = vunpack.c.l.b16 %v799
        %v1312 = vunpack.c.l.b16 %v800
        %v1313 = vunpack.c.l.b16 %v801
        %v1314 = vunpack.c.l.b16 %v802
        %v1315 = vunpack.c.l.b16 %v803
        %v1316 = vunpack.c.l.b16 %v804
        %v1317 = vunpack.c.l.b16 %v805
        %v1318 = vunpack.c.l.b16 %v806
        %v1319 = vunpack.c.l.b16 %v807
        %v1320 = vunpack.c.l.b16 %v808
        %v1321 = vunpack.c.l.b16 %v809
        %v1322 = vunpack.c.l.b16 %v810
        %v1323 = vunpack.c.l.b16 %v811
        %v1324 = vunpack.c.l.b16 %v812
        %v1325 = vunpack.c.l.b16 %v813
        %v1326 = vunpack.c.l.b16 %v814
        %v1327 = vunpack.c.l.b16 %v815
        %v1328 = vunpack.c.l.b16 %v816
        %v1329 = vunpack.c.l.b16 %v817
        %v1330 = vunpack.c.l.b16 %v818
        %v1331 = vunpack.c.l.b16 %v819
        %v1332 = vunpack.c.l.b16 %v820
        %v1333 = vunpack.c.l.b16 %v821
        %v1334 = vunpack.c.l.b16 %v822
        %v1335 = vpack.c.b16 %v1272, %v1271
        %v1336 = vpack.c.b16 %v1274, %v1273
        %v1337 = vpack.c.b16 %v1276, %v1275
        %v1338 = vpack.c.b16 %v1278, %v1277
        %v1339 = vpack.c.b16 %v1280, %v1279
        %v1340 = vpack.c.b16 %v1282, %v1281
        %v1341 = vpack.c.b16 %v1284, %v1283
        %v1342 = vpack.c.b16 %v1286, %v1285
        %v1343 = vpack.c.b16 %v1288, %v1287
        %v1344 = vpack.c.b16 %v1290, %v1289
        %v1345 = vpack.c.b16 %v1292, %v1291
        %v1346 = vpack.c.b16 %v1294, %v1293
        %v1347 = vpack.c.b16 %v1296, %v1295
        %v1348 = vpack.c.b16 %v1298, %v1297
        %v1349 = vpack.c.b16 %v1300, %v1299
        %v1350 = vpack.c.b16 %v1302, %v1301
        %v1351 = vpack.c.b16 %v1304, %v1303
        %v1352 = vpack.c.b16 %v1306, %v1305
        %v1353 = vpack.c.b16 %v1308, %v1307
        %v1354 = vpack.c.b16 %v1310, %v1309
        %v1355 = vpack.c.b16 %v1312, %v1311
        %v1356 = vpack.c.b16 %v1314, %v1313
        %v1357 = vpack.c.b16 %v1316, %v1315
        %v1358 = vpack.c.b16 %v1318, %v1317
        %v1359 = vpack.c.b16 %v1320, %v1319
        %v1360 = vpack.c.b16 %v1322, %v1321
        %v1361 = vpack.c.b16 %v1324, %v1323
        %v1362 = vpack.c.b16 %v1326, %v1325
        %v1363 = vpack.c.b16 %v1328, %v1327
        %v1364 = vpack.c.b16 %v1330, %v1329
        %v1365 = vpack.c.b16 %v1332, %v1331
        %v1366 = vpack.c.b16 %v1334, %v1333
        %vm1367 = vcmask 179200
        %v1369 = vsel %vm1367, %v1335, 0
        %v1372 = vsel %vm1367, %v1336, 0
        %v1375 = vsel %vm1367, %v1337, 0
        %v1378 = vsel %vm1367, %v1338, 0
        %v1381 = vsel %vm1367, %v1339, 0
        %v1384 = vsel %vm1367, %v1340, 0
        %v1387 = vsel %vm1367, %v1341, 0
        %v1390 = vsel %vm1367, %v1342, 0
        %v1393 = vsel %vm1367, %v1343, 0
        %v1396 = vsel %vm1367, %v1344, 0
        %v1399 = vsel %vm1367, %v1345, 0
        %v1402 = vsel %vm1367, %v1346, 0
        %v1405 = vsel %vm1367, %v1347, 0
        %v1408 = vsel %vm1367, %v1348, 0
        %v1411 = vsel %vm1367, %v1349, 0
        %v1414 = vsel %vm1367, %v1350, 0
        %v1417 = vsel %vm1367, %v1351, 0
        %v1420 = vsel %vm1367, %v1352, 0
        %v1423 = vsel %vm1367, %v1353, 0
        %v1426 = vsel %vm1367, %v1354, 0
        %v1429 = vsel %vm1367, %v1355, 0
        %v1432 = vsel %vm1367, %v1356, 0
        %v1435 = vsel %vm1367, %v1357, 0
        %v1438 = vsel %vm1367, %v1358, 0
        %v1441 = vsel %vm1367, %v1359, 0
        %v1444 = vsel %vm1367, %v1360, 0
        %v1447 = vsel %vm1367, %v1361, 0
        %v1450 = vsel %vm1367, %v1362, 0
        %v1453 = vsel %vm1367, %v1363, 0
        %v1456 = vsel %vm1367, %v1364, 0
        %v1459 = vsel %vm1367, %v1365, 0
        %v1462 = vsel %vm1367, %v1366, 0
        %vm1464 = vcmask 1042432
        %v1466 = vsel %vm1464, %v757, 0
        %v1469 = vsel %vm1464, %v758, 0
        %1471 = vmatprep.subr.bf16.mxu0 %v756
        %1472 = vmatpush1.bf16.msra.mxu0 %v755
        %1473 = vmatprep.subr.bf16.mxu0 %v1469
        %1474 = vmatpush1.bf16.msra.mxu0 %v1466
        %1475 = vmatprep.subr.bf16.mxu0 0
        %1476 = vmatpush1.bf16.msra.mxu0 0
        %1477 = vmatprep.subr.bf16.mxu0 0
        %1478 = vmatpush1.bf16.msra.mxu0 0
        %1479 = vmatprep.subr.bf16.mxu0 0
        %1480 = vmatpush1.bf16.msra.mxu0 0
        %1481 = vmatprep.subr.bf16.mxu0 0
        %1482 = vmatpush1.bf16.msra.mxu0 0
        %1483 = vmatprep.subr.bf16.mxu0 0
        %1484 = vmatpush1.bf16.msra.mxu0 0
        %1485 = vmatprep.subr.bf16.mxu0 0
        %1486 = vmatpush1.bf16.msra.mxu0 0
        %1487 = vmatprep.subr.bf16.mxu0 0
        %1488 = vmatpush1.bf16.msra.mxu0 0
        %1489 = vmatprep.subr.bf16.mxu0 0
        %1490 = vmatpush1.bf16.msra.mxu0 0
        %1491 = vmatprep.subr.bf16.mxu0 0
        %1492 = vmatpush1.bf16.msra.mxu0 0
        %1493 = vmatprep.subr.bf16.mxu0 0
        %1494 = vmatpush1.bf16.msra.mxu0 0
        %1495 = vmatprep.subr.bf16.mxu0 0
        %1496 = vmatpush1.bf16.msra.mxu0 0
        %1497 = vmatprep.subr.bf16.mxu0 0
        %1498 = vmatpush1.bf16.msra.mxu0 0
        %1499 = vmatprep.subr.bf16.mxu0 0
        %1500 = vmatpush1.bf16.msra.mxu0 0
        %1501 = vmatprep.subr.bf16.mxu0 0
        %1502 = vmatpush1.bf16.msra.mxu0 0
        %1503 = vmatprep.mubr.bf16.mxu0 0
        %1504 = vmatmul.mubr.bf16.gmra.mrb[0].mxu0 %v1369
        %v1505 = vpop.f32.mrb[0].mxu0
        %v1506 = vadd.f32 %v890, %v1505
        %v1507 = vpop.f32.mrb[0].mxu0
        %v1508 = vadd.f32 %v890, %v1507
        %v1509 = vpop.f32.mrb[0].mxu0
        %v1510 = vadd.f32 %v895, %v1509
        %v1511 = vpop.f32.mrb[0].mxu0
        %v1512 = vadd.f32 %v895, %v1511
        %1513 = vmatprep.mubr.bf16.mxu0 0
        %1514 = vmatmul.mubr.bf16.gmra.mrb[0].mxu0 %v1372
        %v1515 = vpop.f32.mrb[0].mxu0
        %v1516 = vadd.f32 %v900, %v1515
        %v1517 = vpop.f32.mrb[0].mxu0
        %v1518 = vadd.f32 %v900, %v1517
        %v1519 = vpop.f32.mrb[0].mxu0
        %v1520 = vadd.f32 %v905, %v1519
        %v1521 = vpop.f32.mrb[0].mxu0
        %v1522 = vadd.f32 %v905, %v1521
        %1523 = vmatprep.mubr.bf16.mxu0 0
        %1524 = vmatmul.mubr.bf16.gmra.mrb[0].mxu0 %v1375
        %v1525 = vpop.f32.mrb[0].mxu0
        %v1526 = vadd.f32 %v910, %v1525
        %v1527 = vpop.f32.mrb[0].mxu0
        %v1528 = vadd.f32 %v910, %v1527
        %v1529 = vpop.f32.mrb[0].mxu0
        %v1530 = vadd.f32 %v915, %v1529
        %v1531 = vpop.f32.mrb[0].mxu0
        %v1532 = vadd.f32 %v915, %v1531
        %1533 = vmatprep.mubr.bf16.mxu0 0
        %1534 = vmatmul.mubr.bf16.gmra.mrb[0].mxu0 %v1378
        %v1535 = vpop.f32.mrb[0].mxu0
        %v1536 = vadd.f32 %v920, %v1535
        %v1537 = vpop.f32.mrb[0].mxu0
        %v1538 = vadd.f32 %v920, %v1537
        %v1539 = vpop.f32.mrb[0].mxu0
        %v1540 = vadd.f32 %v925, %v1539
        %v1541 = vpop.f32.mrb[0].mxu0
        %v1542 = vadd.f32 %v925, %v1541
        %1543 = vmatprep.mubr.bf16.mxu0 0
        %1544 = vmatmul.mubr.bf16.gmra.mrb[0].mxu0 %v1381
        %v1545 = vpop.f32.mrb[0].mxu0
        %v1546 = vadd.f32 %v930, %v1545
        %v1547 = vpop.f32.mrb[0].mxu0
        %v1548 = vadd.f32 %v930, %v1547
        %v1549 = vpop.f32.mrb[0].mxu0
        %v1550 = vadd.f32 %v935, %v1549
        %v1551 = vpop.f32.mrb[0].mxu0
        %v1552 = vadd.f32 %v935, %v1551
        %1553 = vmatprep.mubr.bf16.mxu0 0
        %1554 = vmatmul.mubr.bf16.gmra.mrb[0].mxu0 %v1384
        %v1555 = vpop.f32.mrb[0].mxu0
        %v1556 = vadd.f32 %v940, %v1555
        %v1557 = vpop.f32.mrb[0].mxu0
        %v1558 = vadd.f32 %v940, %v1557
        %v1559 = vpop.f32.mrb[0].mxu0
        %v1560 = vadd.f32 %v945, %v1559
        %v1561 = vpop.f32.mrb[0].mxu0
        %v1562 = vadd.f32 %v945, %v1561
        %1563 = vmatprep.mubr.bf16.mxu0 0
        %1564 = vmatmul.mubr.bf16.gmra.mrb[0].mxu0 %v1387
        %v1565 = vpop.f32.mrb[0].mxu0
        %v1566 = vadd.f32 %v950, %v1565
        %v1567 = vpop.f32.mrb[0].mxu0
        %v1568 = vadd.f32 %v950, %v1567
        %v1569 = vpop.f32.mrb[0].mxu0
        %v1570 = vadd.f32 %v955, %v1569
        %v1571 = vpop.f32.mrb[0].mxu0
        %v1572 = vadd.f32 %v955, %v1571
        %1573 = vmatprep.mubr.bf16.mxu0 0
        %1574 = vmatmul.mubr.bf16.gmra.mrb[0].mxu0 %v1390
        %v1575 = vpop.f32.mrb[0].mxu0
        %v1576 = vadd.f32 %v960, %v1575
        %v1577 = vpop.f32.mrb[0].mxu0
        %v1578 = vadd.f32 %v960, %v1577
        %v1579 = vpop.f32.mrb[0].mxu0
        %v1580 = vadd.f32 %v965, %v1579
        %v1581 = vpop.f32.mrb[0].mxu0
        %v1582 = vadd.f32 %v965, %v1581
        %1583 = vmatprep.mubr.bf16.mxu0 0
        %1584 = vmatmul.mubr.bf16.gmra.mrb[0].mxu0 %v1393
        %v1585 = vpop.f32.mrb[0].mxu0
        %v1586 = vadd.f32 %v970, %v1585
        %v1587 = vpop.f32.mrb[0].mxu0
        %v1588 = vadd.f32 %v970, %v1587
        %v1589 = vpop.f32.mrb[0].mxu0
        %v1590 = vadd.f32 %v975, %v1589
        %v1591 = vpop.f32.mrb[0].mxu0
        %v1592 = vadd.f32 %v975, %v1591
        %1593 = vmatprep.mubr.bf16.mxu0 0
        %1594 = vmatmul.mubr.bf16.gmra.mrb[0].mxu0 %v1396
        %v1595 = vpop.f32.mrb[0].mxu0
        %v1596 = vadd.f32 %v980, %v1595
        %v1597 = vpop.f32.mrb[0].mxu0
        %v1598 = vadd.f32 %v980, %v1597
        %v1599 = vpop.f32.mrb[0].mxu0
        %v1600 = vadd.f32 %v985, %v1599
        %v1601 = vpop.f32.mrb[0].mxu0
        %v1602 = vadd.f32 %v985, %v1601
        %1603 = vmatprep.mubr.bf16.mxu0 0
        %1604 = vmatmul.mubr.bf16.gmra.mrb[0].mxu0 %v1399
        %v1605 = vpop.f32.mrb[0].mxu0
        %v1606 = vadd.f32 %v990, %v1605
        %v1607 = vpop.f32.mrb[0].mxu0
        %v1608 = vadd.f32 %v990, %v1607
        %v1609 = vpop.f32.mrb[0].mxu0
        %v1610 = vadd.f32 %v995, %v1609
        %v1611 = vpop.f32.mrb[0].mxu0
        %v1612 = vadd.f32 %v995, %v1611
        %1613 = vmatprep.mubr.bf16.mxu0 0
        %1614 = vmatmul.mubr.bf16.gmra.mrb[0].mxu0 %v1402
        %v1615 = vpop.f32.mrb[0].mxu0
        %v1616 = vadd.f32 %v1000, %v1615
        %v1617 = vpop.f32.mrb[0].mxu0
        %v1618 = vadd.f32 %v1000, %v1617
        %v1619 = vpop.f32.mrb[0].mxu0
        %v1620 = vadd.f32 %v1005, %v1619
        %v1621 = vpop.f32.mrb[0].mxu0
        %v1622 = vadd.f32 %v1005, %v1621
        %1623 = vmatprep.mubr.bf16.mxu0 0
        %1624 = vmatmul.mubr.bf16.gmra.mrb[0].mxu0 %v1405
        %v1625 = vpop.f32.mrb[0].mxu0
        %v1626 = vadd.f32 %v1010, %v1625
        %v1627 = vpop.f32.mrb[0].mxu0
        %v1628 = vadd.f32 %v1010, %v1627
        %v1629 = vpop.f32.mrb[0].mxu0
        %v1630 = vadd.f32 %v1015, %v1629
        %v1631 = vpop.f32.mrb[0].mxu0
        %v1632 = vadd.f32 %v1015, %v1631
        %1633 = vmatprep.mubr.bf16.mxu0 0
        %1634 = vmatmul.mubr.bf16.gmra.mrb[0].mxu0 %v1408
        %v1635 = vpop.f32.mrb[0].mxu0
        %v1636 = vadd.f32 %v1020, %v1635
        %v1637 = vpop.f32.mrb[0].mxu0
        %v1638 = vadd.f32 %v1020, %v1637
        %v1639 = vpop.f32.mrb[0].mxu0
        %v1640 = vadd.f32 %v1025, %v1639
        %v1641 = vpop.f32.mrb[0].mxu0
        %v1642 = vadd.f32 %v1025, %v1641
        %1643 = vmatprep.mubr.bf16.mxu0 0
        %1644 = vmatmul.mubr.bf16.gmra.mrb[0].mxu0 %v1411
        %v1645 = vpop.f32.mrb[0].mxu0
        %v1646 = vadd.f32 %v1030, %v1645
        %v1647 = vpop.f32.mrb[0].mxu0
        %v1648 = vadd.f32 %v1030, %v1647
        %v1649 = vpop.f32.mrb[0].mxu0
        %v1650 = vadd.f32 %v1035, %v1649
        %v1651 = vpop.f32.mrb[0].mxu0
        %v1652 = vadd.f32 %v1035, %v1651
        %1653 = vmatprep.mubr.bf16.mxu0 0
        %1654 = vmatmul.mubr.bf16.gmra.mrb[0].mxu0 %v1414
        %v1655 = vpop.f32.mrb[0].mxu0
        %v1656 = vadd.f32 %v1040, %v1655
        %v1657 = vpop.f32.mrb[0].mxu0
        %v1658 = vadd.f32 %v1040, %v1657
        %v1659 = vpop.f32.mrb[0].mxu0
        %v1660 = vadd.f32 %v1045, %v1659
        %v1661 = vpop.f32.mrb[0].mxu0
        %v1662 = vadd.f32 %v1045, %v1661
        %1663 = vmatprep.mubr.bf16.mxu0 0
        %1664 = vmatmul.mubr.bf16.gmra.mrb[0].mxu0 %v1417
        %v1665 = vpop.f32.mrb[0].mxu0
        %v1666 = vadd.f32 %v1050, %v1665
        %v1667 = vpop.f32.mrb[0].mxu0
        %v1668 = vadd.f32 %v1050, %v1667
        %v1669 = vpop.f32.mrb[0].mxu0
        %v1670 = vadd.f32 %v1055, %v1669
        %v1671 = vpop.f32.mrb[0].mxu0
        %v1672 = vadd.f32 %v1055, %v1671
        %1673 = vmatprep.mubr.bf16.mxu0 0
        %1674 = vmatmul.mubr.bf16.gmra.mrb[0].mxu0 %v1420
        %v1675 = vpop.f32.mrb[0].mxu0
        %v1676 = vadd.f32 %v1060, %v1675
        %v1677 = vpop.f32.mrb[0].mxu0
        %v1678 = vadd.f32 %v1060, %v1677
        %v1679 = vpop.f32.mrb[0].mxu0
        %v1680 = vadd.f32 %v1065, %v1679
        %v1681 = vpop.f32.mrb[0].mxu0
        %v1682 = vadd.f32 %v1065, %v1681
        %1683 = vmatprep.mubr.bf16.mxu0 0
        %1684 = vmatmul.mubr.bf16.gmra.mrb[0].mxu0 %v1423
        %v1685 = vpop.f32.mrb[0].mxu0
        %v1686 = vadd.f32 %v1070, %v1685
        %v1687 = vpop.f32.mrb[0].mxu0
        %v1688 = vadd.f32 %v1070, %v1687
        %v1689 = vpop.f32.mrb[0].mxu0
        %v1690 = vadd.f32 %v1075, %v1689
        %v1691 = vpop.f32.mrb[0].mxu0
        %v1692 = vadd.f32 %v1075, %v1691
        %1693 = vmatprep.mubr.bf16.mxu0 0
        %1694 = vmatmul.mubr.bf16.gmra.mrb[0].mxu0 %v1426
        %v1695 = vpop.f32.mrb[0].mxu0
        %v1696 = vadd.f32 %v1080, %v1695
        %v1697 = vpop.f32.mrb[0].mxu0
        %v1698 = vadd.f32 %v1080, %v1697
        %v1699 = vpop.f32.mrb[0].mxu0
        %v1700 = vadd.f32 %v1085, %v1699
        %v1701 = vpop.f32.mrb[0].mxu0
        %v1702 = vadd.f32 %v1085, %v1701
        %1703 = vmatprep.mubr.bf16.mxu0 0
        %1704 = vmatmul.mubr.bf16.gmra.mrb[0].mxu0 %v1429
        %v1705 = vpop.f32.mrb[0].mxu0
        %v1706 = vadd.f32 %v1090, %v1705
        %v1707 = vpop.f32.mrb[0].mxu0
        %v1708 = vadd.f32 %v1090, %v1707
        %v1709 = vpop.f32.mrb[0].mxu0
        %v1710 = vadd.f32 %v1095, %v1709
        %v1711 = vpop.f32.mrb[0].mxu0
        %v1712 = vadd.f32 %v1095, %v1711
        %1713 = vmatprep.mubr.bf16.mxu0 0
        %1714 = vmatmul.mubr.bf16.gmra.mrb[0].mxu0 %v1432
        %v1715 = vpop.f32.mrb[0].mxu0
        %v1716 = vadd.f32 %v1100, %v1715
        %v1717 = vpop.f32.mrb[0].mxu0
        %v1718 = vadd.f32 %v1100, %v1717
        %v1719 = vpop.f32.mrb[0].mxu0
        %v1720 = vadd.f32 %v1105, %v1719
        %v1721 = vpop.f32.mrb[0].mxu0
        %v1722 = vadd.f32 %v1105, %v1721
        %1723 = vmatprep.mubr.bf16.mxu0 0
        %1724 = vmatmul.mubr.bf16.gmra.mrb[0].mxu0 %v1435
        %v1725 = vpop.f32.mrb[0].mxu0
        %v1726 = vadd.f32 %v1110, %v1725
        %v1727 = vpop.f32.mrb[0].mxu0
        %v1728 = vadd.f32 %v1110, %v1727
        %v1729 = vpop.f32.mrb[0].mxu0
        %v1730 = vadd.f32 %v1115, %v1729
        %v1731 = vpop.f32.mrb[0].mxu0
        %v1732 = vadd.f32 %v1115, %v1731
        %1733 = vmatprep.mubr.bf16.mxu0 0
        %1734 = vmatmul.mubr.bf16.gmra.mrb[0].mxu0 %v1438
        %v1735 = vpop.f32.mrb[0].mxu0
        %v1736 = vadd.f32 %v1120, %v1735
        %v1737 = vpop.f32.mrb[0].mxu0
        %v1738 = vadd.f32 %v1120, %v1737
        %v1739 = vpop.f32.mrb[0].mxu0
        %v1740 = vadd.f32 %v1125, %v1739
        %v1741 = vpop.f32.mrb[0].mxu0
        %v1742 = vadd.f32 %v1125, %v1741
        %1743 = vmatprep.mubr.bf16.mxu0 0
        %1744 = vmatmul.mubr.bf16.gmra.mrb[0].mxu0 %v1441
        %v1745 = vpop.f32.mrb[0].mxu0
        %v1746 = vadd.f32 %v1130, %v1745
        %v1747 = vpop.f32.mrb[0].mxu0
        %v1748 = vadd.f32 %v1130, %v1747
        %v1749 = vpop.f32.mrb[0].mxu0
        %v1750 = vadd.f32 %v1135, %v1749
        %v1751 = vpop.f32.mrb[0].mxu0
        %v1752 = vadd.f32 %v1135, %v1751
        %1753 = vmatprep.mubr.bf16.mxu0 0
        %1754 = vmatmul.mubr.bf16.gmra.mrb[0].mxu0 %v1444
        %v1755 = vpop.f32.mrb[0].mxu0
        %v1756 = vadd.f32 %v1140, %v1755
        %v1757 = vpop.f32.mrb[0].mxu0
        %v1758 = vadd.f32 %v1140, %v1757
        %v1759 = vpop.f32.mrb[0].mxu0
        %v1760 = vadd.f32 %v1145, %v1759
        %v1761 = vpop.f32.mrb[0].mxu0
        %v1762 = vadd.f32 %v1145, %v1761
        %1763 = vmatprep.mubr.bf16.mxu0 0
        %1764 = vmatmul.mubr.bf16.gmra.mrb[0].mxu0 %v1447
        %v1765 = vpop.f32.mrb[0].mxu0
        %v1766 = vadd.f32 %v1150, %v1765
        %v1767 = vpop.f32.mrb[0].mxu0
        %v1768 = vadd.f32 %v1150, %v1767
        %v1769 = vpop.f32.mrb[0].mxu0
        %v1770 = vadd.f32 %v1155, %v1769
        %v1771 = vpop.f32.mrb[0].mxu0
        %v1772 = vadd.f32 %v1155, %v1771
        %1773 = vmatprep.mubr.bf16.mxu0 0
        %1774 = vmatmul.mubr.bf16.gmra.mrb[0].mxu0 %v1450
        %v1775 = vpop.f32.mrb[0].mxu0
        %v1776 = vadd.f32 %v1160, %v1775
        %v1777 = vpop.f32.mrb[0].mxu0
        %v1778 = vadd.f32 %v1160, %v1777
        %v1779 = vpop.f32.mrb[0].mxu0
        %v1780 = vadd.f32 %v1165, %v1779
        %v1781 = vpop.f32.mrb[0].mxu0
        %v1782 = vadd.f32 %v1165, %v1781
        %1783 = vmatprep.mubr.bf16.mxu0 0
        %1784 = vmatmul.mubr.bf16.gmra.mrb[0].mxu0 %v1453
        %v1785 = vpop.f32.mrb[0].mxu0
        %v1786 = vadd.f32 %v1170, %v1785
        %v1787 = vpop.f32.mrb[0].mxu0
        %v1788 = vadd.f32 %v1170, %v1787
        %v1789 = vpop.f32.mrb[0].mxu0
        %v1790 = vadd.f32 %v1175, %v1789
        %v1791 = vpop.f32.mrb[0].mxu0
        %v1792 = vadd.f32 %v1175, %v1791
        %1793 = vmatprep.mubr.bf16.mxu0 0
        %1794 = vmatmul.mubr.bf16.gmra.mrb[0].mxu0 %v1456
        %v1795 = vpop.f32.mrb[0].mxu0
        %v1796 = vadd.f32 %v1180, %v1795
        %v1797 = vpop.f32.mrb[0].mxu0
        %v1798 = vadd.f32 %v1180, %v1797
        %v1799 = vpop.f32.mrb[0].mxu0
        %v1800 = vadd.f32 %v1185, %v1799
        %v1801 = vpop.f32.mrb[0].mxu0
        %v1802 = vadd.f32 %v1185, %v1801
        %1803 = vmatprep.mubr.bf16.mxu0 0
        %1804 = vmatmul.mubr.bf16.gmra.mrb[0].mxu0 %v1459
        %v1805 = vpop.f32.mrb[0].mxu0
        %v1806 = vadd.f32 %v1190, %v1805
        %v1807 = vpop.f32.mrb[0].mxu0
        %v1808 = vadd.f32 %v1190, %v1807
        %v1809 = vpop.f32.mrb[0].mxu0
        %v1810 = vadd.f32 %v1195, %v1809
        %v1811 = vpop.f32.mrb[0].mxu0
        %v1812 = vadd.f32 %v1195, %v1811
        %1813 = vmatprep.mubr.bf16.mxu0 0
        %1814 = vmatmul.mubr.bf16.gmra.mrb[0].mxu0 %v1462
        %v1815 = vpop.f32.mrb[0].mxu0
        %v1816 = vadd.f32 %v1200, %v1815
        %v1817 = vpop.f32.mrb[0].mxu0
        %v1818 = vadd.f32 %v1200, %v1817
        %v1819 = vpop.f32.mrb[0].mxu0
        %v1820 = vadd.f32 %v1205, %v1819
        %v1821 = vpop.f32.mrb[0].mxu0
        %v1822 = vadd.f32 %v1205, %v1821
        %1823 = vdwg.mxu0
        %v1824 = vmax.f32 %v1506, 0.0
        %v1825 = vmax.f32 %v1508, 0.0
        %v1826 = vmax.f32 %v1510, 0.0
        %v1827 = vmax.f32 %v1512, 0.0
        %v1828 = vmax.f32 %v1516, 0.0
        %v1829 = vmax.f32 %v1518, 0.0
        %v1830 = vmax.f32 %v1520, 0.0
        %v1831 = vmax.f32 %v1522, 0.0
        %v1832 = vmax.f32 %v1526, 0.0
        %v1833 = vmax.f32 %v1528, 0.0
        %v1834 = vmax.f32 %v1530, 0.0
        %v1835 = vmax.f32 %v1532, 0.0
        %v1836 = vmax.f32 %v1536, 0.0
        %v1837 = vmax.f32 %v1538, 0.0
        %v1838 = vmax.f32 %v1540, 0.0
        %v1839 = vmax.f32 %v1542, 0.0
        %v1840 = vmax.f32 %v1546, 0.0
        %v1841 = vmax.f32 %v1548, 0.0
        %v1842 = vmax.f32 %v1550, 0.0
        %v1843 = vmax.f32 %v1552, 0.0
        %v1844 = vmax.f32 %v1556, 0.0
        %v1845 = vmax.f32 %v1558, 0.0
        %v1846 = vmax.f32 %v1560, 0.0
        %v1847 = vmax.f32 %v1562, 0.0
        %v1848 = vmax.f32 %v1566, 0.0
        %v1849 = vmax.f32 %v1568, 0.0
        %v1850 = vmax.f32 %v1570, 0.0
        %v1851 = vmax.f32 %v1572, 0.0
        %v1852 = vmax.f32 %v1576, 0.0
        %v1853 = vmax.f32 %v1578, 0.0
        %v1854 = vmax.f32 %v1580, 0.0
        %v1855 = vmax.f32 %v1582, 0.0
        %v1856 = vmax.f32 %v1586, 0.0
        %v1857 = vmax.f32 %v1588, 0.0
        %v1858 = vmax.f32 %v1590, 0.0
        %v1859 = vmax.f32 %v1592, 0.0
        %v1860 = vmax.f32 %v1596, 0.0
        %v1861 = vmax.f32 %v1598, 0.0
        %v1862 = vmax.f32 %v1600, 0.0
        %v1863 = vmax.f32 %v1602, 0.0
        %v1864 = vmax.f32 %v1606, 0.0
        %v1865 = vmax.f32 %v1608, 0.0
        %v1866 = vmax.f32 %v1610, 0.0
        %v1867 = vmax.f32 %v1612, 0.0
        %v1868 = vmax.f32 %v1616, 0.0
        %v1869 = vmax.f32 %v1618, 0.0
        %v1870 = vmax.f32 %v1620, 0.0
        %v1871 = vmax.f32 %v1622, 0.0
        %v1872 = vmax.f32 %v1626, 0.0
        %v1873 = vmax.f32 %v1628, 0.0
        %v1874 = vmax.f32 %v1630, 0.0
        %v1875 = vmax.f32 %v1632, 0.0
        %v1876 = vmax.f32 %v1636, 0.0
        %v1877 = vmax.f32 %v1638, 0.0
        %v1878 = vmax.f32 %v1640, 0.0
        %v1879 = vmax.f32 %v1642, 0.0
        %v1880 = vmax.f32 %v1646, 0.0
        %v1881 = vmax.f32 %v1648, 0.0
        %v1882 = vmax.f32 %v1650, 0.0
        %v1883 = vmax.f32 %v1652, 0.0
        %v1884 = vmax.f32 %v1656, 0.0
        %v1885 = vmax.f32 %v1658, 0.0
        %v1886 = vmax.f32 %v1660, 0.0
        %v1887 = vmax.f32 %v1662, 0.0
        %v1888 = vmax.f32 %v1666, 0.0
        %v1889 = vmax.f32 %v1668, 0.0
        %v1890 = vmax.f32 %v1670, 0.0
        %v1891 = vmax.f32 %v1672, 0.0
        %v1892 = vmax.f32 %v1676, 0.0
        %v1893 = vmax.f32 %v1678, 0.0
        %v1894 = vmax.f32 %v1680, 0.0
        %v1895 = vmax.f32 %v1682, 0.0
        %v1896 = vmax.f32 %v1686, 0.0
        %v1897 = vmax.f32 %v1688, 0.0
        %v1898 = vmax.f32 %v1690, 0.0
        %v1899 = vmax.f32 %v1692, 0.0
        %v1900 = vmax.f32 %v1696, 0.0
        %v1901 = vmax.f32 %v1698, 0.0
        %v1902 = vmax.f32 %v1700, 0.0
        %v1903 = vmax.f32 %v1702, 0.0
        %v1904 = vmax.f32 %v1706, 0.0
        %v1905 = vmax.f32 %v1708, 0.0
        %v1906 = vmax.f32 %v1710, 0.0
        %v1907 = vmax.f32 %v1712, 0.0
        %v1908 = vmax.f32 %v1716, 0.0
        %v1909 = vmax.f32 %v1718, 0.0
        %v1910 = vmax.f32 %v1720, 0.0
        %v1911 = vmax.f32 %v1722, 0.0
        %v1912 = vmax.f32 %v1726, 0.0
        %v1913 = vmax.f32 %v1728, 0.0
        %v1914 = vmax.f32 %v1730, 0.0
        %v1915 = vmax.f32 %v1732, 0.0
        %v1916 = vmax.f32 %v1736, 0.0
        %v1917 = vmax.f32 %v1738, 0.0
        %v1918 = vmax.f32 %v1740, 0.0
        %v1919 = vmax.f32 %v1742, 0.0
        %v1920 = vmax.f32 %v1746, 0.0
        %v1921 = vmax.f32 %v1748, 0.0
        %v1922 = vmax.f32 %v1750, 0.0
        %v1923 = vmax.f32 %v1752, 0.0
        %v1924 = vmax.f32 %v1756, 0.0
        %v1925 = vmax.f32 %v1758, 0.0
        %v1926 = vmax.f32 %v1760, 0.0
        %v1927 = vmax.f32 %v1762, 0.0
        %v1928 = vmax.f32 %v1766, 0.0
        %v1929 = vmax.f32 %v1768, 0.0
        %v1930 = vmax.f32 %v1770, 0.0
        %v1931 = vmax.f32 %v1772, 0.0
        %v1932 = vmax.f32 %v1776, 0.0
        %v1933 = vmax.f32 %v1778, 0.0
        %v1934 = vmax.f32 %v1780, 0.0
        %v1935 = vmax.f32 %v1782, 0.0
        %v1936 = vmax.f32 %v1786, 0.0
        %v1937 = vmax.f32 %v1788, 0.0
        %v1938 = vmax.f32 %v1790, 0.0
        %v1939 = vmax.f32 %v1792, 0.0
        %v1940 = vmax.f32 %v1796, 0.0
        %v1941 = vmax.f32 %v1798, 0.0
        %v1942 = vmax.f32 %v1800, 0.0
        %v1943 = vmax.f32 %v1802, 0.0
        %v1944 = vmax.f32 %v1806, 0.0
        %v1945 = vmax.f32 %v1808, 0.0
        %v1946 = vmax.f32 %v1810, 0.0
        %v1947 = vmax.f32 %v1812, 0.0
        %v1948 = vmax.f32 %v1816, 0.0
        %v1949 = vmax.f32 %v1818, 0.0
        %v1950 = vmax.f32 %v1820, 0.0
        %v1951 = vmax.f32 %v1822, 0.0
        %v1952 = vld [vmem:[%s3] sm:$0xff]
        %v1953 = vld [vmem:[%s3 + $0x8] sm:$0xff]
        %v1954 = vld [vmem:[%s3 + $0x10] sm:$0xff]
        %v1955 = vld [vmem:[%s3 + $0x18] sm:$0xff]
        %v1956 = vld [vmem:[%s3 + $0x20] sm:$0xff]
        %v1957 = vld [vmem:[%s3 + $0x28] sm:$0xff]
        %v1958 = vld [vmem:[%s3 + $0x30] sm:$0xff]
        %v1959 = vld [vmem:[%s3 + $0x38] sm:$0xff]
        %v1960 = vld [vmem:[%s3 + $0x40] sm:$0xff]
        %v1961 = vld [vmem:[%s3 + $0x48] sm:$0xff]
        %v1962 = vld [vmem:[%s3 + $0x50] sm:$0xff]
        %v1963 = vld [vmem:[%s3 + $0x58] sm:$0xff]
        %v1964 = vld [vmem:[%s3 + $0x60] sm:$0xff]
        %v1965 = vld [vmem:[%s3 + $0x68] sm:$0xff]
        %v1966 = vld [vmem:[%s3 + $0x70] sm:$0xff]
        %v1967 = vld [vmem:[%s3 + $0x78] sm:$0xff]
        %v1968 = vld [vmem:[%s3 + $0x80] sm:$0xff]
        %v1969 = vld [vmem:[%s3 + $0x88] sm:$0xff]
        %v1970 = vld [vmem:[%s3 + $0x90] sm:$0xff]
        %v1971 = vld [vmem:[%s3 + $0x98] sm:$0xff]
        %v1972 = vld [vmem:[%s3 + $0xa0] sm:$0xff]
        %v1973 = vld [vmem:[%s3 + $0xa8] sm:$0xff]
        %v1974 = vld [vmem:[%s3 + $0xb0] sm:$0xff]
        %v1975 = vld [vmem:[%s3 + $0xb8] sm:$0xff]
        %v1976 = vld [vmem:[%s3 + $0xc0] sm:$0xff]
        %v1977 = vld [vmem:[%s3 + $0xc8] sm:$0xff]
        %v1978 = vld [vmem:[%s3 + $0xd0] sm:$0xff]
        %v1979 = vld [vmem:[%s3 + $0xd8] sm:$0xff]
        %v1980 = vld [vmem:[%s3 + $0xe0] sm:$0xff]
        %v1981 = vld [vmem:[%s3 + $0xe8] sm:$0xff]
        %v1982 = vld [vmem:[%s3 + $0xf0] sm:$0xff]
        %v1983 = vld [vmem:[%s3 + $0xf8] sm:$0xff]
        %v1984 = vld [vmem:[%s3 + $0x100] sm:$0xff]
        %v1985 = vld [vmem:[%s3 + $0x108] sm:$0xff]
        %v1986 = vld [vmem:[%s3 + $0x110] sm:$0xff]
        %v1987 = vld [vmem:[%s3 + $0x118] sm:$0xff]
        %v1988 = vld [vmem:[%s3 + $0x120] sm:$0xff]
        %v1989 = vld [vmem:[%s3 + $0x128] sm:$0xff]
        %v1990 = vld [vmem:[%s3 + $0x130] sm:$0xff]
        %v1991 = vld [vmem:[%s3 + $0x138] sm:$0xff]
        %v1992 = vld [vmem:[%s3 + $0x140] sm:$0xff]
        %v1993 = vld [vmem:[%s3 + $0x148] sm:$0xff]
        %v1994 = vld [vmem:[%s3 + $0x150] sm:$0xff]
        %v1995 = vld [vmem:[%s3 + $0x158] sm:$0xff]
        %v1996 = vld [vmem:[%s3 + $0x160] sm:$0xff]
        %v1997 = vld [vmem:[%s3 + $0x168] sm:$0xff]
        %v1998 = vld [vmem:[%s3 + $0x170] sm:$0xff]
        %v1999 = vld [vmem:[%s3 + $0x178] sm:$0xff]
        %v2000 = vld [vmem:[%s3 + $0x180] sm:$0xff]
        %v2001 = vld [vmem:[%s3 + $0x188] sm:$0xff]
        %v2002 = vld [vmem:[%s3 + $0x190] sm:$0xff]
        %v2003 = vld [vmem:[%s3 + $0x198] sm:$0xff]
        %v2004 = vld [vmem:[%s3 + $0x1a0] sm:$0xff]
        %v2005 = vld [vmem:[%s3 + $0x1a8] sm:$0xff]
        %v2006 = vld [vmem:[%s3 + $0x1b0] sm:$0xff]
        %v2007 = vld [vmem:[%s3 + $0x1b8] sm:$0xff]
        %v2008 = vld [vmem:[%s3 + $0x1c0] sm:$0xff]
        %v2009 = vld [vmem:[%s3 + $0x1c8] sm:$0xff]
        %v2010 = vld [vmem:[%s3 + $0x1d0] sm:$0xff]
        %v2011 = vld [vmem:[%s3 + $0x1d8] sm:$0xff]
        %v2012 = vld [vmem:[%s3 + $0x1e0] sm:$0xff]
        %v2013 = vld [vmem:[%s3 + $0x1e8] sm:$0xff]
        %v2014 = vld [vmem:[%s3 + $0x1f0] sm:$0xff]
        %v2015 = vld [vmem:[%s3 + $0x1f8] sm:$0xff]
        %v2016 = vld [vmem:[%s3 + $0x200] sm:$0xff]
        %v2017 = vld [vmem:[%s3 + $0x208] sm:$0xff]
        %v2018 = vld [vmem:[%s3 + $0x210] sm:$0xff]
        %v2019 = vld [vmem:[%s3 + $0x218] sm:$0xff]
        %v2020 = vld [vmem:[%s3 + $0x220] sm:$0xff]
        %v2021 = vld [vmem:[%s3 + $0x228] sm:$0xff]
        %v2022 = vld [vmem:[%s3 + $0x230] sm:$0xff]
        %v2023 = vld [vmem:[%s3 + $0x238] sm:$0xff]
        %v2024 = vld [vmem:[%s3 + $0x240] sm:$0xff]
        %v2025 = vld [vmem:[%s3 + $0x248] sm:$0xff]
        %v2026 = vld [vmem:[%s3 + $0x250] sm:$0xff]
        %v2027 = vld [vmem:[%s3 + $0x258] sm:$0xff]
        %v2028 = vld [vmem:[%s3 + $0x260] sm:$0xff]
        %v2029 = vld [vmem:[%s3 + $0x268] sm:$0xff]
        %v2030 = vld [vmem:[%s3 + $0x270] sm:$0xff]
        %v2031 = vld [vmem:[%s3 + $0x278] sm:$0xff]
        %v2032 = vld [vmem:[%s3 + $0x280] sm:$0xff]
        %v2033 = vld [vmem:[%s3 + $0x288] sm:$0xff]
        %v2034 = vld [vmem:[%s3 + $0x290] sm:$0xff]
        %v2035 = vld [vmem:[%s3 + $0x298] sm:$0xff]
        %v2036 = vld [vmem:[%s3 + $0x2a0] sm:$0xff]
        %v2037 = vld [vmem:[%s3 + $0x2a8] sm:$0xff]
        %v2038 = vld [vmem:[%s3 + $0x2b0] sm:$0xff]
        %v2039 = vld [vmem:[%s3 + $0x2b8] sm:$0xff]
        %v2040 = vld [vmem:[%s3 + $0x2c0] sm:$0xff]
        %v2041 = vld [vmem:[%s3 + $0x2c8] sm:$0xff]
        %v2042 = vld [vmem:[%s3 + $0x2d0] sm:$0xff]
        %v2043 = vld [vmem:[%s3 + $0x2d8] sm:$0xff]
        %v2044 = vld [vmem:[%s3 + $0x2e0] sm:$0xff]
        %v2045 = vld [vmem:[%s3 + $0x2e8] sm:$0xff]
        %v2046 = vld [vmem:[%s3 + $0x2f0] sm:$0xff]
        %v2047 = vld [vmem:[%s3 + $0x2f8] sm:$0xff]
        %v2048 = vld [vmem:[%s3 + $0x300] sm:$0xff]
        %v2049 = vld [vmem:[%s3 + $0x308] sm:$0xff]
        %v2050 = vld [vmem:[%s3 + $0x310] sm:$0xff]
        %v2051 = vld [vmem:[%s3 + $0x318] sm:$0xff]
        %v2052 = vld [vmem:[%s3 + $0x320] sm:$0xff]
        %v2053 = vld [vmem:[%s3 + $0x328] sm:$0xff]
        %v2054 = vld [vmem:[%s3 + $0x330] sm:$0xff]
        %v2055 = vld [vmem:[%s3 + $0x338] sm:$0xff]
        %v2056 = vld [vmem:[%s3 + $0x340] sm:$0xff]
        %v2057 = vld [vmem:[%s3 + $0x348] sm:$0xff]
        %v2058 = vld [vmem:[%s3 + $0x350] sm:$0xff]
        %v2059 = vld [vmem:[%s3 + $0x358] sm:$0xff]
        %v2060 = vld [vmem:[%s3 + $0x360] sm:$0xff]
        %v2061 = vld [vmem:[%s3 + $0x368] sm:$0xff]
        %v2062 = vld [vmem:[%s3 + $0x370] sm:$0xff]
        %v2063 = vld [vmem:[%s3 + $0x378] sm:$0xff]
        %v2064 = vld [vmem:[%s3 + $0x380] sm:$0xff]
        %v2065 = vld [vmem:[%s3 + $0x388] sm:$0xff]
        %v2066 = vld [vmem:[%s3 + $0x390] sm:$0xff]
        %v2067 = vld [vmem:[%s3 + $0x398] sm:$0xff]
        %v2068 = vld [vmem:[%s3 + $0x3a0] sm:$0xff]
        %v2069 = vld [vmem:[%s3 + $0x3a8] sm:$0xff]
        %v2070 = vld [vmem:[%s3 + $0x3b0] sm:$0xff]
        %v2071 = vld [vmem:[%s3 + $0x3b8] sm:$0xff]
        %v2072 = vld [vmem:[%s3 + $0x3c0] sm:$0xff]
        %v2073 = vld [vmem:[%s3 + $0x3c8] sm:$0xff]
        %v2074 = vld [vmem:[%s3 + $0x3d0] sm:$0xff]
        %v2075 = vld [vmem:[%s3 + $0x3d8] sm:$0xff]
        %v2076 = vld [vmem:[%s3 + $0x3e0] sm:$0xff]
        %v2077 = vld [vmem:[%s3 + $0x3e8] sm:$0xff]
        %v2078 = vld [vmem:[%s3 + $0x3f0] sm:$0xff]
        %v2079 = vld [vmem:[%s3 + $0x3f8] sm:$0xff]
        %v2080 = vpack.c.bf16 %v1826, %v1824
        %v2081 = vpack.c.bf16 %v1827, %v1825
        %v2082 = vpack.c.bf16 %v1830, %v1828
        %v2083 = vpack.c.bf16 %v1831, %v1829
        %v2084 = vpack.c.bf16 %v1834, %v1832
        %v2085 = vpack.c.bf16 %v1835, %v1833
        %v2086 = vpack.c.bf16 %v1838, %v1836
        %v2087 = vpack.c.bf16 %v1839, %v1837
        %v2088 = vpack.c.bf16 %v1842, %v1840
        %v2089 = vpack.c.bf16 %v1843, %v1841
        %v2090 = vpack.c.bf16 %v1846, %v1844
        %v2091 = vpack.c.bf16 %v1847, %v1845
        %v2092 = vpack.c.bf16 %v1850, %v1848
        %v2093 = vpack.c.bf16 %v1851, %v1849
        %v2094 = vpack.c.bf16 %v1854, %v1852
        %v2095 = vpack.c.bf16 %v1855, %v1853
        %v2096 = vpack.c.bf16 %v1858, %v1856
        %v2097 = vpack.c.bf16 %v1859, %v1857
        %v2098 = vpack.c.bf16 %v1862, %v1860
        %v2099 = vpack.c.bf16 %v1863, %v1861
        %v2100 = vpack.c.bf16 %v1866, %v1864
        %v2101 = vpack.c.bf16 %v1867, %v1865
        %v2102 = vpack.c.bf16 %v1870, %v1868
        %v2103 = vpack.c.bf16 %v1871, %v1869
        %v2104 = vpack.c.bf16 %v1874, %v1872
        %v2105 = vpack.c.bf16 %v1875, %v1873
        %v2106 = vpack.c.bf16 %v1878, %v1876
        %v2107 = vpack.c.bf16 %v1879, %v1877
        %v2108 = vpack.c.bf16 %v1882, %v1880
        %v2109 = vpack.c.bf16 %v1883, %v1881
        %v2110 = vpack.c.bf16 %v1886, %v1884
        %v2111 = vpack.c.bf16 %v1887, %v1885
        %v2112 = vpack.c.bf16 %v1890, %v1888
        %v2113 = vpack.c.bf16 %v1891, %v1889
        %v2114 = vpack.c.bf16 %v1894, %v1892
        %v2115 = vpack.c.bf16 %v1895, %v1893
        %v2116 = vpack.c.bf16 %v1898, %v1896
        %v2117 = vpack.c.bf16 %v1899, %v1897
        %v2118 = vpack.c.bf16 %v1902, %v1900
        %v2119 = vpack.c.bf16 %v1903, %v1901
        %v2120 = vpack.c.bf16 %v1906, %v1904
        %v2121 = vpack.c.bf16 %v1907, %v1905
        %v2122 = vpack.c.bf16 %v1910, %v1908
        %v2123 = vpack.c.bf16 %v1911, %v1909
        %v2124 = vpack.c.bf16 %v1914, %v1912
        %v2125 = vpack.c.bf16 %v1915, %v1913
        %v2126 = vpack.c.bf16 %v1918, %v1916
        %v2127 = vpack.c.bf16 %v1919, %v1917
        %v2128 = vpack.c.bf16 %v1922, %v1920
        %v2129 = vpack.c.bf16 %v1923, %v1921
        %v2130 = vpack.c.bf16 %v1926, %v1924
        %v2131 = vpack.c.bf16 %v1927, %v1925
        %v2132 = vpack.c.bf16 %v1930, %v1928
        %v2133 = vpack.c.bf16 %v1931, %v1929
        %v2134 = vpack.c.bf16 %v1934, %v1932
        %v2135 = vpack.c.bf16 %v1935, %v1933
        %v2136 = vpack.c.bf16 %v1938, %v1936
        %v2137 = vpack.c.bf16 %v1939, %v1937
        %v2138 = vpack.c.bf16 %v1942, %v1940
        %v2139 = vpack.c.bf16 %v1943, %v1941
        %v2140 = vpack.c.bf16 %v1946, %v1944
        %v2141 = vpack.c.bf16 %v1947, %v1945
        %v2142 = vpack.c.bf16 %v1950, %v1948
        %v2143 = vpack.c.bf16 %v1951, %v1949
        %v2144 = vld [vmem:[%s4] sm:$0xff]
        %v2145 = vld [vmem:[%s4 + $0x8] sm:$0xff]
        %v2146 = vld [vmem:[%s4 + $0x10] sm:$0xff]
        %v2147 = vld [vmem:[%s4 + $0x18] sm:$0xff]
        %v2148 = vld [vmem:[%s4 + $0x20] sm:$0xff]
        %v2149 = vld [vmem:[%s4 + $0x28] sm:$0xff]
        %v2150 = vld [vmem:[%s4 + $0x30] sm:$0xff]
        %v2151 = vld [vmem:[%s4 + $0x38] sm:$0xff]
        %v2152 = vld [vmem:[%s4 + $0x40] sm:$0xff]
        %v2153 = vld [vmem:[%s4 + $0x48] sm:$0xff]
        %v2154 = vld [vmem:[%s4 + $0x50] sm:$0xff]
        %v2155 = vld [vmem:[%s4 + $0x58] sm:$0xff]
        %v2156 = vld [vmem:[%s4 + $0x60] sm:$0xff]
        %v2157 = vld [vmem:[%s4 + $0x68] sm:$0xff]
        %v2158 = vld [vmem:[%s4 + $0x70] sm:$0xff]
        %v2159 = vld [vmem:[%s4 + $0x78] sm:$0xff]
        %v2160 = vld [vmem:[%s4 + $0x80] sm:$0xff]
        %v2161 = vld [vmem:[%s4 + $0x88] sm:$0xff]
        %v2162 = vld [vmem:[%s4 + $0x90] sm:$0xff]
        %v2163 = vld [vmem:[%s4 + $0x98] sm:$0xff]
        %v2164 = vld [vmem:[%s4 + $0xa0] sm:$0xff]
        %v2165 = vld [vmem:[%s4 + $0xa8] sm:$0xff]
        %v2166 = vld [vmem:[%s4 + $0xb0] sm:$0xff]
        %v2167 = vld [vmem:[%s4 + $0xb8] sm:$0xff]
        %v2168 = vld [vmem:[%s4 + $0xc0] sm:$0xff]
        %v2169 = vld [vmem:[%s4 + $0xc8] sm:$0xff]
        %v2170 = vld [vmem:[%s4 + $0xd0] sm:$0xff]
        %v2171 = vld [vmem:[%s4 + $0xd8] sm:$0xff]
        %v2172 = vld [vmem:[%s4 + $0xe0] sm:$0xff]
        %v2173 = vld [vmem:[%s4 + $0xe8] sm:$0xff]
        %v2174 = vld [vmem:[%s4 + $0xf0] sm:$0xff]
        %v2175 = vld [vmem:[%s4 + $0xf8] sm:$0xff]
        %v2176 = vld [vmem:[%s4 + $0x100] sm:$0xff]
        %v2177 = vld [vmem:[%s4 + $0x108] sm:$0xff]
        %v2178 = vld [vmem:[%s4 + $0x110] sm:$0xff]
        %v2179 = vld [vmem:[%s4 + $0x118] sm:$0xff]
        %v2180 = vld [vmem:[%s4 + $0x120] sm:$0xff]
        %v2181 = vld [vmem:[%s4 + $0x128] sm:$0xff]
        %v2182 = vld [vmem:[%s4 + $0x130] sm:$0xff]
        %v2183 = vld [vmem:[%s4 + $0x138] sm:$0xff]
        %v2184 = vld [vmem:[%s4 + $0x140] sm:$0xff]
        %v2185 = vld [vmem:[%s4 + $0x148] sm:$0xff]
        %v2186 = vld [vmem:[%s4 + $0x150] sm:$0xff]
        %v2187 = vld [vmem:[%s4 + $0x158] sm:$0xff]
        %v2188 = vld [vmem:[%s4 + $0x160] sm:$0xff]
        %v2189 = vld [vmem:[%s4 + $0x168] sm:$0xff]
        %v2190 = vld [vmem:[%s4 + $0x170] sm:$0xff]
        %v2191 = vld [vmem:[%s4 + $0x178] sm:$0xff]
        %v2192 = vld [vmem:[%s4 + $0x180] sm:$0xff]
        %v2193 = vld [vmem:[%s4 + $0x188] sm:$0xff]
        %v2194 = vld [vmem:[%s4 + $0x190] sm:$0xff]
        %v2195 = vld [vmem:[%s4 + $0x198] sm:$0xff]
        %v2196 = vld [vmem:[%s4 + $0x1a0] sm:$0xff]
        %v2197 = vld [vmem:[%s4 + $0x1a8] sm:$0xff]
        %v2198 = vld [vmem:[%s4 + $0x1b0] sm:$0xff]
        %v2199 = vld [vmem:[%s4 + $0x1b8] sm:$0xff]
        %v2200 = vld [vmem:[%s4 + $0x1c0] sm:$0xff]
        %v2201 = vld [vmem:[%s4 + $0x1c8] sm:$0xff]
        %v2202 = vld [vmem:[%s4 + $0x1d0] sm:$0xff]
        %v2203 = vld [vmem:[%s4 + $0x1d8] sm:$0xff]
        %v2204 = vld [vmem:[%s4 + $0x1e0] sm:$0xff]
        %v2205 = vld [vmem:[%s4 + $0x1e8] sm:$0xff]
        %v2206 = vld [vmem:[%s4 + $0x1f0] sm:$0xff]
        %v2207 = vld [vmem:[%s4 + $0x1f8] sm:$0xff]
        %2209 = vset.pattern.permute.xlu0 0
        %2210 = vperm.xlu0 %2209, %v2144
        %v2211 = vpop.permute.xlu0 %2210
        %2214 = vset.pattern.permute.xlu0 0
        %2215 = vperm.xlu0 %2214, %v2145
        %v2216 = vpop.permute.xlu0 %2215
        %2219 = vset.pattern.permute.xlu0 0
        %2220 = vperm.xlu0 %2219, %v2146
        %v2221 = vpop.permute.xlu0 %2220
        %2224 = vset.pattern.permute.xlu0 0
        %2225 = vperm.xlu0 %2224, %v2147
        %v2226 = vpop.permute.xlu0 %2225
        %2229 = vset.pattern.permute.xlu0 0
        %2230 = vperm.xlu0 %2229, %v2148
        %v2231 = vpop.permute.xlu0 %2230
        %2234 = vset.pattern.permute.xlu0 0
        %2235 = vperm.xlu0 %2234, %v2149
        %v2236 = vpop.permute.xlu0 %2235
        %2239 = vset.pattern.permute.xlu0 0
        %2240 = vperm.xlu0 %2239, %v2150
        %v2241 = vpop.permute.xlu0 %2240
        %2244 = vset.pattern.permute.xlu0 0
        %2245 = vperm.xlu0 %2244, %v2151
        %v2246 = vpop.permute.xlu0 %2245
        %2249 = vset.pattern.permute.xlu0 0
        %2250 = vperm.xlu0 %2249, %v2152
        %v2251 = vpop.permute.xlu0 %2250
        %2254 = vset.pattern.permute.xlu0 0
        %2255 = vperm.xlu0 %2254, %v2153
        %v2256 = vpop.permute.xlu0 %2255
        %2259 = vset.pattern.permute.xlu0 0
        %2260 = vperm.xlu0 %2259, %v2154
        %v2261 = vpop.permute.xlu0 %2260
        %2264 = vset.pattern.permute.xlu0 0
        %2265 = vperm.xlu0 %2264, %v2155
        %v2266 = vpop.permute.xlu0 %2265
        %2269 = vset.pattern.permute.xlu0 0
        %2270 = vperm.xlu0 %2269, %v2156
        %v2271 = vpop.permute.xlu0 %2270
        %2274 = vset.pattern.permute.xlu0 0
        %2275 = vperm.xlu0 %2274, %v2157
        %v2276 = vpop.permute.xlu0 %2275
        %2279 = vset.pattern.permute.xlu0 0
        %2280 = vperm.xlu0 %2279, %v2158
        %v2281 = vpop.permute.xlu0 %2280
        %2284 = vset.pattern.permute.xlu0 0
        %2285 = vperm.xlu0 %2284, %v2159
        %v2286 = vpop.permute.xlu0 %2285
        %2289 = vset.pattern.permute.xlu0 0
        %2290 = vperm.xlu0 %2289, %v2160
        %v2291 = vpop.permute.xlu0 %2290
        %2294 = vset.pattern.permute.xlu0 0
        %2295 = vperm.xlu0 %2294, %v2161
        %v2296 = vpop.permute.xlu0 %2295
        %2299 = vset.pattern.permute.xlu0 0
        %2300 = vperm.xlu0 %2299, %v2162
        %v2301 = vpop.permute.xlu0 %2300
        %2304 = vset.pattern.permute.xlu0 0
        %2305 = vperm.xlu0 %2304, %v2163
        %v2306 = vpop.permute.xlu0 %2305
        %2309 = vset.pattern.permute.xlu0 0
        %2310 = vperm.xlu0 %2309, %v2164
        %v2311 = vpop.permute.xlu0 %2310
        %2314 = vset.pattern.permute.xlu0 0
        %2315 = vperm.xlu0 %2314, %v2165
        %v2316 = vpop.permute.xlu0 %2315
        %2319 = vset.pattern.permute.xlu0 0
        %2320 = vperm.xlu0 %2319, %v2166
        %v2321 = vpop.permute.xlu0 %2320
        %2324 = vset.pattern.permute.xlu0 0
        %2325 = vperm.xlu0 %2324, %v2167
        %v2326 = vpop.permute.xlu0 %2325
        %2329 = vset.pattern.permute.xlu0 0
        %2330 = vperm.xlu0 %2329, %v2168
        %v2331 = vpop.permute.xlu0 %2330
        %2334 = vset.pattern.permute.xlu0 0
        %2335 = vperm.xlu0 %2334, %v2169
        %v2336 = vpop.permute.xlu0 %2335
        %2339 = vset.pattern.permute.xlu0 0
        %2340 = vperm.xlu0 %2339, %v2170
        %v2341 = vpop.permute.xlu0 %2340
        %2344 = vset.pattern.permute.xlu0 0
        %2345 = vperm.xlu0 %2344, %v2171
        %v2346 = vpop.permute.xlu0 %2345
        %2349 = vset.pattern.permute.xlu0 0
        %2350 = vperm.xlu0 %2349, %v2172
        %v2351 = vpop.permute.xlu0 %2350
        %2354 = vset.pattern.permute.xlu0 0
        %2355 = vperm.xlu0 %2354, %v2173
        %v2356 = vpop.permute.xlu0 %2355
        %2359 = vset.pattern.permute.xlu0 0
        %2360 = vperm.xlu0 %2359, %v2174
        %v2361 = vpop.permute.xlu0 %2360
        %2364 = vset.pattern.permute.xlu0 0
        %2365 = vperm.xlu0 %2364, %v2175
        %v2366 = vpop.permute.xlu0 %2365
        %2369 = vset.pattern.permute.xlu0 0
        %2370 = vperm.xlu0 %2369, %v2176
        %v2371 = vpop.permute.xlu0 %2370
        %2374 = vset.pattern.permute.xlu0 0
        %2375 = vperm.xlu0 %2374, %v2177
        %v2376 = vpop.permute.xlu0 %2375
        %2379 = vset.pattern.permute.xlu0 0
        %2380 = vperm.xlu0 %2379, %v2178
        %v2381 = vpop.permute.xlu0 %2380
        %2384 = vset.pattern.permute.xlu0 0
        %2385 = vperm.xlu0 %2384, %v2179
        %v2386 = vpop.permute.xlu0 %2385
        %2389 = vset.pattern.permute.xlu0 0
        %2390 = vperm.xlu0 %2389, %v2180
        %v2391 = vpop.permute.xlu0 %2390
        %2394 = vset.pattern.permute.xlu0 0
        %2395 = vperm.xlu0 %2394, %v2181
        %v2396 = vpop.permute.xlu0 %2395
        %2399 = vset.pattern.permute.xlu0 0
        %2400 = vperm.xlu0 %2399, %v2182
        %v2401 = vpop.permute.xlu0 %2400
        %2404 = vset.pattern.permute.xlu0 0
        %2405 = vperm.xlu0 %2404, %v2183
        %v2406 = vpop.permute.xlu0 %2405
        %2409 = vset.pattern.permute.xlu0 0
        %2410 = vperm.xlu0 %2409, %v2184
        %v2411 = vpop.permute.xlu0 %2410
        %2414 = vset.pattern.permute.xlu0 0
        %2415 = vperm.xlu0 %2414, %v2185
        %v2416 = vpop.permute.xlu0 %2415
        %2419 = vset.pattern.permute.xlu0 0
        %2420 = vperm.xlu0 %2419, %v2186
        %v2421 = vpop.permute.xlu0 %2420
        %2424 = vset.pattern.permute.xlu0 0
        %2425 = vperm.xlu0 %2424, %v2187
        %v2426 = vpop.permute.xlu0 %2425
        %2429 = vset.pattern.permute.xlu0 0
        %2430 = vperm.xlu0 %2429, %v2188
        %v2431 = vpop.permute.xlu0 %2430
        %2434 = vset.pattern.permute.xlu0 0
        %2435 = vperm.xlu0 %2434, %v2189
        %v2436 = vpop.permute.xlu0 %2435
        %2439 = vset.pattern.permute.xlu0 0
        %2440 = vperm.xlu0 %2439, %v2190
        %v2441 = vpop.permute.xlu0 %2440
        %2444 = vset.pattern.permute.xlu0 0
        %2445 = vperm.xlu0 %2444, %v2191
        %v2446 = vpop.permute.xlu0 %2445
        %2449 = vset.pattern.permute.xlu0 0
        %2450 = vperm.xlu0 %2449, %v2192
        %v2451 = vpop.permute.xlu0 %2450
        %2454 = vset.pattern.permute.xlu0 0
        %2455 = vperm.xlu0 %2454, %v2193
        %v2456 = vpop.permute.xlu0 %2455
        %2459 = vset.pattern.permute.xlu0 0
        %2460 = vperm.xlu0 %2459, %v2194
        %v2461 = vpop.permute.xlu0 %2460
        %2464 = vset.pattern.permute.xlu0 0
        %2465 = vperm.xlu0 %2464, %v2195
        %v2466 = vpop.permute.xlu0 %2465
        %2469 = vset.pattern.permute.xlu0 0
        %2470 = vperm.xlu0 %2469, %v2196
        %v2471 = vpop.permute.xlu0 %2470
        %2474 = vset.pattern.permute.xlu0 0
        %2475 = vperm.xlu0 %2474, %v2197
        %v2476 = vpop.permute.xlu0 %2475
        %2479 = vset.pattern.permute.xlu0 0
        %2480 = vperm.xlu0 %2479, %v2198
        %v2481 = vpop.permute.xlu0 %2480
        %2484 = vset.pattern.permute.xlu0 0
        %2485 = vperm.xlu0 %2484, %v2199
        %v2486 = vpop.permute.xlu0 %2485
        %2489 = vset.pattern.permute.xlu0 0
        %2490 = vperm.xlu0 %2489, %v2200
        %v2491 = vpop.permute.xlu0 %2490
        %2494 = vset.pattern.permute.xlu0 0
        %2495 = vperm.xlu0 %2494, %v2201
        %v2496 = vpop.permute.xlu0 %2495
        %2499 = vset.pattern.permute.xlu0 0
        %2500 = vperm.xlu0 %2499, %v2202
        %v2501 = vpop.permute.xlu0 %2500
        %2504 = vset.pattern.permute.xlu0 0
        %2505 = vperm.xlu0 %2504, %v2203
        %v2506 = vpop.permute.xlu0 %2505
        %2509 = vset.pattern.permute.xlu0 0
        %2510 = vperm.xlu0 %2509, %v2204
        %v2511 = vpop.permute.xlu0 %2510
        %2514 = vset.pattern.permute.xlu0 0
        %2515 = vperm.xlu0 %2514, %v2205
        %v2516 = vpop.permute.xlu0 %2515
        %2519 = vset.pattern.permute.xlu0 0
        %2520 = vperm.xlu0 %2519, %v2206
        %v2521 = vpop.permute.xlu0 %2520
        %2524 = vset.pattern.permute.xlu0 0
        %2525 = vperm.xlu0 %2524, %v2207
        %v2526 = vpop.permute.xlu0 %2525
        %v2656 = vunpack.c.l.b16 %v1952
        %v2657 = vunpack.c.h.b16 %v1952
        %v2658 = vunpack.c.l.b16 %v1953
        %v2659 = vunpack.c.h.b16 %v1953
        %v2660 = vunpack.c.l.b16 %v1954
        %v2661 = vunpack.c.h.b16 %v1954
        %v2662 = vunpack.c.l.b16 %v1955
        %v2663 = vunpack.c.h.b16 %v1955
        %v2664 = vunpack.c.l.b16 %v1956
        %v2665 = vunpack.c.h.b16 %v1956
        %v2666 = vunpack.c.l.b16 %v1957
        %v2667 = vunpack.c.h.b16 %v1957
        %v2668 = vunpack.c.l.b16 %v1958
        %v2669 = vunpack.c.h.b16 %v1958
        %v2670 = vunpack.c.l.b16 %v1959
        %v2671 = vunpack.c.h.b16 %v1959
        %v2672 = vunpack.c.l.b16 %v1960
        %v2673 = vunpack.c.h.b16 %v1960
        %v2674 = vunpack.c.l.b16 %v1961
        %v2675 = vunpack.c.h.b16 %v1961
        %v2676 = vunpack.c.l.b16 %v1962
        %v2677 = vunpack.c.h.b16 %v1962
        %v2678 = vunpack.c.l.b16 %v1963
        %v2679 = vunpack.c.h.b16 %v1963
        %v2680 = vunpack.c.l.b16 %v1964
        %v2681 = vunpack.c.h.b16 %v1964
        %v2682 = vunpack.c.l.b16 %v1965
        %v2683 = vunpack.c.h.b16 %v1965
        %v2684 = vunpack.c.l.b16 %v1966
        %v2685 = vunpack.c.h.b16 %v1966
        %v2686 = vunpack.c.l.b16 %v1967
        %v2687 = vunpack.c.h.b16 %v1967
        %v2688 = vunpack.c.l.b16 %v1968
        %v2689 = vunpack.c.h.b16 %v1968
        %v2690 = vunpack.c.l.b16 %v1969
        %v2691 = vunpack.c.h.b16 %v1969
        %v2692 = vunpack.c.l.b16 %v1970
        %v2693 = vunpack.c.h.b16 %v1970
        %v2694 = vunpack.c.l.b16 %v1971
        %v2695 = vunpack.c.h.b16 %v1971
        %v2696 = vunpack.c.l.b16 %v1972
        %v2697 = vunpack.c.h.b16 %v1972
        %v2698 = vunpack.c.l.b16 %v1973
        %v2699 = vunpack.c.h.b16 %v1973
        %v2700 = vunpack.c.l.b16 %v1974
        %v2701 = vunpack.c.h.b16 %v1974
        %v2702 = vunpack.c.l.b16 %v1975
        %v2703 = vunpack.c.h.b16 %v1975
        %v2704 = vunpack.c.l.b16 %v1976
        %v2705 = vunpack.c.h.b16 %v1976
        %v2706 = vunpack.c.l.b16 %v1977
        %v2707 = vunpack.c.h.b16 %v1977
        %v2708 = vunpack.c.l.b16 %v1978
        %v2709 = vunpack.c.h.b16 %v1978
        %v2710 = vunpack.c.l.b16 %v1979
        %v2711 = vunpack.c.h.b16 %v1979
        %v2712 = vunpack.c.l.b16 %v1980
        %v2713 = vunpack.c.h.b16 %v1980
        %v2714 = vunpack.c.l.b16 %v1981
        %v2715 = vunpack.c.h.b16 %v1981
        %v2716 = vunpack.c.l.b16 %v1982
        %v2717 = vunpack.c.h.b16 %v1982
        %v2718 = vunpack.c.l.b16 %v1983
        %v2719 = vunpack.c.h.b16 %v1983
        %v2720 = vunpack.c.l.b16 %v1984
        %v2721 = vunpack.c.h.b16 %v1984
        %v2722 = vunpack.c.l.b16 %v1985
        %v2723 = vunpack.c.h.b16 %v1985
        %v2724 = vunpack.c.l.b16 %v1986
        %v2725 = vunpack.c.h.b16 %v1986
        %v2726 = vunpack.c.l.b16 %v1987
        %v2727 = vunpack.c.h.b16 %v1987
        %v2728 = vunpack.c.l.b16 %v1988
        %v2729 = vunpack.c.h.b16 %v1988
        %v2730 = vunpack.c.l.b16 %v1989
        %v2731 = vunpack.c.h.b16 %v1989
        %v2732 = vunpack.c.l.b16 %v1990
        %v2733 = vunpack.c.h.b16 %v1990
        %v2734 = vunpack.c.l.b16 %v1991
        %v2735 = vunpack.c.h.b16 %v1991
        %v2736 = vunpack.c.l.b16 %v1992
        %v2737 = vunpack.c.h.b16 %v1992
        %v2738 = vunpack.c.l.b16 %v1993
        %v2739 = vunpack.c.h.b16 %v1993
        %v2740 = vunpack.c.l.b16 %v1994
        %v2741 = vunpack.c.h.b16 %v1994
        %v2742 = vunpack.c.l.b16 %v1995
        %v2743 = vunpack.c.h.b16 %v1995
        %v2744 = vunpack.c.l.b16 %v1996
        %v2745 = vunpack.c.h.b16 %v1996
        %v2746 = vunpack.c.l.b16 %v1997
        %v2747 = vunpack.c.h.b16 %v1997
        %v2748 = vunpack.c.l.b16 %v1998
        %v2749 = vunpack.c.h.b16 %v1998
        %v2750 = vunpack.c.l.b16 %v1999
        %v2751 = vunpack.c.h.b16 %v1999
        %v2752 = vunpack.c.l.b16 %v2000
        %v2753 = vunpack.c.h.b16 %v2000
        %v2754 = vunpack.c.l.b16 %v2001
        %v2755 = vunpack.c.h.b16 %v2001
        %v2756 = vunpack.c.l.b16 %v2002
        %v2757 = vunpack.c.h.b16 %v2002
        %v2758 = vunpack.c.l.b16 %v2003
        %v2759 = vunpack.c.h.b16 %v2003
        %v2760 = vunpack.c.l.b16 %v2004
        %v2761 = vunpack.c.h.b16 %v2004
        %v2762 = vunpack.c.l.b16 %v2005
        %v2763 = vunpack.c.h.b16 %v2005
        %v2764 = vunpack.c.l.b16 %v2006
        %v2765 = vunpack.c.h.b16 %v2006
        %v2766 = vunpack.c.l.b16 %v2007
        %v2767 = vunpack.c.h.b16 %v2007
        %v2768 = vunpack.c.l.b16 %v2008
        %v2769 = vunpack.c.h.b16 %v2008
        %v2770 = vunpack.c.l.b16 %v2009
        %v2771 = vunpack.c.h.b16 %v2009
        %v2772 = vunpack.c.l.b16 %v2010
        %v2773 = vunpack.c.h.b16 %v2010
        %v2774 = vunpack.c.l.b16 %v2011
        %v2775 = vunpack.c.h.b16 %v2011
        %v2776 = vunpack.c.l.b16 %v2012
        %v2777 = vunpack.c.h.b16 %v2012
        %v2778 = vunpack.c.l.b16 %v2013
        %v2779 = vunpack.c.h.b16 %v2013
        %v2780 = vunpack.c.l.b16 %v2014
        %v2781 = vunpack.c.h.b16 %v2014
        %v2782 = vunpack.c.l.b16 %v2015
        %v2783 = vunpack.c.h.b16 %v2015
        %v2784 = vunpack.c.l.b16 %v2016
        %v2785 = vunpack.c.h.b16 %v2016
        %v2786 = vunpack.c.l.b16 %v2017
        %v2787 = vunpack.c.h.b16 %v2017
        %v2788 = vunpack.c.l.b16 %v2018
        %v2789 = vunpack.c.h.b16 %v2018
        %v2790 = vunpack.c.l.b16 %v2019
        %v2791 = vunpack.c.h.b16 %v2019
        %v2792 = vunpack.c.l.b16 %v2020
        %v2793 = vunpack.c.h.b16 %v2020
        %v2794 = vunpack.c.l.b16 %v2021
        %v2795 = vunpack.c.h.b16 %v2021
        %v2796 = vunpack.c.l.b16 %v2022
        %v2797 = vunpack.c.h.b16 %v2022
        %v2798 = vunpack.c.l.b16 %v2023
        %v2799 = vunpack.c.h.b16 %v2023
        %v2800 = vunpack.c.l.b16 %v2024
        %v2801 = vunpack.c.h.b16 %v2024
        %v2802 = vunpack.c.l.b16 %v2025
        %v2803 = vunpack.c.h.b16 %v2025
        %v2804 = vunpack.c.l.b16 %v2026
        %v2805 = vunpack.c.h.b16 %v2026
        %v2806 = vunpack.c.l.b16 %v2027
        %v2807 = vunpack.c.h.b16 %v2027
        %v2808 = vunpack.c.l.b16 %v2028
        %v2809 = vunpack.c.h.b16 %v2028
        %v2810 = vunpack.c.l.b16 %v2029
        %v2811 = vunpack.c.h.b16 %v2029
        %v2812 = vunpack.c.l.b16 %v2030
        %v2813 = vunpack.c.h.b16 %v2030
        %v2814 = vunpack.c.l.b16 %v2031
        %v2815 = vunpack.c.h.b16 %v2031
        %v2816 = vunpack.c.l.b16 %v2032
        %v2817 = vunpack.c.h.b16 %v2032
        %v2818 = vunpack.c.l.b16 %v2033
        %v2819 = vunpack.c.h.b16 %v2033
        %v2820 = vunpack.c.l.b16 %v2034
        %v2821 = vunpack.c.h.b16 %v2034
        %v2822 = vunpack.c.l.b16 %v2035
        %v2823 = vunpack.c.h.b16 %v2035
        %v2824 = vunpack.c.l.b16 %v2036
        %v2825 = vunpack.c.h.b16 %v2036
        %v2826 = vunpack.c.l.b16 %v2037
        %v2827 = vunpack.c.h.b16 %v2037
        %v2828 = vunpack.c.l.b16 %v2038
        %v2829 = vunpack.c.h.b16 %v2038
        %v2830 = vunpack.c.l.b16 %v2039
        %v2831 = vunpack.c.h.b16 %v2039
        %v2832 = vunpack.c.l.b16 %v2040
        %v2833 = vunpack.c.h.b16 %v2040
        %v2834 = vunpack.c.l.b16 %v2041
        %v2835 = vunpack.c.h.b16 %v2041
        %v2836 = vunpack.c.l.b16 %v2042
        %v2837 = vunpack.c.h.b16 %v2042
        %v2838 = vunpack.c.l.b16 %v2043
        %v2839 = vunpack.c.h.b16 %v2043
        %v2840 = vunpack.c.l.b16 %v2044
        %v2841 = vunpack.c.h.b16 %v2044
        %v2842 = vunpack.c.l.b16 %v2045
        %v2843 = vunpack.c.h.b16 %v2045
        %v2844 = vunpack.c.l.b16 %v2046
        %v2845 = vunpack.c.h.b16 %v2046
        %v2846 = vunpack.c.l.b16 %v2047
        %v2847 = vunpack.c.h.b16 %v2047
        %v2848 = vunpack.c.l.b16 %v2048
        %v2849 = vunpack.c.h.b16 %v2048
        %v2850 = vunpack.c.l.b16 %v2049
        %v2851 = vunpack.c.h.b16 %v2049
        %v2852 = vunpack.c.l.b16 %v2050
        %v2853 = vunpack.c.h.b16 %v2050
        %v2854 = vunpack.c.l.b16 %v2051
        %v2855 = vunpack.c.h.b16 %v2051
        %v2856 = vunpack.c.l.b16 %v2052
        %v2857 = vunpack.c.h.b16 %v2052
        %v2858 = vunpack.c.l.b16 %v2053
        %v2859 = vunpack.c.h.b16 %v2053
        %v2860 = vunpack.c.l.b16 %v2054
        %v2861 = vunpack.c.h.b16 %v2054
        %v2862 = vunpack.c.l.b16 %v2055
        %v2863 = vunpack.c.h.b16 %v2055
        %v2864 = vunpack.c.l.b16 %v2056
        %v2865 = vunpack.c.h.b16 %v2056
        %v2866 = vunpack.c.l.b16 %v2057
        %v2867 = vunpack.c.h.b16 %v2057
        %v2868 = vunpack.c.l.b16 %v2058
        %v2869 = vunpack.c.h.b16 %v2058
        %v2870 = vunpack.c.l.b16 %v2059
        %v2871 = vunpack.c.h.b16 %v2059
        %v2872 = vunpack.c.l.b16 %v2060
        %v2873 = vunpack.c.h.b16 %v2060
        %v2874 = vunpack.c.l.b16 %v2061
        %v2875 = vunpack.c.h.b16 %v2061
        %v2876 = vunpack.c.l.b16 %v2062
        %v2877 = vunpack.c.h.b16 %v2062
        %v2878 = vunpack.c.l.b16 %v2063
        %v2879 = vunpack.c.h.b16 %v2063
        %v2880 = vunpack.c.l.b16 %v2064
        %v2881 = vunpack.c.h.b16 %v2064
        %v2882 = vunpack.c.l.b16 %v2065
        %v2883 = vunpack.c.h.b16 %v2065
        %v2884 = vunpack.c.l.b16 %v2066
        %v2885 = vunpack.c.h.b16 %v2066
        %v2886 = vunpack.c.l.b16 %v2067
        %v2887 = vunpack.c.h.b16 %v2067
        %v2888 = vunpack.c.l.b16 %v2068
        %v2889 = vunpack.c.h.b16 %v2068
        %v2890 = vunpack.c.l.b16 %v2069
        %v2891 = vunpack.c.h.b16 %v2069
        %v2892 = vunpack.c.l.b16 %v2070
        %v2893 = vunpack.c.h.b16 %v2070
        %v2894 = vunpack.c.l.b16 %v2071
        %v2895 = vunpack.c.h.b16 %v2071
        %v2896 = vunpack.c.l.b16 %v2072
        %v2897 = vunpack.c.h.b16 %v2072
        %v2898 = vunpack.c.l.b16 %v2073
        %v2899 = vunpack.c.h.b16 %v2073
        %v2900 = vunpack.c.l.b16 %v2074
        %v2901 = vunpack.c.h.b16 %v2074
        %v2902 = vunpack.c.l.b16 %v2075
        %v2903 = vunpack.c.h.b16 %v2075
        %v2904 = vunpack.c.l.b16 %v2076
        %v2905 = vunpack.c.h.b16 %v2076
        %v2906 = vunpack.c.l.b16 %v2077
        %v2907 = vunpack.c.h.b16 %v2077
        %v2908 = vunpack.c.l.b16 %v2078
        %v2909 = vunpack.c.h.b16 %v2078
        %v2910 = vunpack.c.l.b16 %v2079
        %v2911 = vunpack.c.h.b16 %v2079
        %v2912 = vpack.c.b16 %v2660, %v2656
        %v2913 = vpack.c.b16 %v2661, %v2657
        %v2914 = vpack.c.b16 %v2662, %v2658
        %v2915 = vpack.c.b16 %v2663, %v2659
        %v2916 = vpack.c.b16 %v2668, %v2664
        %v2917 = vpack.c.b16 %v2669, %v2665
        %v2918 = vpack.c.b16 %v2670, %v2666
        %v2919 = vpack.c.b16 %v2671, %v2667
        %v2920 = vpack.c.b16 %v2676, %v2672
        %v2921 = vpack.c.b16 %v2677, %v2673
        %v2922 = vpack.c.b16 %v2678, %v2674
        %v2923 = vpack.c.b16 %v2679, %v2675
        %v2924 = vpack.c.b16 %v2684, %v2680
        %v2925 = vpack.c.b16 %v2685, %v2681
        %v2926 = vpack.c.b16 %v2686, %v2682
        %v2927 = vpack.c.b16 %v2687, %v2683
        %v2928 = vpack.c.b16 %v2692, %v2688
        %v2929 = vpack.c.b16 %v2693, %v2689
        %v2930 = vpack.c.b16 %v2694, %v2690
        %v2931 = vpack.c.b16 %v2695, %v2691
        %v2932 = vpack.c.b16 %v2700, %v2696
        %v2933 = vpack.c.b16 %v2701, %v2697
        %v2934 = vpack.c.b16 %v2702, %v2698
        %v2935 = vpack.c.b16 %v2703, %v2699
        %v2936 = vpack.c.b16 %v2708, %v2704
        %v2937 = vpack.c.b16 %v2709, %v2705
        %v2938 = vpack.c.b16 %v2710, %v2706
        %v2939 = vpack.c.b16 %v2711, %v2707
        %v2940 = vpack.c.b16 %v2716, %v2712
        %v2941 = vpack.c.b16 %v2717, %v2713
        %v2942 = vpack.c.b16 %v2718, %v2714
        %v2943 = vpack.c.b16 %v2719, %v2715
        %v2944 = vpack.c.b16 %v2724, %v2720
        %v2945 = vpack.c.b16 %v2725, %v2721
        %v2946 = vpack.c.b16 %v2726, %v2722
        %v2947 = vpack.c.b16 %v2727, %v2723
        %v2948 = vpack.c.b16 %v2732, %v2728
        %v2949 = vpack.c.b16 %v2733, %v2729
        %v2950 = vpack.c.b16 %v2734, %v2730
        %v2951 = vpack.c.b16 %v2735, %v2731
        %v2952 = vpack.c.b16 %v2740, %v2736
        %v2953 = vpack.c.b16 %v2741, %v2737
        %v2954 = vpack.c.b16 %v2742, %v2738
        %v2955 = vpack.c.b16 %v2743, %v2739
        %v2956 = vpack.c.b16 %v2748, %v2744
        %v2957 = vpack.c.b16 %v2749, %v2745
        %v2958 = vpack.c.b16 %v2750, %v2746
        %v2959 = vpack.c.b16 %v2751, %v2747
        %v2960 = vpack.c.b16 %v2756, %v2752
        %v2961 = vpack.c.b16 %v2757, %v2753
        %v2962 = vpack.c.b16 %v2758, %v2754
        %v2963 = vpack.c.b16 %v2759, %v2755
        %v2964 = vpack.c.b16 %v2764, %v2760
        %v2965 = vpack.c.b16 %v2765, %v2761
        %v2966 = vpack.c.b16 %v2766, %v2762
        %v2967 = vpack.c.b16 %v2767, %v2763
        %v2968 = vpack.c.b16 %v2772, %v2768
        %v2969 = vpack.c.b16 %v2773, %v2769
        %v2970 = vpack.c.b16 %v2774, %v2770
        %v2971 = vpack.c.b16 %v2775, %v2771
        %v2972 = vpack.c.b16 %v2780, %v2776
        %v2973 = vpack.c.b16 %v2781, %v2777
        %v2974 = vpack.c.b16 %v2782, %v2778
        %v2975 = vpack.c.b16 %v2783, %v2779
        %v2976 = vpack.c.b16 %v2788, %v2784
        %v2977 = vpack.c.b16 %v2789, %v2785
        %v2978 = vpack.c.b16 %v2790, %v2786
        %v2979 = vpack.c.b16 %v2791, %v2787
        %v2980 = vpack.c.b16 %v2796, %v2792
        %v2981 = vpack.c.b16 %v2797, %v2793
        %v2982 = vpack.c.b16 %v2798, %v2794
        %v2983 = vpack.c.b16 %v2799, %v2795
        %v2984 = vpack.c.b16 %v2804, %v2800
        %v2985 = vpack.c.b16 %v2805, %v2801
        %v2986 = vpack.c.b16 %v2806, %v2802
        %v2987 = vpack.c.b16 %v2807, %v2803
        %v2988 = vpack.c.b16 %v2812, %v2808
        %v2989 = vpack.c.b16 %v2813, %v2809
        %v2990 = vpack.c.b16 %v2814, %v2810
        %v2991 = vpack.c.b16 %v2815, %v2811
        %v2992 = vpack.c.b16 %v2820, %v2816
        %v2993 = vpack.c.b16 %v2821, %v2817
        %v2994 = vpack.c.b16 %v2822, %v2818
        %v2995 = vpack.c.b16 %v2823, %v2819
        %v2996 = vpack.c.b16 %v2828, %v2824
        %v2997 = vpack.c.b16 %v2829, %v2825
        %v2998 = vpack.c.b16 %v2830, %v2826
        %v2999 = vpack.c.b16 %v2831, %v2827
        %v3000 = vpack.c.b16 %v2836, %v2832
        %v3001 = vpack.c.b16 %v2837, %v2833
        %v3002 = vpack.c.b16 %v2838, %v2834
        %v3003 = vpack.c.b16 %v2839, %v2835
        %v3004 = vpack.c.b16 %v2844, %v2840
        %v3005 = vpack.c.b16 %v2845, %v2841
        %v3006 = vpack.c.b16 %v2846, %v2842
        %v3007 = vpack.c.b16 %v2847, %v2843
        %v3008 = vpack.c.b16 %v2852, %v2848
        %v3009 = vpack.c.b16 %v2853, %v2849
        %v3010 = vpack.c.b16 %v2854, %v2850
        %v3011 = vpack.c.b16 %v2855, %v2851
        %v3012 = vpack.c.b16 %v2860, %v2856
        %v3013 = vpack.c.b16 %v2861, %v2857
        %v3014 = vpack.c.b16 %v2862, %v2858
        %v3015 = vpack.c.b16 %v2863, %v2859
        %v3016 = vpack.c.b16 %v2868, %v2864
        %v3017 = vpack.c.b16 %v2869, %v2865
        %v3018 = vpack.c.b16 %v2870, %v2866
        %v3019 = vpack.c.b16 %v2871, %v2867
        %v3020 = vpack.c.b16 %v2876, %v2872
        %v3021 = vpack.c.b16 %v2877, %v2873
        %v3022 = vpack.c.b16 %v2878, %v2874
        %v3023 = vpack.c.b16 %v2879, %v2875
        %v3024 = vpack.c.b16 %v2884, %v2880
        %v3025 = vpack.c.b16 %v2885, %v2881
        %v3026 = vpack.c.b16 %v2886, %v2882
        %v3027 = vpack.c.b16 %v2887, %v2883
        %v3028 = vpack.c.b16 %v2892, %v2888
        %v3029 = vpack.c.b16 %v2893, %v2889
        %v3030 = vpack.c.b16 %v2894, %v2890
        %v3031 = vpack.c.b16 %v2895, %v2891
        %v3032 = vpack.c.b16 %v2900, %v2896
        %v3033 = vpack.c.b16 %v2901, %v2897
        %v3034 = vpack.c.b16 %v2902, %v2898
        %v3035 = vpack.c.b16 %v2903, %v2899
        %v3036 = vpack.c.b16 %v2908, %v2904
        %v3037 = vpack.c.b16 %v2909, %v2905
        %v3038 = vpack.c.b16 %v2910, %v2906
        %v3039 = vpack.c.b16 %v2911, %v2907
        %3168 = vmatprep.subr.bf16.mxu0 %v2081
        %3169 = vmatpush1.bf16.msra.mxu0 %v2080
        %3170 = vmatprep.subr.bf16.mxu0 %v2083
        %3171 = vmatpush1.bf16.msra.mxu0 %v2082
        %3172 = vmatprep.subr.bf16.mxu0 %v2085
        %3173 = vmatpush1.bf16.msra.mxu0 %v2084
        %3174 = vmatprep.subr.bf16.mxu0 %v2087
        %3175 = vmatpush1.bf16.msra.mxu0 %v2086
        %3176 = vmatprep.subr.bf16.mxu0 %v2089
        %3177 = vmatpush1.bf16.msra.mxu0 %v2088
        %3178 = vmatprep.subr.bf16.mxu0 %v2091
        %3179 = vmatpush1.bf16.msra.mxu0 %v2090
        %3180 = vmatprep.subr.bf16.mxu0 %v2093
        %3181 = vmatpush1.bf16.msra.mxu0 %v2092
        %3182 = vmatprep.subr.bf16.mxu0 %v2095
        %3183 = vmatpush1.bf16.msra.mxu0 %v2094
        %3184 = vmatprep.subr.bf16.mxu0 %v2097
        %3185 = vmatpush1.bf16.msra.mxu0 %v2096
        %3186 = vmatprep.subr.bf16.mxu0 %v2099
        %3187 = vmatpush1.bf16.msra.mxu0 %v2098
        %3188 = vmatprep.subr.bf16.mxu0 %v2101
        %3189 = vmatpush1.bf16.msra.mxu0 %v2100
        %3190 = vmatprep.subr.bf16.mxu0 %v2103
        %3191 = vmatpush1.bf16.msra.mxu0 %v2102
        %3192 = vmatprep.subr.bf16.mxu0 %v2105
        %3193 = vmatpush1.bf16.msra.mxu0 %v2104
        %3194 = vmatprep.subr.bf16.mxu0 %v2107
        %3195 = vmatpush1.bf16.msra.mxu0 %v2106
        %3196 = vmatprep.subr.bf16.mxu0 %v2109
        %3197 = vmatpush1.bf16.msra.mxu0 %v2108
        %3198 = vmatprep.subr.bf16.mxu0 %v2111
        %3199 = vmatpush1.bf16.msra.mxu0 %v2110
        %3200 = vmatprep.mubr.bf16.mxu0 %v2913
        %3201 = vmatmul.mubr.bf16.gmra.mrb[0].mxu0 %v2912
        %v3202 = vpop.f32.mrb[0].mxu0
        %v3203 = vadd.f32 %v2211, %v3202
        %v3204 = vpop.f32.mrb[0].mxu0
        %v3205 = vadd.f32 %v2211, %v3204
        %v3206 = vpop.f32.mrb[0].mxu0
        %v3207 = vadd.f32 %v2216, %v3206
        %v3208 = vpop.f32.mrb[0].mxu0
        %v3209 = vadd.f32 %v2216, %v3208
        %3210 = vmatprep.mubr.bf16.mxu0 %v2917
        %3211 = vmatmul.mubr.bf16.gmra.mrb[0].mxu0 %v2916
        %v3212 = vpop.f32.mrb[0].mxu0
        %v3213 = vadd.f32 %v2221, %v3212
        %v3214 = vpop.f32.mrb[0].mxu0
        %v3215 = vadd.f32 %v2221, %v3214
        %v3216 = vpop.f32.mrb[0].mxu0
        %v3217 = vadd.f32 %v2226, %v3216
        %v3218 = vpop.f32.mrb[0].mxu0
        %v3219 = vadd.f32 %v2226, %v3218
        %3220 = vmatprep.mubr.bf16.mxu0 %v2921
        %3221 = vmatmul.mubr.bf16.gmra.mrb[0].mxu0 %v2920
        %v3222 = vpop.f32.mrb[0].mxu0
        %v3223 = vadd.f32 %v2231, %v3222
        %v3224 = vpop.f32.mrb[0].mxu0
        %v3225 = vadd.f32 %v2231, %v3224
        %v3226 = vpop.f32.mrb[0].mxu0
        %v3227 = vadd.f32 %v2236, %v3226
        %v3228 = vpop.f32.mrb[0].mxu0
        %v3229 = vadd.f32 %v2236, %v3228
        %3230 = vmatprep.mubr.bf16.mxu0 %v2925
        %3231 = vmatmul.mubr.bf16.gmra.mrb[0].mxu0 %v2924
        %v3232 = vpop.f32.mrb[0].mxu0
        %v3233 = vadd.f32 %v2241, %v3232
        %v3234 = vpop.f32.mrb[0].mxu0
        %v3235 = vadd.f32 %v2241, %v3234
        %v3236 = vpop.f32.mrb[0].mxu0
        %v3237 = vadd.f32 %v2246, %v3236
        %v3238 = vpop.f32.mrb[0].mxu0
        %v3239 = vadd.f32 %v2246, %v3238
        %3240 = vmatprep.mubr.bf16.mxu0 %v2929
        %3241 = vmatmul.mubr.bf16.gmra.mrb[0].mxu0 %v2928
        %v3242 = vpop.f32.mrb[0].mxu0
        %v3243 = vadd.f32 %v2251, %v3242
        %v3244 = vpop.f32.mrb[0].mxu0
        %v3245 = vadd.f32 %v2251, %v3244
        %v3246 = vpop.f32.mrb[0].mxu0
        %v3247 = vadd.f32 %v2256, %v3246
        %v3248 = vpop.f32.mrb[0].mxu0
        %v3249 = vadd.f32 %v2256, %v3248
        %3250 = vmatprep.mubr.bf16.mxu0 %v2933
        %3251 = vmatmul.mubr.bf16.gmra.mrb[0].mxu0 %v2932
        %v3252 = vpop.f32.mrb[0].mxu0
        %v3253 = vadd.f32 %v2261, %v3252
        %v3254 = vpop.f32.mrb[0].mxu0
        %v3255 = vadd.f32 %v2261, %v3254
        %v3256 = vpop.f32.mrb[0].mxu0
        %v3257 = vadd.f32 %v2266, %v3256
        %v3258 = vpop.f32.mrb[0].mxu0
        %v3259 = vadd.f32 %v2266, %v3258
        %3260 = vmatprep.mubr.bf16.mxu0 %v2937
        %3261 = vmatmul.mubr.bf16.gmra.mrb[0].mxu0 %v2936
        %v3262 = vpop.f32.mrb[0].mxu0
        %v3263 = vadd.f32 %v2271, %v3262
        %v3264 = vpop.f32.mrb[0].mxu0
        %v3265 = vadd.f32 %v2271, %v3264
        %v3266 = vpop.f32.mrb[0].mxu0
        %v3267 = vadd.f32 %v2276, %v3266
        %v3268 = vpop.f32.mrb[0].mxu0
        %v3269 = vadd.f32 %v2276, %v3268
        %3270 = vmatprep.mubr.bf16.mxu0 %v2941
        %3271 = vmatmul.mubr.bf16.gmra.mrb[0].mxu0 %v2940
        %v3272 = vpop.f32.mrb[0].mxu0
        %v3273 = vadd.f32 %v2281, %v3272
        %v3274 = vpop.f32.mrb[0].mxu0
        %v3275 = vadd.f32 %v2281, %v3274
        %v3276 = vpop.f32.mrb[0].mxu0
        %v3277 = vadd.f32 %v2286, %v3276
        %v3278 = vpop.f32.mrb[0].mxu0
        %v3279 = vadd.f32 %v2286, %v3278
        %3280 = vmatprep.mubr.bf16.mxu0 %v2945
        %3281 = vmatmul.mubr.bf16.gmra.mrb[0].mxu0 %v2944
        %v3282 = vpop.f32.mrb[0].mxu0
        %v3283 = vadd.f32 %v2291, %v3282
        %v3284 = vpop.f32.mrb[0].mxu0
        %v3285 = vadd.f32 %v2291, %v3284
        %v3286 = vpop.f32.mrb[0].mxu0
        %v3287 = vadd.f32 %v2296, %v3286
        %v3288 = vpop.f32.mrb[0].mxu0
        %v3289 = vadd.f32 %v2296, %v3288
        %3290 = vmatprep.mubr.bf16.mxu0 %v2949
        %3291 = vmatmul.mubr.bf16.gmra.mrb[0].mxu0 %v2948
        %v3292 = vpop.f32.mrb[0].mxu0
        %v3293 = vadd.f32 %v2301, %v3292
        %v3294 = vpop.f32.mrb[0].mxu0
        %v3295 = vadd.f32 %v2301, %v3294
        %v3296 = vpop.f32.mrb[0].mxu0
        %v3297 = vadd.f32 %v2306, %v3296
        %v3298 = vpop.f32.mrb[0].mxu0
        %v3299 = vadd.f32 %v2306, %v3298
        %3300 = vmatprep.mubr.bf16.mxu0 %v2953
        %3301 = vmatmul.mubr.bf16.gmra.mrb[0].mxu0 %v2952
        %v3302 = vpop.f32.mrb[0].mxu0
        %v3303 = vadd.f32 %v2311, %v3302
        %v3304 = vpop.f32.mrb[0].mxu0
        %v3305 = vadd.f32 %v2311, %v3304
        %v3306 = vpop.f32.mrb[0].mxu0
        %v3307 = vadd.f32 %v2316, %v3306
        %v3308 = vpop.f32.mrb[0].mxu0
        %v3309 = vadd.f32 %v2316, %v3308
        %3310 = vmatprep.mubr.bf16.mxu0 %v2957
        %3311 = vmatmul.mubr.bf16.gmra.mrb[0].mxu0 %v2956
        %v3312 = vpop.f32.mrb[0].mxu0
        %v3313 = vadd.f32 %v2321, %v3312
        %v3314 = vpop.f32.mrb[0].mxu0
        %v3315 = vadd.f32 %v2321, %v3314
        %v3316 = vpop.f32.mrb[0].mxu0
        %v3317 = vadd.f32 %v2326, %v3316
        %v3318 = vpop.f32.mrb[0].mxu0
        %v3319 = vadd.f32 %v2326, %v3318
        %3320 = vmatprep.mubr.bf16.mxu0 %v2961
        %3321 = vmatmul.mubr.bf16.gmra.mrb[0].mxu0 %v2960
        %v3322 = vpop.f32.mrb[0].mxu0
        %v3323 = vadd.f32 %v2331, %v3322
        %v3324 = vpop.f32.mrb[0].mxu0
        %v3325 = vadd.f32 %v2331, %v3324
        %v3326 = vpop.f32.mrb[0].mxu0
        %v3327 = vadd.f32 %v2336, %v3326
        %v3328 = vpop.f32.mrb[0].mxu0
        %v3329 = vadd.f32 %v2336, %v3328
        %3330 = vmatprep.mubr.bf16.mxu0 %v2965
        %3331 = vmatmul.mubr.bf16.gmra.mrb[0].mxu0 %v2964
        %v3332 = vpop.f32.mrb[0].mxu0
        %v3333 = vadd.f32 %v2341, %v3332
        %v3334 = vpop.f32.mrb[0].mxu0
        %v3335 = vadd.f32 %v2341, %v3334
        %v3336 = vpop.f32.mrb[0].mxu0
        %v3337 = vadd.f32 %v2346, %v3336
        %v3338 = vpop.f32.mrb[0].mxu0
        %v3339 = vadd.f32 %v2346, %v3338
        %3340 = vmatprep.mubr.bf16.mxu0 %v2969
        %3341 = vmatmul.mubr.bf16.gmra.mrb[0].mxu0 %v2968
        %v3342 = vpop.f32.mrb[0].mxu0
        %v3343 = vadd.f32 %v2351, %v3342
        %v3344 = vpop.f32.mrb[0].mxu0
        %v3345 = vadd.f32 %v2351, %v3344
        %v3346 = vpop.f32.mrb[0].mxu0
        %v3347 = vadd.f32 %v2356, %v3346
        %v3348 = vpop.f32.mrb[0].mxu0
        %v3349 = vadd.f32 %v2356, %v3348
        %3350 = vmatprep.mubr.bf16.mxu0 %v2973
        %3351 = vmatmul.mubr.bf16.gmra.mrb[0].mxu0 %v2972
        %v3352 = vpop.f32.mrb[0].mxu0
        %v3353 = vadd.f32 %v2361, %v3352
        %v3354 = vpop.f32.mrb[0].mxu0
        %v3355 = vadd.f32 %v2361, %v3354
        %v3356 = vpop.f32.mrb[0].mxu0
        %v3357 = vadd.f32 %v2366, %v3356
        %v3358 = vpop.f32.mrb[0].mxu0
        %v3359 = vadd.f32 %v2366, %v3358
        %3360 = vmatprep.mubr.bf16.mxu0 %v2977
        %3361 = vmatmul.mubr.bf16.gmra.mrb[0].mxu0 %v2976
        %v3362 = vpop.f32.mrb[0].mxu0
        %v3363 = vadd.f32 %v2371, %v3362
        %v3364 = vpop.f32.mrb[0].mxu0
        %v3365 = vadd.f32 %v2371, %v3364
        %v3366 = vpop.f32.mrb[0].mxu0
        %v3367 = vadd.f32 %v2376, %v3366
        %v3368 = vpop.f32.mrb[0].mxu0
        %v3369 = vadd.f32 %v2376, %v3368
        %3370 = vmatprep.mubr.bf16.mxu0 %v2981
        %3371 = vmatmul.mubr.bf16.gmra.mrb[0].mxu0 %v2980
        %v3372 = vpop.f32.mrb[0].mxu0
        %v3373 = vadd.f32 %v2381, %v3372
        %v3374 = vpop.f32.mrb[0].mxu0
        %v3375 = vadd.f32 %v2381, %v3374
        %v3376 = vpop.f32.mrb[0].mxu0
        %v3377 = vadd.f32 %v2386, %v3376
        %v3378 = vpop.f32.mrb[0].mxu0
        %v3379 = vadd.f32 %v2386, %v3378
        %3380 = vmatprep.mubr.bf16.mxu0 %v2985
        %3381 = vmatmul.mubr.bf16.gmra.mrb[0].mxu0 %v2984
        %v3382 = vpop.f32.mrb[0].mxu0
        %v3383 = vadd.f32 %v2391, %v3382
        %v3384 = vpop.f32.mrb[0].mxu0
        %v3385 = vadd.f32 %v2391, %v3384
        %v3386 = vpop.f32.mrb[0].mxu0
        %v3387 = vadd.f32 %v2396, %v3386
        %v3388 = vpop.f32.mrb[0].mxu0
        %v3389 = vadd.f32 %v2396, %v3388
        %3390 = vmatprep.mubr.bf16.mxu0 %v2989
        %3391 = vmatmul.mubr.bf16.gmra.mrb[0].mxu0 %v2988
        %v3392 = vpop.f32.mrb[0].mxu0
        %v3393 = vadd.f32 %v2401, %v3392
        %v3394 = vpop.f32.mrb[0].mxu0
        %v3395 = vadd.f32 %v2401, %v3394
        %v3396 = vpop.f32.mrb[0].mxu0
        %v3397 = vadd.f32 %v2406, %v3396
        %v3398 = vpop.f32.mrb[0].mxu0
        %v3399 = vadd.f32 %v2406, %v3398
        %3400 = vmatprep.mubr.bf16.mxu0 %v2993
        %3401 = vmatmul.mubr.bf16.gmra.mrb[0].mxu0 %v2992
        %v3402 = vpop.f32.mrb[0].mxu0
        %v3403 = vadd.f32 %v2411, %v3402
        %v3404 = vpop.f32.mrb[0].mxu0
        %v3405 = vadd.f32 %v2411, %v3404
        %v3406 = vpop.f32.mrb[0].mxu0
        %v3407 = vadd.f32 %v2416, %v3406
        %v3408 = vpop.f32.mrb[0].mxu0
        %v3409 = vadd.f32 %v2416, %v3408
        %3410 = vmatprep.mubr.bf16.mxu0 %v2997
        %3411 = vmatmul.mubr.bf16.gmra.mrb[0].mxu0 %v2996
        %v3412 = vpop.f32.mrb[0].mxu0
        %v3413 = vadd.f32 %v2421, %v3412
        %v3414 = vpop.f32.mrb[0].mxu0
        %v3415 = vadd.f32 %v2421, %v3414
        %v3416 = vpop.f32.mrb[0].mxu0
        %v3417 = vadd.f32 %v2426, %v3416
        %v3418 = vpop.f32.mrb[0].mxu0
        %v3419 = vadd.f32 %v2426, %v3418
        %3420 = vmatprep.mubr.bf16.mxu0 %v3001
        %3421 = vmatmul.mubr.bf16.gmra.mrb[0].mxu0 %v3000
        %v3422 = vpop.f32.mrb[0].mxu0
        %v3423 = vadd.f32 %v2431, %v3422
        %v3424 = vpop.f32.mrb[0].mxu0
        %v3425 = vadd.f32 %v2431, %v3424
        %v3426 = vpop.f32.mrb[0].mxu0
        %v3427 = vadd.f32 %v2436, %v3426
        %v3428 = vpop.f32.mrb[0].mxu0
        %v3429 = vadd.f32 %v2436, %v3428
        %3430 = vmatprep.mubr.bf16.mxu0 %v3005
        %3431 = vmatmul.mubr.bf16.gmra.mrb[0].mxu0 %v3004
        %v3432 = vpop.f32.mrb[0].mxu0
        %v3433 = vadd.f32 %v2441, %v3432
        %v3434 = vpop.f32.mrb[0].mxu0
        %v3435 = vadd.f32 %v2441, %v3434
        %v3436 = vpop.f32.mrb[0].mxu0
        %v3437 = vadd.f32 %v2446, %v3436
        %v3438 = vpop.f32.mrb[0].mxu0
        %v3439 = vadd.f32 %v2446, %v3438
        %3440 = vmatprep.mubr.bf16.mxu0 %v3009
        %3441 = vmatmul.mubr.bf16.gmra.mrb[0].mxu0 %v3008
        %v3442 = vpop.f32.mrb[0].mxu0
        %v3443 = vadd.f32 %v2451, %v3442
        %v3444 = vpop.f32.mrb[0].mxu0
        %v3445 = vadd.f32 %v2451, %v3444
        %v3446 = vpop.f32.mrb[0].mxu0
        %v3447 = vadd.f32 %v2456, %v3446
        %v3448 = vpop.f32.mrb[0].mxu0
        %v3449 = vadd.f32 %v2456, %v3448
        %3450 = vmatprep.mubr.bf16.mxu0 %v3013
        %3451 = vmatmul.mubr.bf16.gmra.mrb[0].mxu0 %v3012
        %v3452 = vpop.f32.mrb[0].mxu0
        %v3453 = vadd.f32 %v2461, %v3452
        %v3454 = vpop.f32.mrb[0].mxu0
        %v3455 = vadd.f32 %v2461, %v3454
        %v3456 = vpop.f32.mrb[0].mxu0
        %v3457 = vadd.f32 %v2466, %v3456
        %v3458 = vpop.f32.mrb[0].mxu0
        %v3459 = vadd.f32 %v2466, %v3458
        %3460 = vmatprep.mubr.bf16.mxu0 %v3017
        %3461 = vmatmul.mubr.bf16.gmra.mrb[0].mxu0 %v3016
        %v3462 = vpop.f32.mrb[0].mxu0
        %v3463 = vadd.f32 %v2471, %v3462
        %v3464 = vpop.f32.mrb[0].mxu0
        %v3465 = vadd.f32 %v2471, %v3464
        %v3466 = vpop.f32.mrb[0].mxu0
        %v3467 = vadd.f32 %v2476, %v3466
        %v3468 = vpop.f32.mrb[0].mxu0
        %v3469 = vadd.f32 %v2476, %v3468
        %3470 = vmatprep.mubr.bf16.mxu0 %v3021
        %3471 = vmatmul.mubr.bf16.gmra.mrb[0].mxu0 %v3020
        %v3472 = vpop.f32.mrb[0].mxu0
        %v3473 = vadd.f32 %v2481, %v3472
        %v3474 = vpop.f32.mrb[0].mxu0
        %v3475 = vadd.f32 %v2481, %v3474
        %v3476 = vpop.f32.mrb[0].mxu0
        %v3477 = vadd.f32 %v2486, %v3476
        %v3478 = vpop.f32.mrb[0].mxu0
        %v3479 = vadd.f32 %v2486, %v3478
        %3480 = vmatprep.mubr.bf16.mxu0 %v3025
        %3481 = vmatmul.mubr.bf16.gmra.mrb[0].mxu0 %v3024
        %v3482 = vpop.f32.mrb[0].mxu0
        %v3483 = vadd.f32 %v2491, %v3482
        %v3484 = vpop.f32.mrb[0].mxu0
        %v3485 = vadd.f32 %v2491, %v3484
        %v3486 = vpop.f32.mrb[0].mxu0
        %v3487 = vadd.f32 %v2496, %v3486
        %v3488 = vpop.f32.mrb[0].mxu0
        %v3489 = vadd.f32 %v2496, %v3488
        %3490 = vmatprep.mubr.bf16.mxu0 %v3029
        %3491 = vmatmul.mubr.bf16.gmra.mrb[0].mxu0 %v3028
        %v3492 = vpop.f32.mrb[0].mxu0
        %v3493 = vadd.f32 %v2501, %v3492
        %v3494 = vpop.f32.mrb[0].mxu0
        %v3495 = vadd.f32 %v2501, %v3494
        %v3496 = vpop.f32.mrb[0].mxu0
        %v3497 = vadd.f32 %v2506, %v3496
        %v3498 = vpop.f32.mrb[0].mxu0
        %v3499 = vadd.f32 %v2506, %v3498
        %3500 = vmatprep.mubr.bf16.mxu0 %v3033
        %3501 = vmatmul.mubr.bf16.gmra.mrb[0].mxu0 %v3032
        %v3502 = vpop.f32.mrb[0].mxu0
        %v3503 = vadd.f32 %v2511, %v3502
        %v3504 = vpop.f32.mrb[0].mxu0
        %v3505 = vadd.f32 %v2511, %v3504
        %v3506 = vpop.f32.mrb[0].mxu0
        %v3507 = vadd.f32 %v2516, %v3506
        %v3508 = vpop.f32.mrb[0].mxu0
        %v3509 = vadd.f32 %v2516, %v3508
        %3510 = vmatprep.mubr.bf16.mxu0 %v3037
        %3511 = vmatmul.mubr.bf16.gmra.mrb[0].mxu0 %v3036
        %v3512 = vpop.f32.mrb[0].mxu0
        %v3513 = vadd.f32 %v2521, %v3512
        %v3514 = vpop.f32.mrb[0].mxu0
        %v3515 = vadd.f32 %v2521, %v3514
        %v3516 = vpop.f32.mrb[0].mxu0
        %v3517 = vadd.f32 %v2526, %v3516
        %v3518 = vpop.f32.mrb[0].mxu0
        %v3519 = vadd.f32 %v2526, %v3518
        %3520 = vdwg.mxu0
        %3521 = vmatprep.subr.bf16.mxu0 %v2113
        %3522 = vmatpush1.bf16.msra.mxu0 %v2112
        %3523 = vmatprep.subr.bf16.mxu0 %v2115
        %3524 = vmatpush1.bf16.msra.mxu0 %v2114
        %3525 = vmatprep.subr.bf16.mxu0 %v2117
        %3526 = vmatpush1.bf16.msra.mxu0 %v2116
        %3527 = vmatprep.subr.bf16.mxu0 %v2119
        %3528 = vmatpush1.bf16.msra.mxu0 %v2118
        %3529 = vmatprep.subr.bf16.mxu0 %v2121
        %3530 = vmatpush1.bf16.msra.mxu0 %v2120
        %3531 = vmatprep.subr.bf16.mxu0 %v2123
        %3532 = vmatpush1.bf16.msra.mxu0 %v2122
        %3533 = vmatprep.subr.bf16.mxu0 %v2125
        %3534 = vmatpush1.bf16.msra.mxu0 %v2124
        %3535 = vmatprep.subr.bf16.mxu0 %v2127
        %3536 = vmatpush1.bf16.msra.mxu0 %v2126
        %3537 = vmatprep.subr.bf16.mxu0 %v2129
        %3538 = vmatpush1.bf16.msra.mxu0 %v2128
        %3539 = vmatprep.subr.bf16.mxu0 %v2131
        %3540 = vmatpush1.bf16.msra.mxu0 %v2130
        %3541 = vmatprep.subr.bf16.mxu0 %v2133
        %3542 = vmatpush1.bf16.msra.mxu0 %v2132
        %3543 = vmatprep.subr.bf16.mxu0 %v2135
        %3544 = vmatpush1.bf16.msra.mxu0 %v2134
        %3545 = vmatprep.subr.bf16.mxu0 %v2137
        %3546 = vmatpush1.bf16.msra.mxu0 %v2136
        %3547 = vmatprep.subr.bf16.mxu0 %v2139
        %3548 = vmatpush1.bf16.msra.mxu0 %v2138
        %3549 = vmatprep.subr.bf16.mxu0 %v2141
        %3550 = vmatpush1.bf16.msra.mxu0 %v2140
        %3551 = vmatprep.subr.bf16.mxu0 %v2143
        %3552 = vmatpush1.bf16.msra.mxu0 %v2142
        %3553 = vmatprep.mubr.bf16.mxu0 %v2915
        %3554 = vmatmul.mubr.bf16.gmra.mrb[0].mxu0 %v2914
        %v3555 = vpop.f32.mrb[0].mxu0
        %v3556 = vadd.f32 %v3203, %v3555
        %v3557 = vpop.f32.mrb[0].mxu0
        %v3558 = vadd.f32 %v3205, %v3557
        %v3559 = vpop.f32.mrb[0].mxu0
        %v3560 = vadd.f32 %v3207, %v3559
        %v3561 = vpop.f32.mrb[0].mxu0
        %v3562 = vadd.f32 %v3209, %v3561
        %3563 = vmatprep.mubr.bf16.mxu0 %v2919
        %3564 = vmatmul.mubr.bf16.gmra.mrb[0].mxu0 %v2918
        %v3565 = vpop.f32.mrb[0].mxu0
        %v3566 = vadd.f32 %v3213, %v3565
        %v3567 = vpop.f32.mrb[0].mxu0
        %v3568 = vadd.f32 %v3215, %v3567
        %v3569 = vpop.f32.mrb[0].mxu0
        %v3570 = vadd.f32 %v3217, %v3569
        %v3571 = vpop.f32.mrb[0].mxu0
        %v3572 = vadd.f32 %v3219, %v3571
        %3573 = vmatprep.mubr.bf16.mxu0 %v2923
        %3574 = vmatmul.mubr.bf16.gmra.mrb[0].mxu0 %v2922
        %v3575 = vpop.f32.mrb[0].mxu0
        %v3576 = vadd.f32 %v3223, %v3575
        %v3577 = vpop.f32.mrb[0].mxu0
        %v3578 = vadd.f32 %v3225, %v3577
        %v3579 = vpop.f32.mrb[0].mxu0
        %v3580 = vadd.f32 %v3227, %v3579
        %v3581 = vpop.f32.mrb[0].mxu0
        %v3582 = vadd.f32 %v3229, %v3581
        %3583 = vmatprep.mubr.bf16.mxu0 %v2927
        %3584 = vmatmul.mubr.bf16.gmra.mrb[0].mxu0 %v2926
        %v3585 = vpop.f32.mrb[0].mxu0
        %v3586 = vadd.f32 %v3233, %v3585
        %v3587 = vpop.f32.mrb[0].mxu0
        %v3588 = vadd.f32 %v3235, %v3587
        %v3589 = vpop.f32.mrb[0].mxu0
        %v3590 = vadd.f32 %v3237, %v3589
        %v3591 = vpop.f32.mrb[0].mxu0
        %v3592 = vadd.f32 %v3239, %v3591
        %3593 = vmatprep.mubr.bf16.mxu0 %v2931
        %3594 = vmatmul.mubr.bf16.gmra.mrb[0].mxu0 %v2930
        %v3595 = vpop.f32.mrb[0].mxu0
        %v3596 = vadd.f32 %v3243, %v3595
        %v3597 = vpop.f32.mrb[0].mxu0
        %v3598 = vadd.f32 %v3245, %v3597
        %v3599 = vpop.f32.mrb[0].mxu0
        %v3600 = vadd.f32 %v3247, %v3599
        %v3601 = vpop.f32.mrb[0].mxu0
        %v3602 = vadd.f32 %v3249, %v3601
        %3603 = vmatprep.mubr.bf16.mxu0 %v2935
        %3604 = vmatmul.mubr.bf16.gmra.mrb[0].mxu0 %v2934
        %v3605 = vpop.f32.mrb[0].mxu0
        %v3606 = vadd.f32 %v3253, %v3605
        %v3607 = vpop.f32.mrb[0].mxu0
        %v3608 = vadd.f32 %v3255, %v3607
        %v3609 = vpop.f32.mrb[0].mxu0
        %v3610 = vadd.f32 %v3257, %v3609
        %v3611 = vpop.f32.mrb[0].mxu0
        %v3612 = vadd.f32 %v3259, %v3611
        %3613 = vmatprep.mubr.bf16.mxu0 %v2939
        %3614 = vmatmul.mubr.bf16.gmra.mrb[0].mxu0 %v2938
        %v3615 = vpop.f32.mrb[0].mxu0
        %v3616 = vadd.f32 %v3263, %v3615
        %v3617 = vpop.f32.mrb[0].mxu0
        %v3618 = vadd.f32 %v3265, %v3617
        %v3619 = vpop.f32.mrb[0].mxu0
        %v3620 = vadd.f32 %v3267, %v3619
        %v3621 = vpop.f32.mrb[0].mxu0
        %v3622 = vadd.f32 %v3269, %v3621
        %3623 = vmatprep.mubr.bf16.mxu0 %v2943
        %3624 = vmatmul.mubr.bf16.gmra.mrb[0].mxu0 %v2942
        %v3625 = vpop.f32.mrb[0].mxu0
        %v3626 = vadd.f32 %v3273, %v3625
        %v3627 = vpop.f32.mrb[0].mxu0
        %v3628 = vadd.f32 %v3275, %v3627
        %v3629 = vpop.f32.mrb[0].mxu0
        %v3630 = vadd.f32 %v3277, %v3629
        %v3631 = vpop.f32.mrb[0].mxu0
        %v3632 = vadd.f32 %v3279, %v3631
        %3633 = vmatprep.mubr.bf16.mxu0 %v2947
        %3634 = vmatmul.mubr.bf16.gmra.mrb[0].mxu0 %v2946
        %v3635 = vpop.f32.mrb[0].mxu0
        %v3636 = vadd.f32 %v3283, %v3635
        %v3637 = vpop.f32.mrb[0].mxu0
        %v3638 = vadd.f32 %v3285, %v3637
        %v3639 = vpop.f32.mrb[0].mxu0
        %v3640 = vadd.f32 %v3287, %v3639
        %v3641 = vpop.f32.mrb[0].mxu0
        %v3642 = vadd.f32 %v3289, %v3641
        %3643 = vmatprep.mubr.bf16.mxu0 %v2951
        %3644 = vmatmul.mubr.bf16.gmra.mrb[0].mxu0 %v2950
        %v3645 = vpop.f32.mrb[0].mxu0
        %v3646 = vadd.f32 %v3293, %v3645
        %v3647 = vpop.f32.mrb[0].mxu0
        %v3648 = vadd.f32 %v3295, %v3647
        %v3649 = vpop.f32.mrb[0].mxu0
        %v3650 = vadd.f32 %v3297, %v3649
        %v3651 = vpop.f32.mrb[0].mxu0
        %v3652 = vadd.f32 %v3299, %v3651
        %3653 = vmatprep.mubr.bf16.mxu0 %v2955
        %3654 = vmatmul.mubr.bf16.gmra.mrb[0].mxu0 %v2954
        %v3655 = vpop.f32.mrb[0].mxu0
        %v3656 = vadd.f32 %v3303, %v3655
        %v3657 = vpop.f32.mrb[0].mxu0
        %v3658 = vadd.f32 %v3305, %v3657
        %v3659 = vpop.f32.mrb[0].mxu0
        %v3660 = vadd.f32 %v3307, %v3659
        %v3661 = vpop.f32.mrb[0].mxu0
        %v3662 = vadd.f32 %v3309, %v3661
        %3663 = vmatprep.mubr.bf16.mxu0 %v2959
        %3664 = vmatmul.mubr.bf16.gmra.mrb[0].mxu0 %v2958
        %v3665 = vpop.f32.mrb[0].mxu0
        %v3666 = vadd.f32 %v3313, %v3665
        %v3667 = vpop.f32.mrb[0].mxu0
        %v3668 = vadd.f32 %v3315, %v3667
        %v3669 = vpop.f32.mrb[0].mxu0
        %v3670 = vadd.f32 %v3317, %v3669
        %v3671 = vpop.f32.mrb[0].mxu0
        %v3672 = vadd.f32 %v3319, %v3671
        %3673 = vmatprep.mubr.bf16.mxu0 %v2963
        %3674 = vmatmul.mubr.bf16.gmra.mrb[0].mxu0 %v2962
        %v3675 = vpop.f32.mrb[0].mxu0
        %v3676 = vadd.f32 %v3323, %v3675
        %v3677 = vpop.f32.mrb[0].mxu0
        %v3678 = vadd.f32 %v3325, %v3677
        %v3679 = vpop.f32.mrb[0].mxu0
        %v3680 = vadd.f32 %v3327, %v3679
        %v3681 = vpop.f32.mrb[0].mxu0
        %v3682 = vadd.f32 %v3329, %v3681
        %3683 = vmatprep.mubr.bf16.mxu0 %v2967
        %3684 = vmatmul.mubr.bf16.gmra.mrb[0].mxu0 %v2966
        %v3685 = vpop.f32.mrb[0].mxu0
        %v3686 = vadd.f32 %v3333, %v3685
        %v3687 = vpop.f32.mrb[0].mxu0
        %v3688 = vadd.f32 %v3335, %v3687
        %v3689 = vpop.f32.mrb[0].mxu0
        %v3690 = vadd.f32 %v3337, %v3689
        %v3691 = vpop.f32.mrb[0].mxu0
        %v3692 = vadd.f32 %v3339, %v3691
        %3693 = vmatprep.mubr.bf16.mxu0 %v2971
        %3694 = vmatmul.mubr.bf16.gmra.mrb[0].mxu0 %v2970
        %v3695 = vpop.f32.mrb[0].mxu0
        %v3696 = vadd.f32 %v3343, %v3695
        %v3697 = vpop.f32.mrb[0].mxu0
        %v3698 = vadd.f32 %v3345, %v3697
        %v3699 = vpop.f32.mrb[0].mxu0
        %v3700 = vadd.f32 %v3347, %v3699
        %v3701 = vpop.f32.mrb[0].mxu0
        %v3702 = vadd.f32 %v3349, %v3701
        %3703 = vmatprep.mubr.bf16.mxu0 %v2975
        %3704 = vmatmul.mubr.bf16.gmra.mrb[0].mxu0 %v2974
        %v3705 = vpop.f32.mrb[0].mxu0
        %v3706 = vadd.f32 %v3353, %v3705
        %v3707 = vpop.f32.mrb[0].mxu0
        %v3708 = vadd.f32 %v3355, %v3707
        %v3709 = vpop.f32.mrb[0].mxu0
        %v3710 = vadd.f32 %v3357, %v3709
        %v3711 = vpop.f32.mrb[0].mxu0
        %v3712 = vadd.f32 %v3359, %v3711
        %3713 = vmatprep.mubr.bf16.mxu0 %v2979
        %3714 = vmatmul.mubr.bf16.gmra.mrb[0].mxu0 %v2978
        %v3715 = vpop.f32.mrb[0].mxu0
        %v3716 = vadd.f32 %v3363, %v3715
        %v3717 = vpop.f32.mrb[0].mxu0
        %v3718 = vadd.f32 %v3365, %v3717
        %v3719 = vpop.f32.mrb[0].mxu0
        %v3720 = vadd.f32 %v3367, %v3719
        %v3721 = vpop.f32.mrb[0].mxu0
        %v3722 = vadd.f32 %v3369, %v3721
        %3723 = vmatprep.mubr.bf16.mxu0 %v2983
        %3724 = vmatmul.mubr.bf16.gmra.mrb[0].mxu0 %v2982
        %v3725 = vpop.f32.mrb[0].mxu0
        %v3726 = vadd.f32 %v3373, %v3725
        %v3727 = vpop.f32.mrb[0].mxu0
        %v3728 = vadd.f32 %v3375, %v3727
        %v3729 = vpop.f32.mrb[0].mxu0
        %v3730 = vadd.f32 %v3377, %v3729
        %v3731 = vpop.f32.mrb[0].mxu0
        %v3732 = vadd.f32 %v3379, %v3731
        %3733 = vmatprep.mubr.bf16.mxu0 %v2987
        %3734 = vmatmul.mubr.bf16.gmra.mrb[0].mxu0 %v2986
        %v3735 = vpop.f32.mrb[0].mxu0
        %v3736 = vadd.f32 %v3383, %v3735
        %v3737 = vpop.f32.mrb[0].mxu0
        %v3738 = vadd.f32 %v3385, %v3737
        %v3739 = vpop.f32.mrb[0].mxu0
        %v3740 = vadd.f32 %v3387, %v3739
        %v3741 = vpop.f32.mrb[0].mxu0
        %v3742 = vadd.f32 %v3389, %v3741
        %3743 = vmatprep.mubr.bf16.mxu0 %v2991
        %3744 = vmatmul.mubr.bf16.gmra.mrb[0].mxu0 %v2990
        %v3745 = vpop.f32.mrb[0].mxu0
        %v3746 = vadd.f32 %v3393, %v3745
        %v3747 = vpop.f32.mrb[0].mxu0
        %v3748 = vadd.f32 %v3395, %v3747
        %v3749 = vpop.f32.mrb[0].mxu0
        %v3750 = vadd.f32 %v3397, %v3749
        %v3751 = vpop.f32.mrb[0].mxu0
        %v3752 = vadd.f32 %v3399, %v3751
        %3753 = vmatprep.mubr.bf16.mxu0 %v2995
        %3754 = vmatmul.mubr.bf16.gmra.mrb[0].mxu0 %v2994
        %v3755 = vpop.f32.mrb[0].mxu0
        %v3756 = vadd.f32 %v3403, %v3755
        %v3757 = vpop.f32.mrb[0].mxu0
        %v3758 = vadd.f32 %v3405, %v3757
        %v3759 = vpop.f32.mrb[0].mxu0
        %v3760 = vadd.f32 %v3407, %v3759
        %v3761 = vpop.f32.mrb[0].mxu0
        %v3762 = vadd.f32 %v3409, %v3761
        %3763 = vmatprep.mubr.bf16.mxu0 %v2999
        %3764 = vmatmul.mubr.bf16.gmra.mrb[0].mxu0 %v2998
        %v3765 = vpop.f32.mrb[0].mxu0
        %v3766 = vadd.f32 %v3413, %v3765
        %v3767 = vpop.f32.mrb[0].mxu0
        %v3768 = vadd.f32 %v3415, %v3767
        %v3769 = vpop.f32.mrb[0].mxu0
        %v3770 = vadd.f32 %v3417, %v3769
        %v3771 = vpop.f32.mrb[0].mxu0
        %v3772 = vadd.f32 %v3419, %v3771
        %3773 = vmatprep.mubr.bf16.mxu0 %v3003
        %3774 = vmatmul.mubr.bf16.gmra.mrb[0].mxu0 %v3002
        %v3775 = vpop.f32.mrb[0].mxu0
        %v3776 = vadd.f32 %v3423, %v3775
        %v3777 = vpop.f32.mrb[0].mxu0
        %v3778 = vadd.f32 %v3425, %v3777
        %v3779 = vpop.f32.mrb[0].mxu0
        %v3780 = vadd.f32 %v3427, %v3779
        %v3781 = vpop.f32.mrb[0].mxu0
        %v3782 = vadd.f32 %v3429, %v3781
        %3783 = vmatprep.mubr.bf16.mxu0 %v3007
        %3784 = vmatmul.mubr.bf16.gmra.mrb[0].mxu0 %v3006
        %v3785 = vpop.f32.mrb[0].mxu0
        %v3786 = vadd.f32 %v3433, %v3785
        %v3787 = vpop.f32.mrb[0].mxu0
        %v3788 = vadd.f32 %v3435, %v3787
        %v3789 = vpop.f32.mrb[0].mxu0
        %v3790 = vadd.f32 %v3437, %v3789
        %v3791 = vpop.f32.mrb[0].mxu0
        %v3792 = vadd.f32 %v3439, %v3791
        %3793 = vmatprep.mubr.bf16.mxu0 %v3011
        %3794 = vmatmul.mubr.bf16.gmra.mrb[0].mxu0 %v3010
        %v3795 = vpop.f32.mrb[0].mxu0
        %v3796 = vadd.f32 %v3443, %v3795
        %v3797 = vpop.f32.mrb[0].mxu0
        %v3798 = vadd.f32 %v3445, %v3797
        %v3799 = vpop.f32.mrb[0].mxu0
        %v3800 = vadd.f32 %v3447, %v3799
        %v3801 = vpop.f32.mrb[0].mxu0
        %v3802 = vadd.f32 %v3449, %v3801
        %3803 = vmatprep.mubr.bf16.mxu0 %v3015
        %3804 = vmatmul.mubr.bf16.gmra.mrb[0].mxu0 %v3014
        %v3805 = vpop.f32.mrb[0].mxu0
        %v3806 = vadd.f32 %v3453, %v3805
        %v3807 = vpop.f32.mrb[0].mxu0
        %v3808 = vadd.f32 %v3455, %v3807
        %v3809 = vpop.f32.mrb[0].mxu0
        %v3810 = vadd.f32 %v3457, %v3809
        %v3811 = vpop.f32.mrb[0].mxu0
        %v3812 = vadd.f32 %v3459, %v3811
        %3813 = vmatprep.mubr.bf16.mxu0 %v3019
        %3814 = vmatmul.mubr.bf16.gmra.mrb[0].mxu0 %v3018
        %v3815 = vpop.f32.mrb[0].mxu0
        %v3816 = vadd.f32 %v3463, %v3815
        %v3817 = vpop.f32.mrb[0].mxu0
        %v3818 = vadd.f32 %v3465, %v3817
        %v3819 = vpop.f32.mrb[0].mxu0
        %v3820 = vadd.f32 %v3467, %v3819
        %v3821 = vpop.f32.mrb[0].mxu0
        %v3822 = vadd.f32 %v3469, %v3821
        %3823 = vmatprep.mubr.bf16.mxu0 %v3023
        %3824 = vmatmul.mubr.bf16.gmra.mrb[0].mxu0 %v3022
        %v3825 = vpop.f32.mrb[0].mxu0
        %v3826 = vadd.f32 %v3473, %v3825
        %v3827 = vpop.f32.mrb[0].mxu0
        %v3828 = vadd.f32 %v3475, %v3827
        %v3829 = vpop.f32.mrb[0].mxu0
        %v3830 = vadd.f32 %v3477, %v3829
        %v3831 = vpop.f32.mrb[0].mxu0
        %v3832 = vadd.f32 %v3479, %v3831
        %3833 = vmatprep.mubr.bf16.mxu0 %v3027
        %3834 = vmatmul.mubr.bf16.gmra.mrb[0].mxu0 %v3026
        %v3835 = vpop.f32.mrb[0].mxu0
        %v3836 = vadd.f32 %v3483, %v3835
        %v3837 = vpop.f32.mrb[0].mxu0
        %v3838 = vadd.f32 %v3485, %v3837
        %v3839 = vpop.f32.mrb[0].mxu0
        %v3840 = vadd.f32 %v3487, %v3839
        %v3841 = vpop.f32.mrb[0].mxu0
        %v3842 = vadd.f32 %v3489, %v3841
        %3843 = vmatprep.mubr.bf16.mxu0 %v3031
        %3844 = vmatmul.mubr.bf16.gmra.mrb[0].mxu0 %v3030
        %v3845 = vpop.f32.mrb[0].mxu0
        %v3846 = vadd.f32 %v3493, %v3845
        %v3847 = vpop.f32.mrb[0].mxu0
        %v3848 = vadd.f32 %v3495, %v3847
        %v3849 = vpop.f32.mrb[0].mxu0
        %v3850 = vadd.f32 %v3497, %v3849
        %v3851 = vpop.f32.mrb[0].mxu0
        %v3852 = vadd.f32 %v3499, %v3851
        %3853 = vmatprep.mubr.bf16.mxu0 %v3035
        %3854 = vmatmul.mubr.bf16.gmra.mrb[0].mxu0 %v3034
        %v3855 = vpop.f32.mrb[0].mxu0
        %v3856 = vadd.f32 %v3503, %v3855
        %v3857 = vpop.f32.mrb[0].mxu0
        %v3858 = vadd.f32 %v3505, %v3857
        %v3859 = vpop.f32.mrb[0].mxu0
        %v3860 = vadd.f32 %v3507, %v3859
        %v3861 = vpop.f32.mrb[0].mxu0
        %v3862 = vadd.f32 %v3509, %v3861
        %3863 = vmatprep.mubr.bf16.mxu0 %v3039
        %3864 = vmatmul.mubr.bf16.gmra.mrb[0].mxu0 %v3038
        %v3865 = vpop.f32.mrb[0].mxu0
        %v3866 = vadd.f32 %v3513, %v3865
        %v3867 = vpop.f32.mrb[0].mxu0
        %v3868 = vadd.f32 %v3515, %v3867
        %v3869 = vpop.f32.mrb[0].mxu0
        %v3870 = vadd.f32 %v3517, %v3869
        %v3871 = vpop.f32.mrb[0].mxu0
        %v3872 = vadd.f32 %v3519, %v3871
        %3873 = vdwg.mxu0
        %v3874 = vmax.f32 %v3556, 0.0
        %v3875 = vmax.f32 %v3558, 0.0
        %v3876 = vmax.f32 %v3560, 0.0
        %v3877 = vmax.f32 %v3562, 0.0
        %v3878 = vmax.f32 %v3566, 0.0
        %v3879 = vmax.f32 %v3568, 0.0
        %v3880 = vmax.f32 %v3570, 0.0
        %v3881 = vmax.f32 %v3572, 0.0
        %v3882 = vmax.f32 %v3576, 0.0
        %v3883 = vmax.f32 %v3578, 0.0
        %v3884 = vmax.f32 %v3580, 0.0
        %v3885 = vmax.f32 %v3582, 0.0
        %v3886 = vmax.f32 %v3586, 0.0
        %v3887 = vmax.f32 %v3588, 0.0
        %v3888 = vmax.f32 %v3590, 0.0
        %v3889 = vmax.f32 %v3592, 0.0
        %v3890 = vmax.f32 %v3596, 0.0
        %v3891 = vmax.f32 %v3598, 0.0
        %v3892 = vmax.f32 %v3600, 0.0
        %v3893 = vmax.f32 %v3602, 0.0
        %v3894 = vmax.f32 %v3606, 0.0
        %v3895 = vmax.f32 %v3608, 0.0
        %v3896 = vmax.f32 %v3610, 0.0
        %v3897 = vmax.f32 %v3612, 0.0
        %v3898 = vmax.f32 %v3616, 0.0
        %v3899 = vmax.f32 %v3618, 0.0
        %v3900 = vmax.f32 %v3620, 0.0
        %v3901 = vmax.f32 %v3622, 0.0
        %v3902 = vmax.f32 %v3626, 0.0
        %v3903 = vmax.f32 %v3628, 0.0
        %v3904 = vmax.f32 %v3630, 0.0
        %v3905 = vmax.f32 %v3632, 0.0
        %v3906 = vmax.f32 %v3636, 0.0
        %v3907 = vmax.f32 %v3638, 0.0
        %v3908 = vmax.f32 %v3640, 0.0
        %v3909 = vmax.f32 %v3642, 0.0
        %v3910 = vmax.f32 %v3646, 0.0
        %v3911 = vmax.f32 %v3648, 0.0
        %v3912 = vmax.f32 %v3650, 0.0
        %v3913 = vmax.f32 %v3652, 0.0
        %v3914 = vmax.f32 %v3656, 0.0
        %v3915 = vmax.f32 %v3658, 0.0
        %v3916 = vmax.f32 %v3660, 0.0
        %v3917 = vmax.f32 %v3662, 0.0
        %v3918 = vmax.f32 %v3666, 0.0
        %v3919 = vmax.f32 %v3668, 0.0
        %v3920 = vmax.f32 %v3670, 0.0
        %v3921 = vmax.f32 %v3672, 0.0
        %v3922 = vmax.f32 %v3676, 0.0
        %v3923 = vmax.f32 %v3678, 0.0
        %v3924 = vmax.f32 %v3680, 0.0
        %v3925 = vmax.f32 %v3682, 0.0
        %v3926 = vmax.f32 %v3686, 0.0
        %v3927 = vmax.f32 %v3688, 0.0
        %v3928 = vmax.f32 %v3690, 0.0
        %v3929 = vmax.f32 %v3692, 0.0
        %v3930 = vmax.f32 %v3696, 0.0
        %v3931 = vmax.f32 %v3698, 0.0
        %v3932 = vmax.f32 %v3700, 0.0
        %v3933 = vmax.f32 %v3702, 0.0
        %v3934 = vmax.f32 %v3706, 0.0
        %v3935 = vmax.f32 %v3708, 0.0
        %v3936 = vmax.f32 %v3710, 0.0
        %v3937 = vmax.f32 %v3712, 0.0
        %v3938 = vmax.f32 %v3716, 0.0
        %v3939 = vmax.f32 %v3718, 0.0
        %v3940 = vmax.f32 %v3720, 0.0
        %v3941 = vmax.f32 %v3722, 0.0
        %v3942 = vmax.f32 %v3726, 0.0
        %v3943 = vmax.f32 %v3728, 0.0
        %v3944 = vmax.f32 %v3730, 0.0
        %v3945 = vmax.f32 %v3732, 0.0
        %v3946 = vmax.f32 %v3736, 0.0
        %v3947 = vmax.f32 %v3738, 0.0
        %v3948 = vmax.f32 %v3740, 0.0
        %v3949 = vmax.f32 %v3742, 0.0
        %v3950 = vmax.f32 %v3746, 0.0
        %v3951 = vmax.f32 %v3748, 0.0
        %v3952 = vmax.f32 %v3750, 0.0
        %v3953 = vmax.f32 %v3752, 0.0
        %v3954 = vmax.f32 %v3756, 0.0
        %v3955 = vmax.f32 %v3758, 0.0
        %v3956 = vmax.f32 %v3760, 0.0
        %v3957 = vmax.f32 %v3762, 0.0
        %v3958 = vmax.f32 %v3766, 0.0
        %v3959 = vmax.f32 %v3768, 0.0
        %v3960 = vmax.f32 %v3770, 0.0
        %v3961 = vmax.f32 %v3772, 0.0
        %v3962 = vmax.f32 %v3776, 0.0
        %v3963 = vmax.f32 %v3778, 0.0
        %v3964 = vmax.f32 %v3780, 0.0
        %v3965 = vmax.f32 %v3782, 0.0
        %v3966 = vmax.f32 %v3786, 0.0
        %v3967 = vmax.f32 %v3788, 0.0
        %v3968 = vmax.f32 %v3790, 0.0
        %v3969 = vmax.f32 %v3792, 0.0
        %v3970 = vmax.f32 %v3796, 0.0
        %v3971 = vmax.f32 %v3798, 0.0
        %v3972 = vmax.f32 %v3800, 0.0
        %v3973 = vmax.f32 %v3802, 0.0
        %v3974 = vmax.f32 %v3806, 0.0
        %v3975 = vmax.f32 %v3808, 0.0
        %v3976 = vmax.f32 %v3810, 0.0
        %v3977 = vmax.f32 %v3812, 0.0
        %v3978 = vmax.f32 %v3816, 0.0
        %v3979 = vmax.f32 %v3818, 0.0
        %v3980 = vmax.f32 %v3820, 0.0
        %v3981 = vmax.f32 %v3822, 0.0
        %v3982 = vmax.f32 %v3826, 0.0
        %v3983 = vmax.f32 %v3828, 0.0
        %v3984 = vmax.f32 %v3830, 0.0
        %v3985 = vmax.f32 %v3832, 0.0
        %v3986 = vmax.f32 %v3836, 0.0
        %v3987 = vmax.f32 %v3838, 0.0
        %v3988 = vmax.f32 %v3840, 0.0
        %v3989 = vmax.f32 %v3842, 0.0
        %v3990 = vmax.f32 %v3846, 0.0
        %v3991 = vmax.f32 %v3848, 0.0
        %v3992 = vmax.f32 %v3850, 0.0
        %v3993 = vmax.f32 %v3852, 0.0
        %v3994 = vmax.f32 %v3856, 0.0
        %v3995 = vmax.f32 %v3858, 0.0
        %v3996 = vmax.f32 %v3860, 0.0
        %v3997 = vmax.f32 %v3862, 0.0
        %v3998 = vmax.f32 %v3866, 0.0
        %v3999 = vmax.f32 %v3868, 0.0
        %v4000 = vmax.f32 %v3870, 0.0
        %v4001 = vmax.f32 %v3872, 0.0
        %v4002 = vld [vmem:[%s5] sm:$0xff]
        %v4003 = vld [vmem:[%s5 + $0x8] sm:$0xff]
        %v4004 = vld [vmem:[%s5 + $0x10] sm:$0xff]
        %v4005 = vld [vmem:[%s5 + $0x18] sm:$0xff]
        %v4006 = vld [vmem:[%s5 + $0x20] sm:$0xff]
        %v4007 = vld [vmem:[%s5 + $0x28] sm:$0xff]
        %v4008 = vld [vmem:[%s5 + $0x30] sm:$0xff]
        %v4009 = vld [vmem:[%s5 + $0x38] sm:$0xff]
        %v4010 = vld [vmem:[%s5 + $0x40] sm:$0xff]
        %v4011 = vld [vmem:[%s5 + $0x48] sm:$0xff]
        %v4012 = vld [vmem:[%s5 + $0x50] sm:$0xff]
        %v4013 = vld [vmem:[%s5 + $0x58] sm:$0xff]
        %v4014 = vld [vmem:[%s5 + $0x60] sm:$0xff]
        %v4015 = vld [vmem:[%s5 + $0x68] sm:$0xff]
        %v4016 = vld [vmem:[%s5 + $0x70] sm:$0xff]
        %v4017 = vld [vmem:[%s5 + $0x78] sm:$0xff]
        %v4018 = vld [vmem:[%s5 + $0x80] sm:$0xff]
        %v4019 = vld [vmem:[%s5 + $0x88] sm:$0xff]
        %v4020 = vld [vmem:[%s5 + $0x90] sm:$0xff]
        %v4021 = vld [vmem:[%s5 + $0x98] sm:$0xff]
        %v4022 = vld [vmem:[%s5 + $0xa0] sm:$0xff]
        %v4023 = vld [vmem:[%s5 + $0xa8] sm:$0xff]
        %v4024 = vld [vmem:[%s5 + $0xb0] sm:$0xff]
        %v4025 = vld [vmem:[%s5 + $0xb8] sm:$0xff]
        %v4026 = vld [vmem:[%s5 + $0xc0] sm:$0xff]
        %v4027 = vld [vmem:[%s5 + $0xc8] sm:$0xff]
        %v4028 = vld [vmem:[%s5 + $0xd0] sm:$0xff]
        %v4029 = vld [vmem:[%s5 + $0xd8] sm:$0xff]
        %v4030 = vld [vmem:[%s5 + $0xe0] sm:$0xff]
        %v4031 = vld [vmem:[%s5 + $0xe8] sm:$0xff]
        %v4032 = vld [vmem:[%s5 + $0xf0] sm:$0xff]
        %v4033 = vld [vmem:[%s5 + $0xf8] sm:$0xff]
        %v4034 = vld [vmem:[%s5 + $0x100] sm:$0xff]
        %v4035 = vld [vmem:[%s5 + $0x108] sm:$0xff]
        %v4036 = vld [vmem:[%s5 + $0x110] sm:$0xff]
        %v4037 = vld [vmem:[%s5 + $0x118] sm:$0xff]
        %v4038 = vld [vmem:[%s5 + $0x120] sm:$0xff]
        %v4039 = vld [vmem:[%s5 + $0x128] sm:$0xff]
        %v4040 = vld [vmem:[%s5 + $0x130] sm:$0xff]
        %v4041 = vld [vmem:[%s5 + $0x138] sm:$0xff]
        %v4042 = vld [vmem:[%s5 + $0x140] sm:$0xff]
        %v4043 = vld [vmem:[%s5 + $0x148] sm:$0xff]
        %v4044 = vld [vmem:[%s5 + $0x150] sm:$0xff]
        %v4045 = vld [vmem:[%s5 + $0x158] sm:$0xff]
        %v4046 = vld [vmem:[%s5 + $0x160] sm:$0xff]
        %v4047 = vld [vmem:[%s5 + $0x168] sm:$0xff]
        %v4048 = vld [vmem:[%s5 + $0x170] sm:$0xff]
        %v4049 = vld [vmem:[%s5 + $0x178] sm:$0xff]
        %v4050 = vld [vmem:[%s5 + $0x180] sm:$0xff]
        %v4051 = vld [vmem:[%s5 + $0x188] sm:$0xff]
        %v4052 = vld [vmem:[%s5 + $0x190] sm:$0xff]
        %v4053 = vld [vmem:[%s5 + $0x198] sm:$0xff]
        %v4054 = vld [vmem:[%s5 + $0x1a0] sm:$0xff]
        %v4055 = vld [vmem:[%s5 + $0x1a8] sm:$0xff]
        %v4056 = vld [vmem:[%s5 + $0x1b0] sm:$0xff]
        %v4057 = vld [vmem:[%s5 + $0x1b8] sm:$0xff]
        %v4058 = vld [vmem:[%s5 + $0x1c0] sm:$0xff]
        %v4059 = vld [vmem:[%s5 + $0x1c8] sm:$0xff]
        %v4060 = vld [vmem:[%s5 + $0x1d0] sm:$0xff]
        %v4061 = vld [vmem:[%s5 + $0x1d8] sm:$0xff]
        %v4062 = vld [vmem:[%s5 + $0x1e0] sm:$0xff]
        %v4063 = vld [vmem:[%s5 + $0x1e8] sm:$0xff]
        %v4064 = vld [vmem:[%s5 + $0x1f0] sm:$0xff]
        %v4065 = vld [vmem:[%s5 + $0x1f8] sm:$0xff]
        %4067 = vset.pattern.permute.xlu0 0
        %4068 = vperm.xlu0 %4067, %v4002
        %v4069 = vpop.permute.xlu0 %4068
        %4072 = vset.pattern.permute.xlu0 0
        %4073 = vperm.xlu0 %4072, %v4003
        %v4074 = vpop.permute.xlu0 %4073
        %4077 = vset.pattern.permute.xlu0 0
        %4078 = vperm.xlu0 %4077, %v4004
        %v4079 = vpop.permute.xlu0 %4078
        %4082 = vset.pattern.permute.xlu0 0
        %4083 = vperm.xlu0 %4082, %v4005
        %v4084 = vpop.permute.xlu0 %4083
        %4087 = vset.pattern.permute.xlu0 0
        %4088 = vperm.xlu0 %4087, %v4006
        %v4089 = vpop.permute.xlu0 %4088
        %4092 = vset.pattern.permute.xlu0 0
        %4093 = vperm.xlu0 %4092, %v4007
        %v4094 = vpop.permute.xlu0 %4093
        %4097 = vset.pattern.permute.xlu0 0
        %4098 = vperm.xlu0 %4097, %v4008
        %v4099 = vpop.permute.xlu0 %4098
        %4102 = vset.pattern.permute.xlu0 0
        %4103 = vperm.xlu0 %4102, %v4009
        %v4104 = vpop.permute.xlu0 %4103
        %4107 = vset.pattern.permute.xlu0 0
        %4108 = vperm.xlu0 %4107, %v4010
        %v4109 = vpop.permute.xlu0 %4108
        %4112 = vset.pattern.permute.xlu0 0
        %4113 = vperm.xlu0 %4112, %v4011
        %v4114 = vpop.permute.xlu0 %4113
        %4117 = vset.pattern.permute.xlu0 0
        %4118 = vperm.xlu0 %4117, %v4012
        %v4119 = vpop.permute.xlu0 %4118
        %4122 = vset.pattern.permute.xlu0 0
        %4123 = vperm.xlu0 %4122, %v4013
        %v4124 = vpop.permute.xlu0 %4123
        %4127 = vset.pattern.permute.xlu0 0
        %4128 = vperm.xlu0 %4127, %v4014
        %v4129 = vpop.permute.xlu0 %4128
        %4132 = vset.pattern.permute.xlu0 0
        %4133 = vperm.xlu0 %4132, %v4015
        %v4134 = vpop.permute.xlu0 %4133
        %4137 = vset.pattern.permute.xlu0 0
        %4138 = vperm.xlu0 %4137, %v4016
        %v4139 = vpop.permute.xlu0 %4138
        %4142 = vset.pattern.permute.xlu0 0
        %4143 = vperm.xlu0 %4142, %v4017
        %v4144 = vpop.permute.xlu0 %4143
        %4147 = vset.pattern.permute.xlu0 0
        %4148 = vperm.xlu0 %4147, %v4018
        %v4149 = vpop.permute.xlu0 %4148
        %4152 = vset.pattern.permute.xlu0 0
        %4153 = vperm.xlu0 %4152, %v4019
        %v4154 = vpop.permute.xlu0 %4153
        %4157 = vset.pattern.permute.xlu0 0
        %4158 = vperm.xlu0 %4157, %v4020
        %v4159 = vpop.permute.xlu0 %4158
        %4162 = vset.pattern.permute.xlu0 0
        %4163 = vperm.xlu0 %4162, %v4021
        %v4164 = vpop.permute.xlu0 %4163
        %4167 = vset.pattern.permute.xlu0 0
        %4168 = vperm.xlu0 %4167, %v4022
        %v4169 = vpop.permute.xlu0 %4168
        %4172 = vset.pattern.permute.xlu0 0
        %4173 = vperm.xlu0 %4172, %v4023
        %v4174 = vpop.permute.xlu0 %4173
        %4177 = vset.pattern.permute.xlu0 0
        %4178 = vperm.xlu0 %4177, %v4024
        %v4179 = vpop.permute.xlu0 %4178
        %4182 = vset.pattern.permute.xlu0 0
        %4183 = vperm.xlu0 %4182, %v4025
        %v4184 = vpop.permute.xlu0 %4183
        %4187 = vset.pattern.permute.xlu0 0
        %4188 = vperm.xlu0 %4187, %v4026
        %v4189 = vpop.permute.xlu0 %4188
        %4192 = vset.pattern.permute.xlu0 0
        %4193 = vperm.xlu0 %4192, %v4027
        %v4194 = vpop.permute.xlu0 %4193
        %4197 = vset.pattern.permute.xlu0 0
        %4198 = vperm.xlu0 %4197, %v4028
        %v4199 = vpop.permute.xlu0 %4198
        %4202 = vset.pattern.permute.xlu0 0
        %4203 = vperm.xlu0 %4202, %v4029
        %v4204 = vpop.permute.xlu0 %4203
        %4207 = vset.pattern.permute.xlu0 0
        %4208 = vperm.xlu0 %4207, %v4030
        %v4209 = vpop.permute.xlu0 %4208
        %4212 = vset.pattern.permute.xlu0 0
        %4213 = vperm.xlu0 %4212, %v4031
        %v4214 = vpop.permute.xlu0 %4213
        %4217 = vset.pattern.permute.xlu0 0
        %4218 = vperm.xlu0 %4217, %v4032
        %v4219 = vpop.permute.xlu0 %4218
        %4222 = vset.pattern.permute.xlu0 0
        %4223 = vperm.xlu0 %4222, %v4033
        %v4224 = vpop.permute.xlu0 %4223
        %4227 = vset.pattern.permute.xlu0 0
        %4228 = vperm.xlu0 %4227, %v4034
        %v4229 = vpop.permute.xlu0 %4228
        %4232 = vset.pattern.permute.xlu0 0
        %4233 = vperm.xlu0 %4232, %v4035
        %v4234 = vpop.permute.xlu0 %4233
        %4237 = vset.pattern.permute.xlu0 0
        %4238 = vperm.xlu0 %4237, %v4036
        %v4239 = vpop.permute.xlu0 %4238
        %4242 = vset.pattern.permute.xlu0 0
        %4243 = vperm.xlu0 %4242, %v4037
        %v4244 = vpop.permute.xlu0 %4243
        %4247 = vset.pattern.permute.xlu0 0
        %4248 = vperm.xlu0 %4247, %v4038
        %v4249 = vpop.permute.xlu0 %4248
        %4252 = vset.pattern.permute.xlu0 0
        %4253 = vperm.xlu0 %4252, %v4039
        %v4254 = vpop.permute.xlu0 %4253
        %4257 = vset.pattern.permute.xlu0 0
        %4258 = vperm.xlu0 %4257, %v4040
        %v4259 = vpop.permute.xlu0 %4258
        %4262 = vset.pattern.permute.xlu0 0
        %4263 = vperm.xlu0 %4262, %v4041
        %v4264 = vpop.permute.xlu0 %4263
        %4267 = vset.pattern.permute.xlu0 0
        %4268 = vperm.xlu0 %4267, %v4042
        %v4269 = vpop.permute.xlu0 %4268
        %4272 = vset.pattern.permute.xlu0 0
        %4273 = vperm.xlu0 %4272, %v4043
        %v4274 = vpop.permute.xlu0 %4273
        %4277 = vset.pattern.permute.xlu0 0
        %4278 = vperm.xlu0 %4277, %v4044
        %v4279 = vpop.permute.xlu0 %4278
        %4282 = vset.pattern.permute.xlu0 0
        %4283 = vperm.xlu0 %4282, %v4045
        %v4284 = vpop.permute.xlu0 %4283
        %4287 = vset.pattern.permute.xlu0 0
        %4288 = vperm.xlu0 %4287, %v4046
        %v4289 = vpop.permute.xlu0 %4288
        %4292 = vset.pattern.permute.xlu0 0
        %4293 = vperm.xlu0 %4292, %v4047
        %v4294 = vpop.permute.xlu0 %4293
        %4297 = vset.pattern.permute.xlu0 0
        %4298 = vperm.xlu0 %4297, %v4048
        %v4299 = vpop.permute.xlu0 %4298
        %4302 = vset.pattern.permute.xlu0 0
        %4303 = vperm.xlu0 %4302, %v4049
        %v4304 = vpop.permute.xlu0 %4303
        %4307 = vset.pattern.permute.xlu0 0
        %4308 = vperm.xlu0 %4307, %v4050
        %v4309 = vpop.permute.xlu0 %4308
        %4312 = vset.pattern.permute.xlu0 0
        %4313 = vperm.xlu0 %4312, %v4051
        %v4314 = vpop.permute.xlu0 %4313
        %4317 = vset.pattern.permute.xlu0 0
        %4318 = vperm.xlu0 %4317, %v4052
        %v4319 = vpop.permute.xlu0 %4318
        %4322 = vset.pattern.permute.xlu0 0
        %4323 = vperm.xlu0 %4322, %v4053
        %v4324 = vpop.permute.xlu0 %4323
        %4327 = vset.pattern.permute.xlu0 0
        %4328 = vperm.xlu0 %4327, %v4054
        %v4329 = vpop.permute.xlu0 %4328
        %4332 = vset.pattern.permute.xlu0 0
        %4333 = vperm.xlu0 %4332, %v4055
        %v4334 = vpop.permute.xlu0 %4333
        %4337 = vset.pattern.permute.xlu0 0
        %4338 = vperm.xlu0 %4337, %v4056
        %v4339 = vpop.permute.xlu0 %4338
        %4342 = vset.pattern.permute.xlu0 0
        %4343 = vperm.xlu0 %4342, %v4057
        %v4344 = vpop.permute.xlu0 %4343
        %4347 = vset.pattern.permute.xlu0 0
        %4348 = vperm.xlu0 %4347, %v4058
        %v4349 = vpop.permute.xlu0 %4348
        %4352 = vset.pattern.permute.xlu0 0
        %4353 = vperm.xlu0 %4352, %v4059
        %v4354 = vpop.permute.xlu0 %4353
        %4357 = vset.pattern.permute.xlu0 0
        %4358 = vperm.xlu0 %4357, %v4060
        %v4359 = vpop.permute.xlu0 %4358
        %4362 = vset.pattern.permute.xlu0 0
        %4363 = vperm.xlu0 %4362, %v4061
        %v4364 = vpop.permute.xlu0 %4363
        %4367 = vset.pattern.permute.xlu0 0
        %4368 = vperm.xlu0 %4367, %v4062
        %v4369 = vpop.permute.xlu0 %4368
        %4372 = vset.pattern.permute.xlu0 0
        %4373 = vperm.xlu0 %4372, %v4063
        %v4374 = vpop.permute.xlu0 %4373
        %4377 = vset.pattern.permute.xlu0 0
        %4378 = vperm.xlu0 %4377, %v4064
        %v4379 = vpop.permute.xlu0 %4378
        %4382 = vset.pattern.permute.xlu0 0
        %4383 = vperm.xlu0 %4382, %v4065
        %v4384 = vpop.permute.xlu0 %4383
        %v4386 = vmul.f32 %v3874, %v4069
        %v4387 = vmul.f32 %v3875, %v4069
        %v4388 = vmul.f32 %v3876, %v4074
        %v4389 = vmul.f32 %v3877, %v4074
        %v4390 = vmul.f32 %v3878, %v4079
        %v4391 = vmul.f32 %v3879, %v4079
        %v4392 = vmul.f32 %v3880, %v4084
        %v4393 = vmul.f32 %v3881, %v4084
        %v4394 = vmul.f32 %v3882, %v4089
        %v4395 = vmul.f32 %v3883, %v4089
        %v4396 = vmul.f32 %v3884, %v4094
        %v4397 = vmul.f32 %v3885, %v4094
        %v4398 = vmul.f32 %v3886, %v4099
        %v4399 = vmul.f32 %v3887, %v4099
        %v4400 = vmul.f32 %v3888, %v4104
        %v4401 = vmul.f32 %v3889, %v4104
        %v4402 = vmul.f32 %v3890, %v4109
        %v4403 = vmul.f32 %v3891, %v4109
        %v4404 = vmul.f32 %v3892, %v4114
        %v4405 = vmul.f32 %v3893, %v4114
        %v4406 = vmul.f32 %v3894, %v4119
        %v4407 = vmul.f32 %v3895, %v4119
        %v4408 = vmul.f32 %v3896, %v4124
        %v4409 = vmul.f32 %v3897, %v4124
        %v4410 = vmul.f32 %v3898, %v4129
        %v4411 = vmul.f32 %v3899, %v4129
        %v4412 = vmul.f32 %v3900, %v4134
        %v4413 = vmul.f32 %v3901, %v4134
        %v4414 = vmul.f32 %v3902, %v4139
        %v4415 = vmul.f32 %v3903, %v4139
        %v4416 = vmul.f32 %v3904, %v4144
        %v4417 = vmul.f32 %v3905, %v4144
        %v4418 = vmul.f32 %v3906, %v4149
        %v4419 = vmul.f32 %v3907, %v4149
        %v4420 = vmul.f32 %v3908, %v4154
        %v4421 = vmul.f32 %v3909, %v4154
        %v4422 = vmul.f32 %v3910, %v4159
        %v4423 = vmul.f32 %v3911, %v4159
        %v4424 = vmul.f32 %v3912, %v4164
        %v4425 = vmul.f32 %v3913, %v4164
        %v4426 = vmul.f32 %v3914, %v4169
        %v4427 = vmul.f32 %v3915, %v4169
        %v4428 = vmul.f32 %v3916, %v4174
        %v4429 = vmul.f32 %v3917, %v4174
        %v4430 = vmul.f32 %v3918, %v4179
        %v4431 = vmul.f32 %v3919, %v4179
        %v4432 = vmul.f32 %v3920, %v4184
        %v4433 = vmul.f32 %v3921, %v4184
        %v4434 = vmul.f32 %v3922, %v4189
        %v4435 = vmul.f32 %v3923, %v4189
        %v4436 = vmul.f32 %v3924, %v4194
        %v4437 = vmul.f32 %v3925, %v4194
        %v4438 = vmul.f32 %v3926, %v4199
        %v4439 = vmul.f32 %v3927, %v4199
        %v4440 = vmul.f32 %v3928, %v4204
        %v4441 = vmul.f32 %v3929, %v4204
        %v4442 = vmul.f32 %v3930, %v4209
        %v4443 = vmul.f32 %v3931, %v4209
        %v4444 = vmul.f32 %v3932, %v4214
        %v4445 = vmul.f32 %v3933, %v4214
        %v4446 = vmul.f32 %v3934, %v4219
        %v4447 = vmul.f32 %v3935, %v4219
        %v4448 = vmul.f32 %v3936, %v4224
        %v4449 = vmul.f32 %v3937, %v4224
        %v4450 = vmul.f32 %v3938, %v4229
        %v4451 = vmul.f32 %v3939, %v4229
        %v4452 = vmul.f32 %v3940, %v4234
        %v4453 = vmul.f32 %v3941, %v4234
        %v4454 = vmul.f32 %v3942, %v4239
        %v4455 = vmul.f32 %v3943, %v4239
        %v4456 = vmul.f32 %v3944, %v4244
        %v4457 = vmul.f32 %v3945, %v4244
        %v4458 = vmul.f32 %v3946, %v4249
        %v4459 = vmul.f32 %v3947, %v4249
        %v4460 = vmul.f32 %v3948, %v4254
        %v4461 = vmul.f32 %v3949, %v4254
        %v4462 = vmul.f32 %v3950, %v4259
        %v4463 = vmul.f32 %v3951, %v4259
        %v4464 = vmul.f32 %v3952, %v4264
        %v4465 = vmul.f32 %v3953, %v4264
        %v4466 = vmul.f32 %v3954, %v4269
        %v4467 = vmul.f32 %v3955, %v4269
        %v4468 = vmul.f32 %v3956, %v4274
        %v4469 = vmul.f32 %v3957, %v4274
        %v4470 = vmul.f32 %v3958, %v4279
        %v4471 = vmul.f32 %v3959, %v4279
        %v4472 = vmul.f32 %v3960, %v4284
        %v4473 = vmul.f32 %v3961, %v4284
        %v4474 = vmul.f32 %v3962, %v4289
        %v4475 = vmul.f32 %v3963, %v4289
        %v4476 = vmul.f32 %v3964, %v4294
        %v4477 = vmul.f32 %v3965, %v4294
        %v4478 = vmul.f32 %v3966, %v4299
        %v4479 = vmul.f32 %v3967, %v4299
        %v4480 = vmul.f32 %v3968, %v4304
        %v4481 = vmul.f32 %v3969, %v4304
        %v4482 = vmul.f32 %v3970, %v4309
        %v4483 = vmul.f32 %v3971, %v4309
        %v4484 = vmul.f32 %v3972, %v4314
        %v4485 = vmul.f32 %v3973, %v4314
        %v4486 = vmul.f32 %v3974, %v4319
        %v4487 = vmul.f32 %v3975, %v4319
        %v4488 = vmul.f32 %v3976, %v4324
        %v4489 = vmul.f32 %v3977, %v4324
        %v4490 = vmul.f32 %v3978, %v4329
        %v4491 = vmul.f32 %v3979, %v4329
        %v4492 = vmul.f32 %v3980, %v4334
        %v4493 = vmul.f32 %v3981, %v4334
        %v4494 = vmul.f32 %v3982, %v4339
        %v4495 = vmul.f32 %v3983, %v4339
        %v4496 = vmul.f32 %v3984, %v4344
        %v4497 = vmul.f32 %v3985, %v4344
        %v4498 = vmul.f32 %v3986, %v4349
        %v4499 = vmul.f32 %v3987, %v4349
        %v4500 = vmul.f32 %v3988, %v4354
        %v4501 = vmul.f32 %v3989, %v4354
        %v4502 = vmul.f32 %v3990, %v4359
        %v4503 = vmul.f32 %v3991, %v4359
        %v4504 = vmul.f32 %v3992, %v4364
        %v4505 = vmul.f32 %v3993, %v4364
        %v4506 = vmul.f32 %v3994, %v4369
        %v4507 = vmul.f32 %v3995, %v4369
        %v4508 = vmul.f32 %v3996, %v4374
        %v4509 = vmul.f32 %v3997, %v4374
        %v4510 = vmul.f32 %v3998, %v4379
        %v4511 = vmul.f32 %v3999, %v4379
        %v4512 = vmul.f32 %v4000, %v4384
        %v4513 = vmul.f32 %v4001, %v4384
        %v4514 = vadd.f32 %v4386, %v4388
        %v4515 = vadd.f32 %v4514, %v4390
        %v4516 = vadd.f32 %v4515, %v4392
        %v4517 = vadd.f32 %v4516, %v4394
        %v4518 = vadd.f32 %v4517, %v4396
        %v4519 = vadd.f32 %v4518, %v4398
        %v4520 = vadd.f32 %v4519, %v4400
        %v4521 = vadd.f32 %v4520, %v4402
        %v4522 = vadd.f32 %v4521, %v4404
        %v4523 = vadd.f32 %v4522, %v4406
        %v4524 = vadd.f32 %v4523, %v4408
        %v4525 = vadd.f32 %v4524, %v4410
        %v4526 = vadd.f32 %v4525, %v4412
        %v4527 = vadd.f32 %v4526, %v4414
        %v4528 = vadd.f32 %v4527, %v4416
        %v4529 = vadd.f32 %v4528, %v4418
        %v4530 = vadd.f32 %v4529, %v4420
        %v4531 = vadd.f32 %v4530, %v4422
        %v4532 = vadd.f32 %v4531, %v4424
        %v4533 = vadd.f32 %v4532, %v4426
        %v4534 = vadd.f32 %v4533, %v4428
        %v4535 = vadd.f32 %v4534, %v4430
        %v4536 = vadd.f32 %v4535, %v4432
        %v4537 = vadd.f32 %v4536, %v4434
        %v4538 = vadd.f32 %v4537, %v4436
        %v4539 = vadd.f32 %v4538, %v4438
        %v4540 = vadd.f32 %v4539, %v4440
        %v4541 = vadd.f32 %v4540, %v4442
        %v4542 = vadd.f32 %v4541, %v4444
        %v4543 = vadd.f32 %v4542, %v4446
        %v4544 = vadd.f32 %v4543, %v4448
        %v4545 = vadd.f32 %v4544, %v4450
        %v4546 = vadd.f32 %v4545, %v4452
        %v4547 = vadd.f32 %v4546, %v4454
        %v4548 = vadd.f32 %v4547, %v4456
        %v4549 = vadd.f32 %v4548, %v4458
        %v4550 = vadd.f32 %v4549, %v4460
        %v4551 = vadd.f32 %v4550, %v4462
        %v4552 = vadd.f32 %v4551, %v4464
        %v4553 = vadd.f32 %v4552, %v4466
        %v4554 = vadd.f32 %v4553, %v4468
        %v4555 = vadd.f32 %v4554, %v4470
        %v4556 = vadd.f32 %v4555, %v4472
        %v4557 = vadd.f32 %v4556, %v4474
        %v4558 = vadd.f32 %v4557, %v4476
        %v4559 = vadd.f32 %v4558, %v4478
        %v4560 = vadd.f32 %v4559, %v4480
        %v4561 = vadd.f32 %v4560, %v4482
        %v4562 = vadd.f32 %v4561, %v4484
        %v4563 = vadd.f32 %v4562, %v4486
        %v4564 = vadd.f32 %v4563, %v4488
        %v4565 = vadd.f32 %v4564, %v4490
        %v4566 = vadd.f32 %v4565, %v4492
        %v4567 = vadd.f32 %v4566, %v4494
        %v4568 = vadd.f32 %v4567, %v4496
        %v4569 = vadd.f32 %v4568, %v4498
        %v4570 = vadd.f32 %v4569, %v4500
        %v4571 = vadd.f32 %v4570, %v4502
        %v4572 = vadd.f32 %v4571, %v4504
        %v4573 = vadd.f32 %v4572, %v4506
        %v4574 = vadd.f32 %v4573, %v4508
        %v4575 = vadd.f32 %v4574, %v4510
        %v4576 = vadd.f32 %v4575, %v4512
        %v4577 = vrot.slane %v4576, 4
        %v4578 = vadd.f32 %v4576, %v4577
        %v4579 = vrot.slane %v4578, 2
        %v4580 = vadd.f32 %v4578, %v4579
        %v4581 = vrot.slane %v4580, 1
        %v4582 = vadd.f32 %v4580, %v4581
        %v4583 = vadd.f32 %v4387, %v4389
        %v4584 = vadd.f32 %v4583, %v4391
        %v4585 = vadd.f32 %v4584, %v4393
        %v4586 = vadd.f32 %v4585, %v4395
        %v4587 = vadd.f32 %v4586, %v4397
        %v4588 = vadd.f32 %v4587, %v4399
        %v4589 = vadd.f32 %v4588, %v4401
        %v4590 = vadd.f32 %v4589, %v4403
        %v4591 = vadd.f32 %v4590, %v4405
        %v4592 = vadd.f32 %v4591, %v4407
        %v4593 = vadd.f32 %v4592, %v4409
        %v4594 = vadd.f32 %v4593, %v4411
        %v4595 = vadd.f32 %v4594, %v4413
        %v4596 = vadd.f32 %v4595, %v4415
        %v4597 = vadd.f32 %v4596, %v4417
        %v4598 = vadd.f32 %v4597, %v4419
        %v4599 = vadd.f32 %v4598, %v4421
        %v4600 = vadd.f32 %v4599, %v4423
        %v4601 = vadd.f32 %v4600, %v4425
        %v4602 = vadd.f32 %v4601, %v4427
        %v4603 = vadd.f32 %v4602, %v4429
        %v4604 = vadd.f32 %v4603, %v4431
        %v4605 = vadd.f32 %v4604, %v4433
        %v4606 = vadd.f32 %v4605, %v4435
        %v4607 = vadd.f32 %v4606, %v4437
        %v4608 = vadd.f32 %v4607, %v4439
        %v4609 = vadd.f32 %v4608, %v4441
        %v4610 = vadd.f32 %v4609, %v4443
        %v4611 = vadd.f32 %v4610, %v4445
        %v4612 = vadd.f32 %v4611, %v4447
        %v4613 = vadd.f32 %v4612, %v4449
        %v4614 = vadd.f32 %v4613, %v4451
        %v4615 = vadd.f32 %v4614, %v4453
        %v4616 = vadd.f32 %v4615, %v4455
        %v4617 = vadd.f32 %v4616, %v4457
        %v4618 = vadd.f32 %v4617, %v4459
        %v4619 = vadd.f32 %v4618, %v4461
        %v4620 = vadd.f32 %v4619, %v4463
        %v4621 = vadd.f32 %v4620, %v4465
        %v4622 = vadd.f32 %v4621, %v4467
        %v4623 = vadd.f32 %v4622, %v4469
        %v4624 = vadd.f32 %v4623, %v4471
        %v4625 = vadd.f32 %v4624, %v4473
        %v4626 = vadd.f32 %v4625, %v4475
        %v4627 = vadd.f32 %v4626, %v4477
        %v4628 = vadd.f32 %v4627, %v4479
        %v4629 = vadd.f32 %v4628, %v4481
        %v4630 = vadd.f32 %v4629, %v4483
        %v4631 = vadd.f32 %v4630, %v4485
        %v4632 = vadd.f32 %v4631, %v4487
        %v4633 = vadd.f32 %v4632, %v4489
        %v4634 = vadd.f32 %v4633, %v4491
        %v4635 = vadd.f32 %v4634, %v4493
        %v4636 = vadd.f32 %v4635, %v4495
        %v4637 = vadd.f32 %v4636, %v4497
        %v4638 = vadd.f32 %v4637, %v4499
        %v4639 = vadd.f32 %v4638, %v4501
        %v4640 = vadd.f32 %v4639, %v4503
        %v4641 = vadd.f32 %v4640, %v4505
        %v4642 = vadd.f32 %v4641, %v4507
        %v4643 = vadd.f32 %v4642, %v4509
        %v4644 = vadd.f32 %v4643, %v4511
        %v4645 = vadd.f32 %v4644, %v4513
        %v4646 = vrot.slane %v4645, 4
        %v4647 = vadd.f32 %v4645, %v4646
        %v4648 = vrot.slane %v4647, 2
        %v4649 = vadd.f32 %v4647, %v4648
        %v4650 = vrot.slane %v4649, 1
        %v4651 = vadd.f32 %v4649, %v4650
        %v4652 = vld [vmem:[#allocation2] sm:$0x1]
        %4654 = vset.pattern.permute.xlu0 0
        %4655 = vperm.xlu0 %4654, %v4652
        %v4656 = vpop.permute.xlu0 %4655
        %v4658 = vlaneseq
        %v4659 = vshrl.u32 %v4658, 7
        %v4660 = vsub.s32 0, %v4659
        %v4661 = vrot.slane %v4656, %v4660
        %v4662 = vadd.f32 %v4582, %v4661
        %v4663 = vadd.f32 %v4651, %v4661
        %v4666 = vcombine.low %v4662, %v4663
        %v4668 = vunpack.c.l.s4 1966171168
        %v4669 = vunpack.c.0.s8 %v4668
        %v4670 = vlaneseq
        %v4671 = vshrl.u32 %v4670, 7
        %v4672 = vsub.s32 %v4669, %v4671
        %v4673 = vrot.slane %v4666, %v4672
        %v4675 = vunpack.c.l.s4 1966171168
        %v4676 = vunpack.c.0.s8 %v4675
        %v4677 = vlaneseq
        %v4678 = vshrl.u32 %v4677, 7
        %v4679 = vsub.s32 %v4676, %v4678
        %v4680 = vrot.slane %v4673, %v4679
        %v4682 = vlaneseq
        %vm4683 = vcmp.ge.s32.totalorder %v4682, 0
        %vm4684 = vcmp.lt.s32.totalorder %v4682, 256
        %vm4685 = vmand %vm4683, %vm4684
        %4686 = vst.msk [vmem:[%s737] sm:$0x3] %vm4685, %v4680
        %s4687 = sand.u32 %s183, 1
        %s4688 = scalar_lea.sflag [#allocation5], %s4687
        %s4689 = sand.u32 %s183, 1
        %s4690 = smul.addr %s4689, 2
        %s4691 = scalar_lea.vmem [#allocation4], %s4690
        // Predicated region
        $region115: #{tpu_custom_call.1} parent=109 // pred_check
          %p4692 = pneg %p193
        $region116: #{tpu_custom_call.1} parent=109 // pred_check_branch
          %4694 = sbr.rel (%p4692) target = $region118
        $region117: #{tpu_custom_call.1} parent=109 // pred_region
          %s4695 = smul.u32 2, %s23
          %s4696 = ssub.s32 3, %s4695
          %p4697 = scmp.lt.s32.totalorder %s4696, 2
          %s4698 = scalar_select %p4697, %s4696, 2
          %s4699 = smul.u32 16, %s4698
          %s4701 = ssub.s32 32, %s4699
          %4702 = vsyncadd %s4688, %s4701
          %p4703 = scmp.ne.s32.totalorder 0, %s4699
          %s4704 = smul.addr %s4695, 16
          %s4705 = scalar_lea.hbm %s7, %s4704
          %s4706 = sshll.u32 %s4698, 4
          %s4707 = sshll.u32 %s4691, 4
          %s4708 = int_to_ptr.vmem [resolvable:$true] %s4707
          %4710 = dma.vmem_to_hbm [thread:$0]  (%p4703), %s4708, %s4706, %s4705, %s4688
        $region118: #{tpu_custom_call.1} parent=109 // pred_fallthru
          _
      $region110: #{tpu_custom_call.1} parent=5 // pred_fallthru
        _
      %p4711 = scmp.le.s32.totalorder 2, %s18
      // Predicated region
      $region119: #{tpu_custom_call.1} parent=5 // pred_check
        %p4712 = pneg %p4711
      $region120: #{tpu_custom_call.1} parent=5 // pred_check_branch
        %4714 = sbr.rel (%p4712) target = $region122
      $region121: #{tpu_custom_call.1} parent=5 // pred_region
        %s4715 = ssub.s32 %s18, 2
        // Predicated region
        $region123: #{tpu_custom_call.1} parent=121 // pred_check
          %p4716 = pneg %p199
        $region124: #{tpu_custom_call.1} parent=121 // pred_check_branch
          %4718 = sbr.rel (%p4716) target = $region126
        $region125: #{tpu_custom_call.1} parent=121 // pred_region
          %s4719 = sand.u32 %s184, 1
          %s4720 = scalar_lea.sflag [#allocation5], %s4719
          %s4721 = sand.u32 %s184, 1
          %s4722 = smul.addr %s4721, 2
          %s4723 = scalar_lea.vmem [#allocation4], %s4722
          %4724 = dma.done %s4720, 32
        $region126: #{tpu_custom_call.1} parent=121 // pred_fallthru
          _
      $region122: #{tpu_custom_call.1} parent=5 // pred_fallthru
        _
    $region6: #{tpu_custom_call.1} parent=1 // loop_footer
      %s22 = sadd.s32 1, %s18
    $region7: #{tpu_custom_call.1} parent=1 // loop_footer_branch
      %17 = sbr.rel target = $region3
    $region8: #{tpu_custom_call.1} parent=1 // loop_exit
      _
    %4725 = vsyncpa [#allocation5], 1
    %s4726 = scalar_lea.sflag [#allocation5], 1
    %4727 = vsyncpa %s4726, 1

</llo_original>
